<compile_context>
chip_gen: v5e
topology: v5e:2x2
jax: 0.10.0
libtpu: 0.0.40
codegen_flags: <defaults>
</compile_context>

<pallas_src>
import jax
import jax.numpy as jnp
import numpy as np
from jax.experimental import pallas as pl
from jax.experimental.pallas import tpu as pltpu

EPS = 1e-5  # nn.BatchNorm2d default


# ---------------------------------------------------------------------------
# Fused kernel: 1x1 conv + BN + SiLU  ->  depthwise 5x5 + BN + SiLU
# ---------------------------------------------------------------------------
def _make_fused_kernel(TH, W, C1, C_):
    KH = KW = 5
    PAD = 2          # depthwise 'same' padding for k=5
    LP = 8           # sublane-aligned column offset of y inside the scratch
    WP = W + 2 * LP  # padded scratch width (y at cols [LP, LP+W))
    USE_MXU = C1 >= 8  # review: MXU slot is idle while the stencil binds the VALU

    def kernel(xm_ref, xt_ref, xb_ref, w1_ref, s1_ref, b1_ref,
               w2_ref, s2_ref, b2_ref, oy_ref, oz_ref, ypad_ref):
        j = pl.program_id(1)
        last_j = pl.num_programs(1) - 1

        # Hoist all parameter reads once (JAX does not CSE re-reads in loops).
        w1 = w1_ref[...].astype(jnp.float32)   # (C1, C_)
        s1 = s1_ref[...]                       # (1, C_)
        b1 = b1_ref[...]                       # (1, C_)
        w2 = w2_ref[...]                       # (5, 5, C_)
        s2 = s2_ref[...]                       # (1, 1, C_)
        b2 = b2_ref[...]                       # (1, 1, C_)

        def pointwise(x):
            """1x1 conv + folded BN + SiLU.  x: (rows, W, C1) -> (rows, W, C_) f32."""
            rows = x.shape[0]
            xf = x.astype(jnp.float32)
            if USE_MXU:
                a = jnp.dot(xf.reshape(rows * W, C1), w1,
                            preferred_element_type=jnp.float32)
                a = a * s1 + b1
                a = a * jax.nn.sigmoid(a)
                return a.reshape(rows, W, C_)
            # tiny-channel path: C1 broadcast-FMAs on the VPU (static unroll)
            acc = jnp.zeros((rows, W, C_), jnp.float32)
            for c in range(C1):
                acc = acc + xf[:, :, c:c + 1] * w1[c, :]
            a = acc * s1 + b1
            return a * jax.nn.sigmoid(a)

        # Zero ONLY the left/right pad bands (cheap, safe under megacore
        # sharding); interior and both row-halo bands are rewritten below,
        # so the old full-scratch zero per step is gone.
        ypad_ref[:, 0:LP, :] = jnp.zeros((TH + 4, LP, C_), jnp.float32)
        ypad_ref[:, LP + W:, :] = jnp.zeros((TH + 4, WP - LP - W, C_), jnp.float32)

        # Main rows of y: sublane-aligned store at column LP=8; also directly
        # the first output half (full-channel block => unmasked store).
        y_main = pointwise(xm_ref[0])                            # (TH, W, C_)
        ypad_ref[PAD:PAD + TH, LP:LP + W, :] = y_main
        oy_ref[0, :, :, :] = y_main.astype(oy_ref.dtype)

        # 2-row halos of y: computed only where they exist; image borders get
        # explicit zeros (Conv2d zero padding).
        @pl.when(j > 0)
        def _():
            ypad_ref[0:PAD, LP:LP + W, :] = pointwise(xt_ref[0])

        @pl.when(j == 0)
        def _():
            ypad_ref[0:PAD, LP:LP + W, :] = jnp.zeros((PAD, W, C_), jnp.float32)

        @pl.when(j < last_j)
        def _():
            ypad_ref[PAD + TH:PAD + TH + PAD, LP:LP + W, :] = pointwise(xb_ref[0])

        @pl.when(j >= last_j)
        def _():
            ypad_ref[PAD + TH:PAD + TH + PAD, LP:LP + W, :] = jnp.zeros(
                (PAD, W, C_), jnp.float32)

        # Depthwise 5x5 + folded BN + SiLU.  Width (sublane) shift hoisted out
        # of the dh loop: 5 shifted views, each reused across the 5 (free,
        # leading-dim) row offsets -> 5 instead of 25 sublane relayouts.
        acc = jnp.zeros((TH, W, C_), jnp.float32)
        for dw in range(KW):
            col = ypad_ref[:, LP - PAD + dw:LP - PAD + dw + W, :]   # (TH+4, W, C_)
            for dh in range(KH):
                acc = acc + col[dh:dh + TH] * w2[dh, dw, :]
        z = acc * s2 + b2
        z = z * jax.nn.sigmoid(z)
        oz_ref[0, :, :, :] = z.astype(oz_ref.dtype)

    return kernel


# ---------------------------------------------------------------------------
# Tiling / VMEM sizing (generation-aware)
# ---------------------------------------------------------------------------
def _step_vmem_bytes(th, W, C1, C_, io_itemsize):
    # double-buffered input blocks (main tile + 2 halos), double-buffered
    # y/z output blocks, plus the f32 padded-y scratch; weights negligible.
    in_b = 2 * io_itemsize * (th * W * C1 + 2 * (2 * W * C1))
    out_b = 2 * io_itemsize * (2 * th * W * C_)
    scratch = 4 * (th + 4) * (W + 16) * C_
    return in_b + out_b + scratch


def _vmem_budgets():
    try:
        phys = int(pltpu.get_tpu_info().vmem_capacity_bytes)
    except Exception:
        phys = 64 << 20  # conservative fallback (v7x per-TensorCore VMEM)
    tile_budget = min(int(phys * 0.6), 48 << 20)   # ~48 MiB v5e/v6e, ~38 MiB v7x
    vmem_limit = min(int(phys * 0.85), 108 << 20)
    return tile_budget, vmem_limit, phys


def _pick_row_tile(H, W, C1, C_, N, io_itemsize, budget_bytes):
    """Largest even divisor of H whose per-step working set (incl. double
    buffering) fits the budget.  Bigger tiles dominate the HBM roofline; the
    batch axis usually supplies the parallel steps for pipelining/megacore."""
    divs = sorted(d for d in range(2, H + 1, 2) if H % d == 0)
    fit = [d for d in divs
           if _step_vmem_bytes(d, W, C1, C_, io_itemsize) <= budget_bytes] or divs[:1]
    best = max(fit)
    # v7x: prefer an even total of parallel grid steps so both TensorCores get
    # equal work, but never shrink the tile below half of the best.
    if (N * (H // best)) % 2:
        even = [d for d in fit if (N * (H // d)) % 2 == 0 and 2 * d >= best]
        if even:
            best = max(even)
    return best


def ghost_conv_fused_nhwc(x_nhwc, w1t, s1, b1, w2, s2, b2):
    """x_nhwc: (N,H,W,C1); w1t: (C1,c_); w2: (5,5,c_); returns (y, z) NHWC."""
    N, H, W, C1 = x_nhwc.shape
    C_ = w1t.shape[1]
    assert H % 2 == 0, "H must be even"  # TODO(synk): odd-H row tiling
    itemsize = jnp.dtype(x_nhwc.dtype).itemsize

    budget, vmem_limit, phys = _vmem_budgets()
    th = _pick_row_tile(H, W, C1, C_, N, itemsize, budget)
    assert th % 2 == 0 and H % th == 0
    # Guard: even if the smallest divisor overshoots the budget, give the
    # compiler enough scoped VMEM (capped below physical) instead of OOMing.
    need = _step_vmem_bytes(th, W, C1, C_, itemsize) + (8 << 20)
    vmem_limit = int(min(max(vmem_limit, need), int(phys * 0.9)))

    hp = th // 2          # row tile expressed in 2-row halo blocks
    nhalf = H // 2        # number of 2-row blocks along H
    dt = x_nhwc.dtype
    kernel = _make_fused_kernel(th, W, C1, C_)

    return pl.pallas_call(
        kernel,
        out_shape=(jax.ShapeDtypeStruct((N, H, W, C_), dt),
                   jax.ShapeDtypeStruct((N, H, W, C_), dt)),
        grid_spec=pltpu.PrefetchScalarGridSpec(
            num_scalar_prefetch=0,
            grid=(N, H // th),
            in_specs=[
                # main row tile of x
                pl.BlockSpec((1, th, W, C1), lambda n, j: (n, j, 0, 0)),
                # 2-row halo above the tile (clamped at the top border)
                pl.BlockSpec((1, 2, W, C1),
                             lambda n, j: (n, jnp.maximum(j * hp - 1, 0), 0, 0)),
                # 2-row halo below the tile (clamped at the bottom border)
                pl.BlockSpec((1, 2, W, C1),
                             lambda n, j: (n, jnp.minimum((j + 1) * hp, nhalf - 1),
                                           0, 0)),
                pl.BlockSpec((C1, C_), lambda n, j: (0, 0)),        # w1 (C1,c_)
                pl.BlockSpec((1, C_), lambda n, j: (0, 0)),         # bn1 scale
                pl.BlockSpec((1, C_), lambda n, j: (0, 0)),         # bn1 bias
                pl.BlockSpec((5, 5, C_), lambda n, j: (0, 0, 0)),   # w2 depthwise
                pl.BlockSpec((1, 1, C_), lambda n, j: (0, 0, 0)),   # bn2 scale
                pl.BlockSpec((1, 1, C_), lambda n, j: (0, 0, 0)),   # bn2 bias
            ],
            out_specs=[pl.BlockSpec((1, th, W, C_), lambda n, j: (n, j, 0, 0)),
                       pl.BlockSpec((1, th, W, C_), lambda n, j: (n, j, 0, 0))],
            scratch_shapes=[pltpu.VMEM((th + 4, W + 16, C_), jnp.float32)],
        ),
        compiler_params=pltpu.CompilerParams(
            dimension_semantics=("parallel", "parallel"),
            vmem_limit_bytes=vmem_limit),
    )(x_nhwc, x_nhwc, x_nhwc, w1t, s1, b1, w2, s2, b2)


# ---------------------------------------------------------------------------
# GhostConv wrapper (NCHW in / NCHW out, like the PyTorch module)
# ---------------------------------------------------------------------------
def _fold_bn(gamma, beta, mean, var):
    scale = gamma / jnp.sqrt(var + EPS)
    return scale, beta - mean * scale


def ghost_conv(x_nchw, params, io_dtype=None):
    x_nhwc = jnp.transpose(x_nchw, (0, 2, 3, 1))
    if io_dtype is not None:
        # bf16 I/O halves HBM traffic on v6e/v7x; compute stays f32 in-kernel.
        x_nhwc = x_nhwc.astype(io_dtype)
    s1, b1 = _fold_bn(*params["bn1"])
    s2, b2 = _fold_bn(*params["bn2"])
    y, z = ghost_conv_fused_nhwc(
        x_nhwc,
        params["w1"].T,                # (C1, c_)
        s1[None, :], b1[None, :],      # (1, c_)
        params["w2"],                  # (5, 5, c_)
        s2[None, None, :], b2[None, None, :])
    # channel concat folded into the NHWC->NCHW output transpose
    out_nhwc = jnp.concatenate([y, z], axis=-1)
    return jnp.transpose(out_nhwc, (0, 3, 1, 2))


# ---------------------------------------------------------------------------
# Pure-JAX reference (lax.conv, HIGHEST precision) for correctness checks
# ---------------------------------------------------------------------------
def ghost_conv_reference(x, params):
    c_ = params["w1"].shape[0]
    w1_full = params["w1"][:, :, None, None]                   # (c_, c1, 1, 1)
    w2_full = jnp.transpose(params["w2"], (2, 0, 1))[:, None]  # (c_, 1, 5, 5)

    def bn_silu(t, bn):
        g, b, m, v = bn
        t = (t - m[None, :, None, None]) / jnp.sqrt(v[None, :, None, None] + EPS)
        t = t * g[None, :, None, None] + b[None, :, None, None]
        return t * jax.nn.sigmoid(t)

    y = jax.lax.conv_general_dilated(
        x, w1_full, (1, 1), "VALID", dimension_numbers=("NCHW", "OIHW", "NCHW"),
        precision=jax.lax.Precision.HIGHEST)
    y = bn_silu(y, params["bn1"])
    z = jax.lax.conv_general_dilated(
        y, w2_full, (1, 1), ((2, 2), (2, 2)),
        dimension_numbers=("NCHW", "OIHW", "NCHW"), feature_group_count=c_,
        precision=jax.lax.Precision.HIGHEST)
    z = bn_silu(z, params["bn2"])
    return jnp.concatenate([y, z], axis=1)


def _make_params(key, C1, C_):
    ks = jax.random.split(key, 10)
    return {
        # cv1.conv.weight: (c_, c1, 1, 1) stored squeezed as (c_, c1)
        "w1": 0.5 * jax.random.normal(ks[0], (C_, C1), jnp.float32),
        # cv2.conv.weight (depthwise): (c_, 1, 5, 5) stored as (5, 5, c_)
        "w2": 0.2 * jax.random.normal(ks[1], (5, 5, C_), jnp.float32),
        # BN params: (gamma, beta, running_mean, running_var)
        "bn1": (1.0 + 0.1 * jax.random.normal(ks[2], (C_,), jnp.float32),
                0.1 * jax.random.normal(ks[3], (C_,), jnp.float32),
                0.1 * jax.random.normal(ks[4], (C_,), jnp.float32),
                0.5 + jax.random.uniform(ks[5], (C_,), jnp.float32)),
        "bn2": (1.0 + 0.1 * jax.random.normal(ks[6], (C_,), jnp.float32),
                0.1 * jax.random.normal(ks[7], (C_,), jnp.float32),
                0.1 * jax.random.normal(ks[8], (C_,), jnp.float32),
                0.5 + jax.random.uniform(ks[9], (C_,), jnp.float32)),
    }


if __name__ == "__main__":
    key = jax.random.PRNGKey(0)
    k_p1, k_x1, k_p2, k_x2 = jax.random.split(key, 4)

    # --- case 1: GhostConv(c1=4, c2=8) on (2,4,16,16), f32 (VPU pointwise path)
    N, C1, H, W = 2, 4, 16, 16
    C2 = 8
    params1 = _make_params(k_p1, C1, C2 // 2)
    x1 = jax.random.normal(k_x1, (N, C1, H, W), jnp.float32)
    out1 = jax.block_until_ready(ghost_conv(x1, params1))
    ref1 = jax.block_until_ready(ghost_conv_reference(x1, params1))
    assert out1.shape == (N, C2, H, W), out1.shape
    np.testing.assert_allclose(np.asarray(out1), np.asarray(ref1),
                               rtol=1e-4, atol=1e-4)

    # --- case 2: GhostConv(c1=16, c2=16) — exercises the MXU pointwise path.
    # Looser tolerance: the in-kernel f32 matmul may use default (bf16-pass)
    # MXU precision on some generations vs. the Precision.HIGHEST reference.
    params2 = _make_params(k_p2, 16, 8)
    x2 = jax.random.normal(k_x2, (2, 16, 16, 16), jnp.float32)
    out2 = jax.block_until_ready(ghost_conv(x2, params2))
    ref2 = jax.block_until_ready(ghost_conv_reference(x2, params2))
    assert out2.shape == (2, 16, 16, 16), out2.shape
    np.testing.assert_allclose(np.asarray(out2), np.asarray(ref2),
                               rtol=5e-2, atol=5e-2)

    # --- case 3: bf16 I/O (HBM-bound op -> ~2x less DMA on v6e/v7x); compute
    # stays f32 inside the kernel, so only I/O quantization differs.
    out3 = jax.block_until_ready(ghost_conv(x1, params1, io_dtype=jnp.bfloat16))
    np.testing.assert_allclose(np.asarray(out3.astype(jnp.float32)),
                               np.asarray(ref1), rtol=5e-2, atol=5e-2)

    print("KERNEL_OK")
</pallas_src>

<mosaic_0001>
module attributes {stable_mosaic.version = 11 : i64} {
  func.func @kernel(%arg0: i32, %arg1: i32, %arg2: memref<1x16x16x4xf32, #tpu.memory_space<vmem>>, %arg3: memref<1x2x16x4xf32, #tpu.memory_space<vmem>>, %arg4: memref<1x2x16x4xf32, #tpu.memory_space<vmem>>, %arg5: memref<4x4xf32, #tpu.memory_space<vmem>>, %arg6: memref<1x4xf32, #tpu.memory_space<vmem>>, %arg7: memref<1x4xf32, #tpu.memory_space<vmem>>, %arg8: memref<5x5x4xf32, #tpu.memory_space<vmem>>, %arg9: memref<1x1x4xf32, #tpu.memory_space<vmem>>, %arg10: memref<1x1x4xf32, #tpu.memory_space<vmem>>, %arg11: memref<1x16x16x4xf32, #tpu.memory_space<vmem>>, %arg12: memref<1x16x16x4xf32, #tpu.memory_space<vmem>>, %arg13: memref<20x32x4xf32, #tpu.memory_space<vmem>>) attributes {dimension_semantics = [#tpu.dimension_semantics<parallel>, #tpu.dimension_semantics<parallel>], iteration_bounds = array<i64: 2, 1>, scalar_prefetch = 0 : i64, scratch_operands = 1 : i64, tpu.core_type = #tpu.core_type<tc>, window_params = [{transform_indices = @transform_0, window_bounds = array<i64: 1, 16, 16, 4>}, {transform_indices = @transform_1, window_bounds = array<i64: 1, 2, 16, 4>}, {transform_indices = @transform_2, window_bounds = array<i64: 1, 2, 16, 4>}, {pipeline_mode = #tpu.pipeline_mode<synchronous>, transform_indices = @transform_3, window_bounds = array<i64: 4, 4>}, {pipeline_mode = #tpu.pipeline_mode<synchronous>, transform_indices = @transform_4, window_bounds = array<i64: 1, 4>}, {pipeline_mode = #tpu.pipeline_mode<synchronous>, transform_indices = @transform_5, window_bounds = array<i64: 1, 4>}, {pipeline_mode = #tpu.pipeline_mode<synchronous>, transform_indices = @transform_6, window_bounds = array<i64: 5, 5, 4>}, {pipeline_mode = #tpu.pipeline_mode<synchronous>, transform_indices = @transform_7, window_bounds = array<i64: 1, 1, 4>}, {pipeline_mode = #tpu.pipeline_mode<synchronous>, transform_indices = @transform_8, window_bounds = array<i64: 1, 1, 4>}, {transform_indices = @transform_9, window_bounds = array<i64: 1, 16, 16, 4>}, {transform_indices = @transform_10, window_bounds = array<i64: 1, 16, 16, 4>}]} {
    %c0 = arith.constant 0 : index
    %c0_0 = arith.constant 0 : index
    %0 = vector.load %arg5[%c0, %c0_0] : memref<4x4xf32, #tpu.memory_space<vmem>>, vector<4x4xf32>
    %c0_1 = arith.constant 0 : index
    %c0_2 = arith.constant 0 : index
    %1 = vector.load %arg6[%c0_1, %c0_2] : memref<1x4xf32, #tpu.memory_space<vmem>>, vector<1x4xf32>
    %c0_3 = arith.constant 0 : index
    %c0_4 = arith.constant 0 : index
    %2 = vector.load %arg7[%c0_3, %c0_4] : memref<1x4xf32, #tpu.memory_space<vmem>>, vector<1x4xf32>
    %c0_5 = arith.constant 0 : index
    %c0_6 = arith.constant 0 : index
    %c0_7 = arith.constant 0 : index
    %3 = vector.load %arg8[%c0_5, %c0_6, %c0_7] : memref<5x5x4xf32, #tpu.memory_space<vmem>>, vector<5x5x4xf32>
    %c0_8 = arith.constant 0 : index
    %c0_9 = arith.constant 0 : index
    %c0_10 = arith.constant 0 : index
    %4 = vector.load %arg9[%c0_8, %c0_9, %c0_10] : memref<1x1x4xf32, #tpu.memory_space<vmem>>, vector<1x1x4xf32>
    %c0_11 = arith.constant 0 : index
    %c0_12 = arith.constant 0 : index
    %c0_13 = arith.constant 0 : index
    %5 = vector.load %arg10[%c0_11, %c0_12, %c0_13] : memref<1x1x4xf32, #tpu.memory_space<vmem>>, vector<1x1x4xf32>
    %cst = arith.constant 0.000000e+00 : f32
    %6 = vector.broadcast %cst : f32 to vector<20x8x4xf32>
    %c0_14 = arith.constant 0 : index
    %c0_15 = arith.constant 0 : index
    %c0_16 = arith.constant 0 : index
    %7 = vector.load %arg13[%c0_14, %c0_15, %c0_16] : memref<20x32x4xf32, #tpu.memory_space<vmem>>, vector<20x8x4xf32>
    tpu.vector_store %arg13[%c0_14, %c0_15, %c0_16], %6 {strides = array<i32>} : memref<20x32x4xf32, #tpu.memory_space<vmem>>, vector<20x8x4xf32>,
    %cst_17 = arith.constant 0.000000e+00 : f32
    %8 = vector.broadcast %cst_17 : f32 to vector<20x8x4xf32>
    %c0_18 = arith.constant 0 : index
    %c24 = arith.constant 24 : index
    %c0_19 = arith.constant 0 : index
    %9 = vector.load %arg13[%c0_18, %c24, %c0_19] : memref<20x32x4xf32, #tpu.memory_space<vmem>>, vector<20x8x4xf32>
    tpu.vector_store %arg13[%c0_18, %c24, %c0_19], %8 {strides = array<i32>} : memref<20x32x4xf32, #tpu.memory_space<vmem>>, vector<20x8x4xf32>,
    %c0_20 = arith.constant 0 : index
    %c0_21 = arith.constant 0 : index
    %c0_22 = arith.constant 0 : index
    %c0_23 = arith.constant 0 : index
    %10 = vector.load %arg2[%c0_20, %c0_21, %c0_22, %c0_23] : memref<1x16x16x4xf32, #tpu.memory_space<vmem>>, vector<1x16x16x4xf32>
    %11 = vector.shape_cast %10 : vector<1x16x16x4xf32> to vector<16x16x4xf32>
    %cst_24 = arith.constant 0.000000e+00 : f32
    %12 = vector.broadcast %cst_24 : f32 to vector<16x16x4xf32>
    %13 = vector.extract_strided_slice %11 {offsets = [0, 0, 0], sizes = [16, 16, 1], strides = [1, 1, 1]} : vector<16x16x4xf32> to vector<16x16x1xf32>
    %14 = vector.extract_strided_slice %0 {offsets = [0, 0], sizes = [1, 4], strides = [1, 1]} : vector<4x4xf32> to vector<1x4xf32>
    %15 = vector.shape_cast %14 : vector<1x4xf32> to vector<4xf32>
    %16 = vector.shape_cast %15 : vector<4xf32> to vector<1x1x4xf32>
    %17 = vector.broadcast %13 : vector<16x16x1xf32> to vector<16x16x4xf32>
    %18 = vector.broadcast %16 : vector<1x1x4xf32> to vector<16x16x4xf32>
    %19 = arith.mulf %17, %18 : vector<16x16x4xf32>
    %20 = arith.addf %12, %19 : vector<16x16x4xf32>
    %21 = vector.extract_strided_slice %11 {offsets = [0, 0, 1], sizes = [16, 16, 1], strides = [1, 1, 1]} : vector<16x16x4xf32> to vector<16x16x1xf32>
    %22 = vector.extract_strided_slice %0 {offsets = [1, 0], sizes = [1, 4], strides = [1, 1]} : vector<4x4xf32> to vector<1x4xf32>
    %23 = vector.shape_cast %22 : vector<1x4xf32> to vector<4xf32>
    %24 = vector.shape_cast %23 : vector<4xf32> to vector<1x1x4xf32>
    %25 = vector.broadcast %21 : vector<16x16x1xf32> to vector<16x16x4xf32>
    %26 = vector.broadcast %24 : vector<1x1x4xf32> to vector<16x16x4xf32>
    %27 = arith.mulf %25, %26 : vector<16x16x4xf32>
    %28 = arith.addf %20, %27 : vector<16x16x4xf32>
    %29 = vector.extract_strided_slice %11 {offsets = [0, 0, 2], sizes = [16, 16, 1], strides = [1, 1, 1]} : vector<16x16x4xf32> to vector<16x16x1xf32>
    %30 = vector.extract_strided_slice %0 {offsets = [2, 0], sizes = [1, 4], strides = [1, 1]} : vector<4x4xf32> to vector<1x4xf32>
    %31 = vector.shape_cast %30 : vector<1x4xf32> to vector<4xf32>
    %32 = vector.shape_cast %31 : vector<4xf32> to vector<1x1x4xf32>
    %33 = vector.broadcast %29 : vector<16x16x1xf32> to vector<16x16x4xf32>
    %34 = vector.broadcast %32 : vector<1x1x4xf32> to vector<16x16x4xf32>
    %35 = arith.mulf %33, %34 : vector<16x16x4xf32>
    %36 = arith.addf %28, %35 : vector<16x16x4xf32>
    %37 = vector.extract_strided_slice %11 {offsets = [0, 0, 3], sizes = [16, 16, 1], strides = [1, 1, 1]} : vector<16x16x4xf32> to vector<16x16x1xf32>
    %38 = vector.extract_strided_slice %0 {offsets = [3, 0], sizes = [1, 4], strides = [1, 1]} : vector<4x4xf32> to vector<1x4xf32>
    %39 = vector.shape_cast %38 : vector<1x4xf32> to vector<4xf32>
    %40 = vector.shape_cast %39 : vector<4xf32> to vector<1x1x4xf32>
    %41 = vector.broadcast %37 : vector<16x16x1xf32> to vector<16x16x4xf32>
    %42 = vector.broadcast %40 : vector<1x1x4xf32> to vector<16x16x4xf32>
    %43 = arith.mulf %41, %42 : vector<16x16x4xf32>
    %44 = arith.addf %36, %43 : vector<16x16x4xf32>
    %45 = vector.shape_cast %1 : vector<1x4xf32> to vector<1x1x4xf32>
    %46 = vector.broadcast %45 : vector<1x1x4xf32> to vector<16x16x4xf32>
    %47 = arith.mulf %44, %46 : vector<16x16x4xf32>
    %48 = vector.shape_cast %2 : vector<1x4xf32> to vector<1x1x4xf32>
    %49 = vector.broadcast %48 : vector<1x1x4xf32> to vector<16x16x4xf32>
    %50 = arith.addf %47, %49 : vector<16x16x4xf32>
    %51 = arith.negf %50 : vector<16x16x4xf32>
    %52 = math.exp %51 : vector<16x16x4xf32>
    %cst_25 = arith.constant 1.000000e+00 : f32
    %53 = vector.broadcast %cst_25 : f32 to vector<16x16x4xf32>
    %54 = arith.addf %53, %52 : vector<16x16x4xf32>
    %55 = arith.divf %53, %54 : vector<16x16x4xf32>
    %56 = arith.mulf %50, %55 : vector<16x16x4xf32>
    %c2 = arith.constant 2 : index
    %c8 = arith.constant 8 : index
    %c0_26 = arith.constant 0 : index
    %57 = vector.load %arg13[%c2, %c8, %c0_26] : memref<20x32x4xf32, #tpu.memory_space<vmem>>, vector<16x16x4xf32>
    tpu.vector_store %arg13[%c2, %c8, %c0_26], %56 {strides = array<i32>} : memref<20x32x4xf32, #tpu.memory_space<vmem>>, vector<16x16x4xf32>,
    %c0_27 = arith.constant 0 : index
    %c0_28 = arith.constant 0 : index
    %c0_29 = arith.constant 0 : index
    %c0_30 = arith.constant 0 : index
    %58 = vector.load %arg11[%c0_27, %c0_28, %c0_29, %c0_30] : memref<1x16x16x4xf32, #tpu.memory_space<vmem>>, vector<1x16x16x4xf32>
    %59 = vector.shape_cast %58 : vector<1x16x16x4xf32> to vector<16x16x4xf32>
    %60 = vector.shape_cast %56 : vector<16x16x4xf32> to vector<1x16x16x4xf32>
    tpu.vector_store %arg11[%c0_27, %c0_28, %c0_29, %c0_30], %60 {strides = array<i32>} : memref<1x16x16x4xf32, #tpu.memory_space<vmem>>, vector<1x16x16x4xf32>,
    %c0_i32 = arith.constant 0 : i32
    %61 = arith.cmpi sgt, %arg1, %c0_i32 : i32
    %62 = arith.extui %61 : i1 to i32
    %c0_i32_31 = arith.constant 0 : i32
    %63 = arith.cmpi ne, %62, %c0_i32_31 : i32
    scf.if %63 {
      %c0_55 = arith.constant 0 : index
      %c0_56 = arith.constant 0 : index
      %c0_57 = arith.constant 0 : index
      %c0_58 = arith.constant 0 : index
      %267 = vector.load %arg3[%c0_55, %c0_56, %c0_57, %c0_58] : memref<1x2x16x4xf32, #tpu.memory_space<vmem>>, vector<1x2x16x4xf32>
      %268 = vector.shape_cast %267 : vector<1x2x16x4xf32> to vector<2x16x4xf32>
      %cst_59 = arith.constant 0.000000e+00 : f32
      %269 = vector.broadcast %cst_59 : f32 to vector<2x16x4xf32>
      %270 = vector.extract_strided_slice %268 {offsets = [0, 0, 0], sizes = [2, 16, 1], strides = [1, 1, 1]} : vector<2x16x4xf32> to vector<2x16x1xf32>
      %271 = vector.extract_strided_slice %0 {offsets = [0, 0], sizes = [1, 4], strides = [1, 1]} : vector<4x4xf32> to vector<1x4xf32>
      %272 = vector.shape_cast %271 : vector<1x4xf32> to vector<4xf32>
      %273 = vector.shape_cast %272 : vector<4xf32> to vector<1x1x4xf32>
      %274 = vector.broadcast %270 : vector<2x16x1xf32> to vector<2x16x4xf32>
      %275 = vector.broadcast %273 : vector<1x1x4xf32> to vector<2x16x4xf32>
      %276 = arith.mulf %274, %275 : vector<2x16x4xf32>
      %277 = arith.addf %269, %276 : vector<2x16x4xf32>
      %278 = vector.extract_strided_slice %268 {offsets = [0, 0, 1], sizes = [2, 16, 1], strides = [1, 1, 1]} : vector<2x16x4xf32> to vector<2x16x1xf32>
      %279 = vector.extract_strided_slice %0 {offsets = [1, 0], sizes = [1, 4], strides = [1, 1]} : vector<4x4xf32> to vector<1x4xf32>
      %280 = vector.shape_cast %279 : vector<1x4xf32> to vector<4xf32>
      %281 = vector.shape_cast %280 : vector<4xf32> to vector<1x1x4xf32>
      %282 = vector.broadcast %278 : vector<2x16x1xf32> to vector<2x16x4xf32>
      %283 = vector.broadcast %281 : vector<1x1x4xf32> to vector<2x16x4xf32>
      %284 = arith.mulf %282, %283 : vector<2x16x4xf32>
      %285 = arith.addf %277, %284 : vector<2x16x4xf32>
      %286 = vector.extract_strided_slice %268 {offsets = [0, 0, 2], sizes = [2, 16, 1], strides = [1, 1, 1]} : vector<2x16x4xf32> to vector<2x16x1xf32>
      %287 = vector.extract_strided_slice %0 {offsets = [2, 0], sizes = [1, 4], strides = [1, 1]} : vector<4x4xf32> to vector<1x4xf32>
      %288 = vector.shape_cast %287 : vector<1x4xf32> to vector<4xf32>
      %289 = vector.shape_cast %288 : vector<4xf32> to vector<1x1x4xf32>
      %290 = vector.broadcast %286 : vector<2x16x1xf32> to vector<2x16x4xf32>
      %291 = vector.broadcast %289 : vector<1x1x4xf32> to vector<2x16x4xf32>
      %292 = arith.mulf %290, %291 : vector<2x16x4xf32>
      %293 = arith.addf %285, %292 : vector<2x16x4xf32>
      %294 = vector.extract_strided_slice %268 {offsets = [0, 0, 3], sizes = [2, 16, 1], strides = [1, 1, 1]} : vector<2x16x4xf32> to vector<2x16x1xf32>
      %295 = vector.extract_strided_slice %0 {offsets = [3, 0], sizes = [1, 4], strides = [1, 1]} : vector<4x4xf32> to vector<1x4xf32>
      %296 = vector.shape_cast %295 : vector<1x4xf32> to vector<4xf32>
      %297 = vector.shape_cast %296 : vector<4xf32> to vector<1x1x4xf32>
      %298 = vector.broadcast %294 : vector<2x16x1xf32> to vector<2x16x4xf32>
      %299 = vector.broadcast %297 : vector<1x1x4xf32> to vector<2x16x4xf32>
      %300 = arith.mulf %298, %299 : vector<2x16x4xf32>
      %301 = arith.addf %293, %300 : vector<2x16x4xf32>
      %302 = vector.shape_cast %1 : vector<1x4xf32> to vector<1x1x4xf32>
      %303 = vector.broadcast %302 : vector<1x1x4xf32> to vector<2x16x4xf32>
      %304 = arith.mulf %301, %303 : vector<2x16x4xf32>
      %305 = vector.shape_cast %2 : vector<1x4xf32> to vector<1x1x4xf32>
      %306 = vector.broadcast %305 : vector<1x1x4xf32> to vector<2x16x4xf32>
      %307 = arith.addf %304, %306 : vector<2x16x4xf32>
      %308 = arith.negf %307 : vector<2x16x4xf32>
      %309 = math.exp %308 : vector<2x16x4xf32>
      %cst_60 = arith.constant 1.000000e+00 : f32
      %310 = vector.broadcast %cst_60 : f32 to vector<2x16x4xf32>
      %311 = arith.addf %310, %309 : vector<2x16x4xf32>
      %312 = arith.divf %310, %311 : vector<2x16x4xf32>
      %313 = arith.mulf %307, %312 : vector<2x16x4xf32>
      %c0_61 = arith.constant 0 : index
      %c8_62 = arith.constant 8 : index
      %c0_63 = arith.constant 0 : index
      %314 = vector.load %arg13[%c0_61, %c8_62, %c0_63] : memref<20x32x4xf32, #tpu.memory_space<vmem>>, vector<2x16x4xf32>
      tpu.vector_store %arg13[%c0_61, %c8_62, %c0_63], %313 {strides = array<i32>} : memref<20x32x4xf32, #tpu.memory_space<vmem>>, vector<2x16x4xf32>,
    } else {
    }
    %c0_i32_32 = arith.constant 0 : i32
    %64 = arith.cmpi eq, %arg1, %c0_i32_32 : i32
    %65 = arith.extui %64 : i1 to i32
    %c0_i32_33 = arith.constant 0 : i32
    %66 = arith.cmpi ne, %65, %c0_i32_33 : i32
    scf.if %66 {
      %cst_55 = arith.constant 0.000000e+00 : f32
      %267 = vector.broadcast %cst_55 : f32 to vector<2x16x4xf32>
      %c0_56 = arith.constant 0 : index
      %c8_57 = arith.constant 8 : index
      %c0_58 = arith.constant 0 : index
      %268 = vector.load %arg13[%c0_56, %c8_57, %c0_58] : memref<20x32x4xf32, #tpu.memory_space<vmem>>, vector<2x16x4xf32>
      tpu.vector_store %arg13[%c0_56, %c8_57, %c0_58], %267 {strides = array<i32>} : memref<20x32x4xf32, #tpu.memory_space<vmem>>, vector<2x16x4xf32>,
    } else {
    }
    %c0_i32_34 = arith.constant 0 : i32
    %67 = arith.cmpi slt, %arg1, %c0_i32_34 : i32
    %68 = arith.extui %67 : i1 to i32
    %c0_i32_35 = arith.constant 0 : i32
    %69 = arith.cmpi ne, %68, %c0_i32_35 : i32
    scf.if %69 {
      %c0_55 = arith.constant 0 : index
      %c0_56 = arith.constant 0 : index
      %c0_57 = arith.constant 0 : index
      %c0_58 = arith.constant 0 : index
      %267 = vector.load %arg4[%c0_55, %c0_56, %c0_57, %c0_58] : memref<1x2x16x4xf32, #tpu.memory_space<vmem>>, vector<1x2x16x4xf32>
      %268 = vector.shape_cast %267 : vector<1x2x16x4xf32> to vector<2x16x4xf32>
      %cst_59 = arith.constant 0.000000e+00 : f32
      %269 = vector.broadcast %cst_59 : f32 to vector<2x16x4xf32>
      %270 = vector.extract_strided_slice %268 {offsets = [0, 0, 0], sizes = [2, 16, 1], strides = [1, 1, 1]} : vector<2x16x4xf32> to vector<2x16x1xf32>
      %271 = vector.extract_strided_slice %0 {offsets = [0, 0], sizes = [1, 4], strides = [1, 1]} : vector<4x4xf32> to vector<1x4xf32>
      %272 = vector.shape_cast %271 : vector<1x4xf32> to vector<4xf32>
      %273 = vector.shape_cast %272 : vector<4xf32> to vector<1x1x4xf32>
      %274 = vector.broadcast %270 : vector<2x16x1xf32> to vector<2x16x4xf32>
      %275 = vector.broadcast %273 : vector<1x1x4xf32> to vector<2x16x4xf32>
      %276 = arith.mulf %274, %275 : vector<2x16x4xf32>
      %277 = arith.addf %269, %276 : vector<2x16x4xf32>
      %278 = vector.extract_strided_slice %268 {offsets = [0, 0, 1], sizes = [2, 16, 1], strides = [1, 1, 1]} : vector<2x16x4xf32> to vector<2x16x1xf32>
      %279 = vector.extract_strided_slice %0 {offsets = [1, 0], sizes = [1, 4], strides = [1, 1]} : vector<4x4xf32> to vector<1x4xf32>
      %280 = vector.shape_cast %279 : vector<1x4xf32> to vector<4xf32>
      %281 = vector.shape_cast %280 : vector<4xf32> to vector<1x1x4xf32>
      %282 = vector.broadcast %278 : vector<2x16x1xf32> to vector<2x16x4xf32>
      %283 = vector.broadcast %281 : vector<1x1x4xf32> to vector<2x16x4xf32>
      %284 = arith.mulf %282, %283 : vector<2x16x4xf32>
      %285 = arith.addf %277, %284 : vector<2x16x4xf32>
      %286 = vector.extract_strided_slice %268 {offsets = [0, 0, 2], sizes = [2, 16, 1], strides = [1, 1, 1]} : vector<2x16x4xf32> to vector<2x16x1xf32>
      %287 = vector.extract_strided_slice %0 {offsets = [2, 0], sizes = [1, 4], strides = [1, 1]} : vector<4x4xf32> to vector<1x4xf32>
      %288 = vector.shape_cast %287 : vector<1x4xf32> to vector<4xf32>
      %289 = vector.shape_cast %288 : vector<4xf32> to vector<1x1x4xf32>
      %290 = vector.broadcast %286 : vector<2x16x1xf32> to vector<2x16x4xf32>
      %291 = vector.broadcast %289 : vector<1x1x4xf32> to vector<2x16x4xf32>
      %292 = arith.mulf %290, %291 : vector<2x16x4xf32>
      %293 = arith.addf %285, %292 : vector<2x16x4xf32>
      %294 = vector.extract_strided_slice %268 {offsets = [0, 0, 3], sizes = [2, 16, 1], strides = [1, 1, 1]} : vector<2x16x4xf32> to vector<2x16x1xf32>
      %295 = vector.extract_strided_slice %0 {offsets = [3, 0], sizes = [1, 4], strides = [1, 1]} : vector<4x4xf32> to vector<1x4xf32>
      %296 = vector.shape_cast %295 : vector<1x4xf32> to vector<4xf32>
      %297 = vector.shape_cast %296 : vector<4xf32> to vector<1x1x4xf32>
      %298 = vector.broadcast %294 : vector<2x16x1xf32> to vector<2x16x4xf32>
      %299 = vector.broadcast %297 : vector<1x1x4xf32> to vector<2x16x4xf32>
      %300 = arith.mulf %298, %299 : vector<2x16x4xf32>
      %301 = arith.addf %293, %300 : vector<2x16x4xf32>
      %302 = vector.shape_cast %1 : vector<1x4xf32> to vector<1x1x4xf32>
      %303 = vector.broadcast %302 : vector<1x1x4xf32> to vector<2x16x4xf32>
      %304 = arith.mulf %301, %303 : vector<2x16x4xf32>
      %305 = vector.shape_cast %2 : vector<1x4xf32> to vector<1x1x4xf32>
      %306 = vector.broadcast %305 : vector<1x1x4xf32> to vector<2x16x4xf32>
      %307 = arith.addf %304, %306 : vector<2x16x4xf32>
      %308 = arith.negf %307 : vector<2x16x4xf32>
      %309 = math.exp %308 : vector<2x16x4xf32>
      %cst_60 = arith.constant 1.000000e+00 : f32
      %310 = vector.broadcast %cst_60 : f32 to vector<2x16x4xf32>
      %311 = arith.addf %310, %309 : vector<2x16x4xf32>
      %312 = arith.divf %310, %311 : vector<2x16x4xf32>
      %313 = arith.mulf %307, %312 : vector<2x16x4xf32>
      %c18 = arith.constant 18 : index
      %c8_61 = arith.constant 8 : index
      %c0_62 = arith.constant 0 : index
      %314 = vector.load %arg13[%c18, %c8_61, %c0_62] : memref<20x32x4xf32, #tpu.memory_space<vmem>>, vector<2x16x4xf32>
      tpu.vector_store %arg13[%c18, %c8_61, %c0_62], %313 {strides = array<i32>} : memref<20x32x4xf32, #tpu.memory_space<vmem>>, vector<2x16x4xf32>,
    } else {
    }
    %c0_i32_36 = arith.constant 0 : i32
    %70 = arith.cmpi sge, %arg1, %c0_i32_36 : i32
    %71 = arith.extui %70 : i1 to i32
    %c0_i32_37 = arith.constant 0 : i32
    %72 = arith.cmpi ne, %71, %c0_i32_37 : i32
    scf.if %72 {
      %cst_55 = arith.constant 0.000000e+00 : f32
      %267 = vector.broadcast %cst_55 : f32 to vector<2x16x4xf32>
      %c18 = arith.constant 18 : index
      %c8_56 = arith.constant 8 : index
      %c0_57 = arith.constant 0 : index
      %268 = vector.load %arg13[%c18, %c8_56, %c0_57] : memref<20x32x4xf32, #tpu.memory_space<vmem>>, vector<2x16x4xf32>
      tpu.vector_store %arg13[%c18, %c8_56, %c0_57], %267 {strides = array<i32>} : memref<20x32x4xf32, #tpu.memory_space<vmem>>, vector<2x16x4xf32>,
    } else {
    }
    %cst_38 = arith.constant 0.000000e+00 : f32
    %73 = vector.broadcast %cst_38 : f32 to vector<16x16x4xf32>
    %c0_39 = arith.constant 0 : index
    %c6 = arith.constant 6 : index
    %c0_40 = arith.constant 0 : index
    %74 = vector.load %arg13[%c0_39, %c6, %c0_40] : memref<20x32x4xf32, #tpu.memory_space<vmem>>, vector<20x16x4xf32>
    %75 = vector.extract_strided_slice %74 {offsets = [0, 0, 0], sizes = [16, 16, 4], strides = [1, 1, 1]} : vector<20x16x4xf32> to vector<16x16x4xf32>
    %76 = vector.extract_strided_slice %3 {offsets = [0, 0, 0], sizes = [1, 1, 4], strides = [1, 1, 1]} : vector<5x5x4xf32> to vector<1x1x4xf32>
    %77 = vector.shape_cast %76 : vector<1x1x4xf32> to vector<4xf32>
    %78 = vector.shape_cast %77 : vector<4xf32> to vector<1x1x4xf32>
    %79 = vector.broadcast %78 : vector<1x1x4xf32> to vector<16x16x4xf32>
    %80 = arith.mulf %75, %79 : vector<16x16x4xf32>
    %81 = arith.addf %73, %80 : vector<16x16x4xf32>
    %82 = vector.extract_strided_slice %74 {offsets = [1, 0, 0], sizes = [16, 16, 4], strides = [1, 1, 1]} : vector<20x16x4xf32> to vector<16x16x4xf32>
    %83 = vector.extract_strided_slice %3 {offsets = [1, 0, 0], sizes = [1, 1, 4], strides = [1, 1, 1]} : vector<5x5x4xf32> to vector<1x1x4xf32>
    %84 = vector.shape_cast %83 : vector<1x1x4xf32> to vector<4xf32>
    %85 = vector.shape_cast %84 : vector<4xf32> to vector<1x1x4xf32>
    %86 = vector.broadcast %85 : vector<1x1x4xf32> to vector<16x16x4xf32>
    %87 = arith.mulf %82, %86 : vector<16x16x4xf32>
    %88 = arith.addf %81, %87 : vector<16x16x4xf32>
    %89 = vector.extract_strided_slice %74 {offsets = [2, 0, 0], sizes = [16, 16, 4], strides = [1, 1, 1]} : vector<20x16x4xf32> to vector<16x16x4xf32>
    %90 = vector.extract_strided_slice %3 {offsets = [2, 0, 0], sizes = [1, 1, 4], strides = [1, 1, 1]} : vector<5x5x4xf32> to vector<1x1x4xf32>
    %91 = vector.shape_cast %90 : vector<1x1x4xf32> to vector<4xf32>
    %92 = vector.shape_cast %91 : vector<4xf32> to vector<1x1x4xf32>
    %93 = vector.broadcast %92 : vector<1x1x4xf32> to vector<16x16x4xf32>
    %94 = arith.mulf %89, %93 : vector<16x16x4xf32>
    %95 = arith.addf %88, %94 : vector<16x16x4xf32>
    %96 = vector.extract_strided_slice %74 {offsets = [3, 0, 0], sizes = [16, 16, 4], strides = [1, 1, 1]} : vector<20x16x4xf32> to vector<16x16x4xf32>
    %97 = vector.extract_strided_slice %3 {offsets = [3, 0, 0], sizes = [1, 1, 4], strides = [1, 1, 1]} : vector<5x5x4xf32> to vector<1x1x4xf32>
    %98 = vector.shape_cast %97 : vector<1x1x4xf32> to vector<4xf32>
    %99 = vector.shape_cast %98 : vector<4xf32> to vector<1x1x4xf32>
    %100 = vector.broadcast %99 : vector<1x1x4xf32> to vector<16x16x4xf32>
    %101 = arith.mulf %96, %100 : vector<16x16x4xf32>
    %102 = arith.addf %95, %101 : vector<16x16x4xf32>
    %103 = vector.extract_strided_slice %74 {offsets = [4, 0, 0], sizes = [16, 16, 4], strides = [1, 1, 1]} : vector<20x16x4xf32> to vector<16x16x4xf32>
    %104 = vector.extract_strided_slice %3 {offsets = [4, 0, 0], sizes = [1, 1, 4], strides = [1, 1, 1]} : vector<5x5x4xf32> to vector<1x1x4xf32>
    %105 = vector.shape_cast %104 : vector<1x1x4xf32> to vector<4xf32>
    %106 = vector.shape_cast %105 : vector<4xf32> to vector<1x1x4xf32>
    %107 = vector.broadcast %106 : vector<1x1x4xf32> to vector<16x16x4xf32>
    %108 = arith.mulf %103, %107 : vector<16x16x4xf32>
    %109 = arith.addf %102, %108 : vector<16x16x4xf32>
    %c0_41 = arith.constant 0 : index
    %c7 = arith.constant 7 : index
    %c0_42 = arith.constant 0 : index
    %110 = vector.load %arg13[%c0_41, %c7, %c0_42] : memref<20x32x4xf32, #tpu.memory_space<vmem>>, vector<20x16x4xf32>
    %111 = vector.extract_strided_slice %110 {offsets = [0, 0, 0], sizes = [16, 16, 4], strides = [1, 1, 1]} : vector<20x16x4xf32> to vector<16x16x4xf32>
    %112 = vector.extract_strided_slice %3 {offsets = [0, 1, 0], sizes = [1, 1, 4], strides = [1, 1, 1]} : vector<5x5x4xf32> to vector<1x1x4xf32>
    %113 = vector.shape_cast %112 : vector<1x1x4xf32> to vector<4xf32>
    %114 = vector.shape_cast %113 : vector<4xf32> to vector<1x1x4xf32>
    %115 = vector.broadcast %114 : vector<1x1x4xf32> to vector<16x16x4xf32>
    %116 = arith.mulf %111, %115 : vector<16x16x4xf32>
    %117 = arith.addf %109, %116 : vector<16x16x4xf32>
    %118 = vector.extract_strided_slice %110 {offsets = [1, 0, 0], sizes = [16, 16, 4], strides = [1, 1, 1]} : vector<20x16x4xf32> to vector<16x16x4xf32>
    %119 = vector.extract_strided_slice %3 {offsets = [1, 1, 0], sizes = [1, 1, 4], strides = [1, 1, 1]} : vector<5x5x4xf32> to vector<1x1x4xf32>
    %120 = vector.shape_cast %119 : vector<1x1x4xf32> to vector<4xf32>
    %121 = vector.shape_cast %120 : vector<4xf32> to vector<1x1x4xf32>
    %122 = vector.broadcast %121 : vector<1x1x4xf32> to vector<16x16x4xf32>
    %123 = arith.mulf %118, %122 : vector<16x16x4xf32>
    %124 = arith.addf %117, %123 : vector<16x16x4xf32>
    %125 = vector.extract_strided_slice %110 {offsets = [2, 0, 0], sizes = [16, 16, 4], strides = [1, 1, 1]} : vector<20x16x4xf32> to vector<16x16x4xf32>
    %126 = vector.extract_strided_slice %3 {offsets = [2, 1, 0], sizes = [1, 1, 4], strides = [1, 1, 1]} : vector<5x5x4xf32> to vector<1x1x4xf32>
    %127 = vector.shape_cast %126 : vector<1x1x4xf32> to vector<4xf32>
    %128 = vector.shape_cast %127 : vector<4xf32> to vector<1x1x4xf32>
    %129 = vector.broadcast %128 : vector<1x1x4xf32> to vector<16x16x4xf32>
    %130 = arith.mulf %125, %129 : vector<16x16x4xf32>
    %131 = arith.addf %124, %130 : vector<16x16x4xf32>
    %132 = vector.extract_strided_slice %110 {offsets = [3, 0, 0], sizes = [16, 16, 4], strides = [1, 1, 1]} : vector<20x16x4xf32> to vector<16x16x4xf32>
    %133 = vector.extract_strided_slice %3 {offsets = [3, 1, 0], sizes = [1, 1, 4], strides = [1, 1, 1]} : vector<5x5x4xf32> to vector<1x1x4xf32>
    %134 = vector.shape_cast %133 : vector<1x1x4xf32> to vector<4xf32>
    %135 = vector.shape_cast %134 : vector<4xf32> to vector<1x1x4xf32>
    %136 = vector.broadcast %135 : vector<1x1x4xf32> to vector<16x16x4xf32>
    %137 = arith.mulf %132, %136 : vector<16x16x4xf32>
    %138 = arith.addf %131, %137 : vector<16x16x4xf32>
    %139 = vector.extract_strided_slice %110 {offsets = [4, 0, 0], sizes = [16, 16, 4], strides = [1, 1, 1]} : vector<20x16x4xf32> to vector<16x16x4xf32>
    %140 = vector.extract_strided_slice %3 {offsets = [4, 1, 0], sizes = [1, 1, 4], strides = [1, 1, 1]} : vector<5x5x4xf32> to vector<1x1x4xf32>
    %141 = vector.shape_cast %140 : vector<1x1x4xf32> to vector<4xf32>
    %142 = vector.shape_cast %141 : vector<4xf32> to vector<1x1x4xf32>
    %143 = vector.broadcast %142 : vector<1x1x4xf32> to vector<16x16x4xf32>
    %144 = arith.mulf %139, %143 : vector<16x16x4xf32>
    %145 = arith.addf %138, %144 : vector<16x16x4xf32>
    %c0_43 = arith.constant 0 : index
    %c8_44 = arith.constant 8 : index
    %c0_45 = arith.constant 0 : index
    %146 = vector.load %arg13[%c0_43, %c8_44, %c0_45] : memref<20x32x4xf32, #tpu.memory_space<vmem>>, vector<20x16x4xf32>
    %147 = vector.extract_strided_slice %146 {offsets = [0, 0, 0], sizes = [16, 16, 4], strides = [1, 1, 1]} : vector<20x16x4xf32> to vector<16x16x4xf32>
    %148 = vector.extract_strided_slice %3 {offsets = [0, 2, 0], sizes = [1, 1, 4], strides = [1, 1, 1]} : vector<5x5x4xf32> to vector<1x1x4xf32>
    %149 = vector.shape_cast %148 : vector<1x1x4xf32> to vector<4xf32>
    %150 = vector.shape_cast %149 : vector<4xf32> to vector<1x1x4xf32>
    %151 = vector.broadcast %150 : vector<1x1x4xf32> to vector<16x16x4xf32>
    %152 = arith.mulf %147, %151 : vector<16x16x4xf32>
    %153 = arith.addf %145, %152 : vector<16x16x4xf32>
    %154 = vector.extract_strided_slice %146 {offsets = [1, 0, 0], sizes = [16, 16, 4], strides = [1, 1, 1]} : vector<20x16x4xf32> to vector<16x16x4xf32>
    %155 = vector.extract_strided_slice %3 {offsets = [1, 2, 0], sizes = [1, 1, 4], strides = [1, 1, 1]} : vector<5x5x4xf32> to vector<1x1x4xf32>
    %156 = vector.shape_cast %155 : vector<1x1x4xf32> to vector<4xf32>
    %157 = vector.shape_cast %156 : vector<4xf32> to vector<1x1x4xf32>
    %158 = vector.broadcast %157 : vector<1x1x4xf32> to vector<16x16x4xf32>
    %159 = arith.mulf %154, %158 : vector<16x16x4xf32>
    %160 = arith.addf %153, %159 : vector<16x16x4xf32>
    %161 = vector.extract_strided_slice %146 {offsets = [2, 0, 0], sizes = [16, 16, 4], strides = [1, 1, 1]} : vector<20x16x4xf32> to vector<16x16x4xf32>
    %162 = vector.extract_strided_slice %3 {offsets = [2, 2, 0], sizes = [1, 1, 4], strides = [1, 1, 1]} : vector<5x5x4xf32> to vector<1x1x4xf32>
    %163 = vector.shape_cast %162 : vector<1x1x4xf32> to vector<4xf32>
    %164 = vector.shape_cast %163 : vector<4xf32> to vector<1x1x4xf32>
    %165 = vector.broadcast %164 : vector<1x1x4xf32> to vector<16x16x4xf32>
    %166 = arith.mulf %161, %165 : vector<16x16x4xf32>
    %167 = arith.addf %160, %166 : vector<16x16x4xf32>
    %168 = vector.extract_strided_slice %146 {offsets = [3, 0, 0], sizes = [16, 16, 4], strides = [1, 1, 1]} : vector<20x16x4xf32> to vector<16x16x4xf32>
    %169 = vector.extract_strided_slice %3 {offsets = [3, 2, 0], sizes = [1, 1, 4], strides = [1, 1, 1]} : vector<5x5x4xf32> to vector<1x1x4xf32>
    %170 = vector.shape_cast %169 : vector<1x1x4xf32> to vector<4xf32>
    %171 = vector.shape_cast %170 : vector<4xf32> to vector<1x1x4xf32>
    %172 = vector.broadcast %171 : vector<1x1x4xf32> to vector<16x16x4xf32>
    %173 = arith.mulf %168, %172 : vector<16x16x4xf32>
    %174 = arith.addf %167, %173 : vector<16x16x4xf32>
    %175 = vector.extract_strided_slice %146 {offsets = [4, 0, 0], sizes = [16, 16, 4], strides = [1, 1, 1]} : vector<20x16x4xf32> to vector<16x16x4xf32>
    %176 = vector.extract_strided_slice %3 {offsets = [4, 2, 0], sizes = [1, 1, 4], strides = [1, 1, 1]} : vector<5x5x4xf32> to vector<1x1x4xf32>
    %177 = vector.shape_cast %176 : vector<1x1x4xf32> to vector<4xf32>
    %178 = vector.shape_cast %177 : vector<4xf32> to vector<1x1x4xf32>
    %179 = vector.broadcast %178 : vector<1x1x4xf32> to vector<16x16x4xf32>
    %180 = arith.mulf %175, %179 : vector<16x16x4xf32>
    %181 = arith.addf %174, %180 : vector<16x16x4xf32>
    %c0_46 = arith.constant 0 : index
    %c9 = arith.constant 9 : index
    %c0_47 = arith.constant 0 : index
    %182 = vector.load %arg13[%c0_46, %c9, %c0_47] : memref<20x32x4xf32, #tpu.memory_space<vmem>>, vector<20x16x4xf32>
    %183 = vector.extract_strided_slice %182 {offsets = [0, 0, 0], sizes = [16, 16, 4], strides = [1, 1, 1]} : vector<20x16x4xf32> to vector<16x16x4xf32>
    %184 = vector.extract_strided_slice %3 {offsets = [0, 3, 0], sizes = [1, 1, 4], strides = [1, 1, 1]} : vector<5x5x4xf32> to vector<1x1x4xf32>
    %185 = vector.shape_cast %184 : vector<1x1x4xf32> to vector<4xf32>
    %186 = vector.shape_cast %185 : vector<4xf32> to vector<1x1x4xf32>
    %187 = vector.broadcast %186 : vector<1x1x4xf32> to vector<16x16x4xf32>
    %188 = arith.mulf %183, %187 : vector<16x16x4xf32>
    %189 = arith.addf %181, %188 : vector<16x16x4xf32>
    %190 = vector.extract_strided_slice %182 {offsets = [1, 0, 0], sizes = [16, 16, 4], strides = [1, 1, 1]} : vector<20x16x4xf32> to vector<16x16x4xf32>
    %191 = vector.extract_strided_slice %3 {offsets = [1, 3, 0], sizes = [1, 1, 4], strides = [1, 1, 1]} : vector<5x5x4xf32> to vector<1x1x4xf32>
    %192 = vector.shape_cast %191 : vector<1x1x4xf32> to vector<4xf32>
    %193 = vector.shape_cast %192 : vector<4xf32> to vector<1x1x4xf32>
    %194 = vector.broadcast %193 : vector<1x1x4xf32> to vector<16x16x4xf32>
    %195 = arith.mulf %190, %194 : vector<16x16x4xf32>
    %196 = arith.addf %189, %195 : vector<16x16x4xf32>
    %197 = vector.extract_strided_slice %182 {offsets = [2, 0, 0], sizes = [16, 16, 4], strides = [1, 1, 1]} : vector<20x16x4xf32> to vector<16x16x4xf32>
    %198 = vector.extract_strided_slice %3 {offsets = [2, 3, 0], sizes = [1, 1, 4], strides = [1, 1, 1]} : vector<5x5x4xf32> to vector<1x1x4xf32>
    %199 = vector.shape_cast %198 : vector<1x1x4xf32> to vector<4xf32>
    %200 = vector.shape_cast %199 : vector<4xf32> to vector<1x1x4xf32>
    %201 = vector.broadcast %200 : vector<1x1x4xf32> to vector<16x16x4xf32>
    %202 = arith.mulf %197, %201 : vector<16x16x4xf32>
    %203 = arith.addf %196, %202 : vector<16x16x4xf32>
    %204 = vector.extract_strided_slice %182 {offsets = [3, 0, 0], sizes = [16, 16, 4], strides = [1, 1, 1]} : vector<20x16x4xf32> to vector<16x16x4xf32>
    %205 = vector.extract_strided_slice %3 {offsets = [3, 3, 0], sizes = [1, 1, 4], strides = [1, 1, 1]} : vector<5x5x4xf32> to vector<1x1x4xf32>
    %206 = vector.shape_cast %205 : vector<1x1x4xf32> to vector<4xf32>
    %207 = vector.shape_cast %206 : vector<4xf32> to vector<1x1x4xf32>
    %208 = vector.broadcast %207 : vector<1x1x4xf32> to vector<16x16x4xf32>
    %209 = arith.mulf %204, %208 : vector<16x16x4xf32>
    %210 = arith.addf %203, %209 : vector<16x16x4xf32>
    %211 = vector.extract_strided_slice %182 {offsets = [4, 0, 0], sizes = [16, 16, 4], strides = [1, 1, 1]} : vector<20x16x4xf32> to vector<16x16x4xf32>
    %212 = vector.extract_strided_slice %3 {offsets = [4, 3, 0], sizes = [1, 1, 4], strides = [1, 1, 1]} : vector<5x5x4xf32> to vector<1x1x4xf32>
    %213 = vector.shape_cast %212 : vector<1x1x4xf32> to vector<4xf32>
    %214 = vector.shape_cast %213 : vector<4xf32> to vector<1x1x4xf32>
    %215 = vector.broadcast %214 : vector<1x1x4xf32> to vector<16x16x4xf32>
    %216 = arith.mulf %211, %215 : vector<16x16x4xf32>
    %217 = arith.addf %210, %216 : vector<16x16x4xf32>
    %c0_48 = arith.constant 0 : index
    %c10 = arith.constant 10 : index
    %c0_49 = arith.constant 0 : index
    %218 = vector.load %arg13[%c0_48, %c10, %c0_49] : memref<20x32x4xf32, #tpu.memory_space<vmem>>, vector<20x16x4xf32>
    %219 = vector.extract_strided_slice %218 {offsets = [0, 0, 0], sizes = [16, 16, 4], strides = [1, 1, 1]} : vector<20x16x4xf32> to vector<16x16x4xf32>
    %220 = vector.extract_strided_slice %3 {offsets = [0, 4, 0], sizes = [1, 1, 4], strides = [1, 1, 1]} : vector<5x5x4xf32> to vector<1x1x4xf32>
    %221 = vector.shape_cast %220 : vector<1x1x4xf32> to vector<4xf32>
    %222 = vector.shape_cast %221 : vector<4xf32> to vector<1x1x4xf32>
    %223 = vector.broadcast %222 : vector<1x1x4xf32> to vector<16x16x4xf32>
    %224 = arith.mulf %219, %223 : vector<16x16x4xf32>
    %225 = arith.addf %217, %224 : vector<16x16x4xf32>
    %226 = vector.extract_strided_slice %218 {offsets = [1, 0, 0], sizes = [16, 16, 4], strides = [1, 1, 1]} : vector<20x16x4xf32> to vector<16x16x4xf32>
    %227 = vector.extract_strided_slice %3 {offsets = [1, 4, 0], sizes = [1, 1, 4], strides = [1, 1, 1]} : vector<5x5x4xf32> to vector<1x1x4xf32>
    %228 = vector.shape_cast %227 : vector<1x1x4xf32> to vector<4xf32>
    %229 = vector.shape_cast %228 : vector<4xf32> to vector<1x1x4xf32>
    %230 = vector.broadcast %229 : vector<1x1x4xf32> to vector<16x16x4xf32>
    %231 = arith.mulf %226, %230 : vector<16x16x4xf32>
    %232 = arith.addf %225, %231 : vector<16x16x4xf32>
    %233 = vector.extract_strided_slice %218 {offsets = [2, 0, 0], sizes = [16, 16, 4], strides = [1, 1, 1]} : vector<20x16x4xf32> to vector<16x16x4xf32>
    %234 = vector.extract_strided_slice %3 {offsets = [2, 4, 0], sizes = [1, 1, 4], strides = [1, 1, 1]} : vector<5x5x4xf32> to vector<1x1x4xf32>
    %235 = vector.shape_cast %234 : vector<1x1x4xf32> to vector<4xf32>
    %236 = vector.shape_cast %235 : vector<4xf32> to vector<1x1x4xf32>
    %237 = vector.broadcast %236 : vector<1x1x4xf32> to vector<16x16x4xf32>
    %238 = arith.mulf %233, %237 : vector<16x16x4xf32>
    %239 = arith.addf %232, %238 : vector<16x16x4xf32>
    %240 = vector.extract_strided_slice %218 {offsets = [3, 0, 0], sizes = [16, 16, 4], strides = [1, 1, 1]} : vector<20x16x4xf32> to vector<16x16x4xf32>
    %241 = vector.extract_strided_slice %3 {offsets = [3, 4, 0], sizes = [1, 1, 4], strides = [1, 1, 1]} : vector<5x5x4xf32> to vector<1x1x4xf32>
    %242 = vector.shape_cast %241 : vector<1x1x4xf32> to vector<4xf32>
    %243 = vector.shape_cast %242 : vector<4xf32> to vector<1x1x4xf32>
    %244 = vector.broadcast %243 : vector<1x1x4xf32> to vector<16x16x4xf32>
    %245 = arith.mulf %240, %244 : vector<16x16x4xf32>
    %246 = arith.addf %239, %245 : vector<16x16x4xf32>
    %247 = vector.extract_strided_slice %218 {offsets = [4, 0, 0], sizes = [16, 16, 4], strides = [1, 1, 1]} : vector<20x16x4xf32> to vector<16x16x4xf32>
    %248 = vector.extract_strided_slice %3 {offsets = [4, 4, 0], sizes = [1, 1, 4], strides = [1, 1, 1]} : vector<5x5x4xf32> to vector<1x1x4xf32>
    %249 = vector.shape_cast %248 : vector<1x1x4xf32> to vector<4xf32>
    %250 = vector.shape_cast %249 : vector<4xf32> to vector<1x1x4xf32>
    %251 = vector.broadcast %250 : vector<1x1x4xf32> to vector<16x16x4xf32>
    %252 = arith.mulf %247, %251 : vector<16x16x4xf32>
    %253 = arith.addf %246, %252 : vector<16x16x4xf32>
    %254 = vector.broadcast %4 : vector<1x1x4xf32> to vector<16x16x4xf32>
    %255 = arith.mulf %253, %254 : vector<16x16x4xf32>
    %256 = vector.broadcast %5 : vector<1x1x4xf32> to vector<16x16x4xf32>
    %257 = arith.addf %255, %256 : vector<16x16x4xf32>
    %258 = arith.negf %257 : vector<16x16x4xf32>
    %259 = math.exp %258 : vector<16x16x4xf32>
    %cst_50 = arith.constant 1.000000e+00 : f32
    %260 = vector.broadcast %cst_50 : f32 to vector<16x16x4xf32>
    %261 = arith.addf %260, %259 : vector<16x16x4xf32>
    %262 = arith.divf %260, %261 : vector<16x16x4xf32>
    %263 = arith.mulf %257, %262 : vector<16x16x4xf32>
    %c0_51 = arith.constant 0 : index
    %c0_52 = arith.constant 0 : index
    %c0_53 = arith.constant 0 : index
    %c0_54 = arith.constant 0 : index
    %264 = vector.load %arg12[%c0_51, %c0_52, %c0_53, %c0_54] : memref<1x16x16x4xf32, #tpu.memory_space<vmem>>, vector<1x16x16x4xf32>
    %265 = vector.shape_cast %264 : vector<1x16x16x4xf32> to vector<16x16x4xf32>
    %266 = vector.shape_cast %263 : vector<16x16x4xf32> to vector<1x16x16x4xf32>
    tpu.vector_store %arg12[%c0_51, %c0_52, %c0_53, %c0_54], %266 {strides = array<i32>} : memref<1x16x16x4xf32, #tpu.memory_space<vmem>>, vector<1x16x16x4xf32>,
    return
  }
  func.func @transform_0(%arg0: i32, %arg1: i32) -> (i32, i32, i32, i32) {
    %c0_i32 = arith.constant 0 : i32
    %c0_i32_0 = arith.constant 0 : i32
    %c0_i32_1 = arith.constant 0 : i32
    return %arg0, %arg1, %c0_i32, %c0_i32_0 : i32, i32, i32, i32
  }
  func.func @transform_1(%arg0: i32, %arg1: i32) -> (i32, i32, i32, i32) {
    %c8_i32 = arith.constant 8 : i32
    %0 = arith.muli %arg1, %c8_i32 : i32
    %c1_i32 = arith.constant 1 : i32
    %1 = arith.subi %0, %c1_i32 : i32
    %c0_i32 = arith.constant 0 : i32
    %2 = arith.maxsi %1, %c0_i32 : i32
    %c0_i32_0 = arith.constant 0 : i32
    %c0_i32_1 = arith.constant 0 : i32
    %c0_i32_2 = arith.constant 0 : i32
    return %arg0, %2, %c0_i32_0, %c0_i32_1 : i32, i32, i32, i32
  }
  func.func @transform_2(%arg0: i32, %arg1: i32) -> (i32, i32, i32, i32) {
    %c1_i32 = arith.constant 1 : i32
    %0 = arith.addi %arg1, %c1_i32 : i32
    %c8_i32 = arith.constant 8 : i32
    %1 = arith.muli %0, %c8_i32 : i32
    %c7_i32 = arith.constant 7 : i32
    %2 = arith.minsi %1, %c7_i32 : i32
    %c0_i32 = arith.constant 0 : i32
    %c0_i32_0 = arith.constant 0 : i32
    %c0_i32_1 = arith.constant 0 : i32
    return %arg0, %2, %c0_i32, %c0_i32_0 : i32, i32, i32, i32
  }
  func.func @transform_3(%arg0: i32, %arg1: i32) -> (i32, i32) {
    %c0_i32 = arith.constant 0 : i32
    %c0_i32_0 = arith.constant 0 : i32
    %c0_i32_1 = arith.constant 0 : i32
    return %c0_i32, %c0_i32_0 : i32, i32
  }
  func.func @transform_4(%arg0: i32, %arg1: i32) -> (i32, i32) {
    %c0_i32 = arith.constant 0 : i32
    %c0_i32_0 = arith.constant 0 : i32
    %c0_i32_1 = arith.constant 0 : i32
    return %c0_i32, %c0_i32_0 : i32, i32
  }
  func.func @transform_5(%arg0: i32, %arg1: i32) -> (i32, i32) {
    %c0_i32 = arith.constant 0 : i32
    %c0_i32_0 = arith.constant 0 : i32
    %c0_i32_1 = arith.constant 0 : i32
    return %c0_i32, %c0_i32_0 : i32, i32
  }
  func.func @transform_6(%arg0: i32, %arg1: i32) -> (i32, i32, i32) {
    %c0_i32 = arith.constant 0 : i32
    %c0_i32_0 = arith.constant 0 : i32
    %c0_i32_1 = arith.constant 0 : i32
    %c0_i32_2 = arith.constant 0 : i32
    return %c0_i32, %c0_i32_0, %c0_i32_1 : i32, i32, i32
  }
  func.func @transform_7(%arg0: i32, %arg1: i32) -> (i32, i32, i32) {
    %c0_i32 = arith.constant 0 : i32
    %c0_i32_0 = arith.constant 0 : i32
    %c0_i32_1 = arith.constant 0 : i32
    %c0_i32_2 = arith.constant 0 : i32
    return %c0_i32, %c0_i32_0, %c0_i32_1 : i32, i32, i32
  }
  func.func @transform_8(%arg0: i32, %arg1: i32) -> (i32, i32, i32) {
    %c0_i32 = arith.constant 0 : i32
    %c0_i32_0 = arith.constant 0 : i32
    %c0_i32_1 = arith.constant 0 : i32
    %c0_i32_2 = arith.constant 0 : i32
    return %c0_i32, %c0_i32_0, %c0_i32_1 : i32, i32, i32
  }
  func.func @transform_9(%arg0: i32, %arg1: i32) -> (i32, i32, i32, i32) {
    %c0_i32 = arith.constant 0 : i32
    %c0_i32_0 = arith.constant 0 : i32
    %c0_i32_1 = arith.constant 0 : i32
    return %arg0, %arg1, %c0_i32, %c0_i32_0 : i32, i32, i32, i32
  }
  func.func @transform_10(%arg0: i32, %arg1: i32) -> (i32, i32, i32, i32) {
    %c0_i32 = arith.constant 0 : i32
    %c0_i32_0 = arith.constant 0 : i32
    %c0_i32_1 = arith.constant 0 : i32
    return %arg0, %arg1, %c0_i32, %c0_i32_0 : i32, i32, i32, i32
  }
}

</mosaic_0001>

<llo_original>
// kernel: tpu_custom_call.1
$region0: #{tpu_custom_call.1}
  #allocation0 [shape = 'u32[]', space=smem, size = 0x4, offset = 0x4, fixed_abs, tag = 'smem constant byte address 0x4 - core index']
  #allocation1 [shape = 'u32[72,128]{1,0:T(1,128)}', space=vmem, size = 0x9000, scoped, tag = 'internal scratch']
  #allocation2 [shape = 'f32[20,32,4]{2,1,0:T(8,128)}', space=vmem, size = 0x50000, scoped, tag = 'scratch operand']
  %s0 = inlined_call_operand.vmem [shape: f32[2,16,16,4], index: 0, kind: input, shape index: {}]
  %s1 = inlined_call_operand.vmem [shape: f32[2,16,16,4], index: 1, kind: input, shape index: {}]
  %s2 = inlined_call_operand.vmem [shape: f32[2,16,16,4], index: 2, kind: input, shape index: {}]
  %s3 = inlined_call_operand.vmem [shape: f32[4,4], index: 3, kind: input, shape index: {}]
  %s4 = inlined_call_operand.vmem [shape: f32[1,4], index: 4, kind: input, shape index: {}]
  %s5 = inlined_call_operand.vmem [shape: f32[1,4], index: 5, kind: input, shape index: {}]
  %s6 = inlined_call_operand.vmem [shape: f32[5,5,4], index: 6, kind: input, shape index: {}]
  %s7 = inlined_call_operand.vmem [shape: f32[1,1,4], index: 7, kind: input, shape index: {}]
  %s8 = inlined_call_operand.vmem [shape: f32[1,1,4], index: 8, kind: input, shape index: {}]
  %s9 = inlined_call_operand.vmem [shape: f32[2,16,16,4], index: 9, kind: output, shape index: {0}]
  %s10 = inlined_call_operand.vmem [shape: f32[2,16,16,4], index: 10, kind: output, shape index: {1}]
  %11 = xla_tuple %s9, %s10
  %s12 = sld [smem:[#allocation0]]
  $region93: #{tpu_custom_call.1} parent=0
    _
  %s14 = ssub.s32 1, %s12
  %s15 = scalar_select 0, %s14, %s12
  loop: start=0, step=1, limit=4
  $region2: #{tpu_custom_call.1} parent=0 // loop_pre_header
    _
  $region3: #{tpu_custom_call.1} parent=0 // loop_header
    %s17 = sphi 0, %s21
    %p18 = scmp.ge.s32.totalorder %s17, 4
    %s24 = sphi 0, %s36
    %s25 = sphi 0, %s32
    %s26 = sphi 0, %s24
    %s27 = sphi 0, %s25
    %s28 = sphi 0, %s26
    %s29 = sphi 0, %s27
    %s41 = sphi 0, %s43
    %s44 = sphi 0, %s41
    %s45 = sphi 0, %s44
    %s61 = sphi 0, %s45
    %s77 = sphi 0, %s79
    %s80 = sphi 0, %s77
    %s81 = sphi 0, %s80
    %s97 = sphi 0, %s81
    %s113 = sphi 0, %s115
    %s116 = sphi 0, %s113
    %s117 = sphi 0, %s116
    %s133 = sphi 0, %s117
    %s137 = sphi 0, %s137
    %s139 = sphi 0, %s137
    %s140 = sphi 0, %s139
    %s154 = sphi 0, %s140
    %s158 = sphi 0, %s158
    %s160 = sphi 0, %s158
    %s161 = sphi 0, %s160
    %s175 = sphi 0, %s161
    %s179 = sphi 0, %s179
    %s181 = sphi 0, %s179
    %s182 = sphi 0, %s181
    %s196 = sphi 0, %s182
    %s200 = sphi 0, %s200
    %s202 = sphi 0, %s200
    %s203 = sphi 0, %s202
    %s217 = sphi 0, %s203
    %s221 = sphi 0, %s221
    %s223 = sphi 0, %s221
    %s224 = sphi 0, %s223
    %s238 = sphi 0, %s224
    %s242 = sphi 0, %s242
    %s244 = sphi 0, %s242
    %s245 = sphi 0, %s244
    %s259 = sphi 0, %s245
    %s267 = sphi 0, %s269
    %s270 = sphi 0, %s267
    %s271 = sphi 0, %s270
    %s287 = sphi 0, %s271
    %s295 = sphi 0, %s297
    %s298 = sphi 0, %s295
    %s299 = sphi 0, %s298
    %s315 = sphi 0, %s299
  $region4: #{tpu_custom_call.1} parent=0 // loop_header_branch
    %20 = sbr.rel (%p18) target = $region8
  $region5: #{tpu_custom_call.1} parent=0 // loop_body
    %s22 = ssub.s32 %s17, 1
    %s23 = ssub.s32 %s17, 2
    %s30 = sadd.s32 1, %s25
    %p31 = scmp.ge.s32.totalorder %s30, 1
    %s32 = scalar_select %p31, 0, %s30
    %s33 = sadd.s32 1, %s24
    %s34 = scalar_select %p31, %s33, %s24
    %p35 = scmp.ge.s32.totalorder %s34, 2
    %s36 = scalar_select %p35, 0, %s34
    %s37 = ssub.s32 %s24, %s36
    %s38 = ssub.s32 %s25, %s32
    %s39 = sor.u32 %s37, %s38
    %p40 = scmp.eq.s32.totalorder %s39, 0
    %s42 = sadd.s32 %s41, 1
    %s43 = scalar_select %p40, %s41, %s42
    %p46 = pneg %p40
    %p47 = scmp.eq.s32.totalorder %s17, 1
    %p48 = por %p46, %p47
    %p49 = scmp.ne.s32.totalorder %s41, %s44
    %p50 = scmp.eq.s32.totalorder %s17, 0
    %p51 = por %p49, %p50
    %p52 = scmp.ne.s32.totalorder %s41, %s44
    %p53 = scmp.eq.s32.totalorder %s22, 1
    %p54 = por %p52, %p53
    %p55 = scmp.ne.s32.totalorder %s44, %s45
    %p56 = scmp.eq.s32.totalorder %s22, 0
    %p57 = por %p55, %p56
    %p58 = scmp.ne.s32.totalorder %s44, %s45
    %p59 = scmp.eq.s32.totalorder %s23, 1
    %p60 = por %p58, %p59
    %p62 = scmp.ne.s32.totalorder %s45, %s61
    %p63 = scmp.eq.s32.totalorder %s23, 0
    %p64 = por %p62, %p63
    %s65 = smul.u32 %s25, 8
    %s66 = ssub.s32 %s65, 1
    %p67 = scmp.gt.s32.totalorder %s66, 0
    %s68 = scalar_select %p67, %s66, 0
    %s69 = smul.u32 %s32, 8
    %s70 = ssub.s32 %s69, 1
    %p71 = scmp.gt.s32.totalorder %s70, 0
    %s72 = scalar_select %p71, %s70, 0
    %s73 = ssub.s32 %s24, %s36
    %s74 = ssub.s32 %s68, %s72
    %s75 = sor.u32 %s73, %s74
    %p76 = scmp.eq.s32.totalorder %s75, 0
    %s78 = sadd.s32 %s77, 1
    %s79 = scalar_select %p76, %s77, %s78
    %p82 = pneg %p76
    %p83 = scmp.eq.s32.totalorder %s17, 1
    %p84 = por %p82, %p83
    %p85 = scmp.ne.s32.totalorder %s77, %s80
    %p86 = scmp.eq.s32.totalorder %s17, 0
    %p87 = por %p85, %p86
    %p88 = scmp.ne.s32.totalorder %s77, %s80
    %p89 = scmp.eq.s32.totalorder %s22, 1
    %p90 = por %p88, %p89
    %p91 = scmp.ne.s32.totalorder %s80, %s81
    %p92 = scmp.eq.s32.totalorder %s22, 0
    %p93 = por %p91, %p92
    %p94 = scmp.ne.s32.totalorder %s80, %s81
    %p95 = scmp.eq.s32.totalorder %s23, 1
    %p96 = por %p94, %p95
    %p98 = scmp.ne.s32.totalorder %s81, %s97
    %p99 = scmp.eq.s32.totalorder %s23, 0
    %p100 = por %p98, %p99
    %s101 = sadd.s32 %s25, 1
    %s102 = smul.u32 %s101, 8
    %p103 = scmp.lt.s32.totalorder %s102, 7
    %s104 = scalar_select %p103, %s102, 7
    %s105 = sadd.s32 %s32, 1
    %s106 = smul.u32 %s105, 8
    %p107 = scmp.lt.s32.totalorder %s106, 7
    %s108 = scalar_select %p107, %s106, 7
    %s109 = ssub.s32 %s24, %s36
    %s110 = ssub.s32 %s104, %s108
    %s111 = sor.u32 %s109, %s110
    %p112 = scmp.eq.s32.totalorder %s111, 0
    %s114 = sadd.s32 %s113, 1
    %s115 = scalar_select %p112, %s113, %s114
    %p118 = pneg %p112
    %p119 = scmp.eq.s32.totalorder %s17, 1
    %p120 = por %p118, %p119
    %p121 = scmp.ne.s32.totalorder %s113, %s116
    %p122 = scmp.eq.s32.totalorder %s17, 0
    %p123 = por %p121, %p122
    %p124 = scmp.ne.s32.totalorder %s113, %s116
    %p125 = scmp.eq.s32.totalorder %s22, 1
    %p126 = por %p124, %p125
    %p127 = scmp.ne.s32.totalorder %s116, %s117
    %p128 = scmp.eq.s32.totalorder %s22, 0
    %p129 = por %p127, %p128
    %p130 = scmp.ne.s32.totalorder %s116, %s117
    %p131 = scmp.eq.s32.totalorder %s23, 1
    %p132 = por %p130, %p131
    %p134 = scmp.ne.s32.totalorder %s117, %s133
    %p135 = scmp.eq.s32.totalorder %s23, 0
    %p136 = por %p134, %p135
    %s138 = sadd.s32 %s137, 1
    %p141 = scmp.eq.s32.totalorder %s17, 1
    %p142 = scmp.ne.s32.totalorder %s137, %s139
    %p143 = scmp.eq.s32.totalorder %s17, 0
    %p144 = por %p142, %p143
    %p145 = scmp.ne.s32.totalorder %s137, %s139
    %p146 = scmp.eq.s32.totalorder %s22, 1
    %p147 = por %p145, %p146
    %p148 = scmp.ne.s32.totalorder %s139, %s140
    %p149 = scmp.eq.s32.totalorder %s22, 0
    %p150 = por %p148, %p149
    %p151 = scmp.ne.s32.totalorder %s139, %s140
    %p152 = scmp.eq.s32.totalorder %s23, 1
    %p153 = por %p151, %p152
    %p155 = scmp.ne.s32.totalorder %s140, %s154
    %p156 = scmp.eq.s32.totalorder %s23, 0
    %p157 = por %p155, %p156
    %s159 = sadd.s32 %s158, 1
    %p162 = scmp.eq.s32.totalorder %s17, 1
    %p163 = scmp.ne.s32.totalorder %s158, %s160
    %p164 = scmp.eq.s32.totalorder %s17, 0
    %p165 = por %p163, %p164
    %p166 = scmp.ne.s32.totalorder %s158, %s160
    %p167 = scmp.eq.s32.totalorder %s22, 1
    %p168 = por %p166, %p167
    %p169 = scmp.ne.s32.totalorder %s160, %s161
    %p170 = scmp.eq.s32.totalorder %s22, 0
    %p171 = por %p169, %p170
    %p172 = scmp.ne.s32.totalorder %s160, %s161
    %p173 = scmp.eq.s32.totalorder %s23, 1
    %p174 = por %p172, %p173
    %p176 = scmp.ne.s32.totalorder %s161, %s175
    %p177 = scmp.eq.s32.totalorder %s23, 0
    %p178 = por %p176, %p177
    %s180 = sadd.s32 %s179, 1
    %p183 = scmp.eq.s32.totalorder %s17, 1
    %p184 = scmp.ne.s32.totalorder %s179, %s181
    %p185 = scmp.eq.s32.totalorder %s17, 0
    %p186 = por %p184, %p185
    %p187 = scmp.ne.s32.totalorder %s179, %s181
    %p188 = scmp.eq.s32.totalorder %s22, 1
    %p189 = por %p187, %p188
    %p190 = scmp.ne.s32.totalorder %s181, %s182
    %p191 = scmp.eq.s32.totalorder %s22, 0
    %p192 = por %p190, %p191
    %p193 = scmp.ne.s32.totalorder %s181, %s182
    %p194 = scmp.eq.s32.totalorder %s23, 1
    %p195 = por %p193, %p194
    %p197 = scmp.ne.s32.totalorder %s182, %s196
    %p198 = scmp.eq.s32.totalorder %s23, 0
    %p199 = por %p197, %p198
    %s201 = sadd.s32 %s200, 1
    %p204 = scmp.eq.s32.totalorder %s17, 1
    %p205 = scmp.ne.s32.totalorder %s200, %s202
    %p206 = scmp.eq.s32.totalorder %s17, 0
    %p207 = por %p205, %p206
    %p208 = scmp.ne.s32.totalorder %s200, %s202
    %p209 = scmp.eq.s32.totalorder %s22, 1
    %p210 = por %p208, %p209
    %p211 = scmp.ne.s32.totalorder %s202, %s203
    %p212 = scmp.eq.s32.totalorder %s22, 0
    %p213 = por %p211, %p212
    %p214 = scmp.ne.s32.totalorder %s202, %s203
    %p215 = scmp.eq.s32.totalorder %s23, 1
    %p216 = por %p214, %p215
    %p218 = scmp.ne.s32.totalorder %s203, %s217
    %p219 = scmp.eq.s32.totalorder %s23, 0
    %p220 = por %p218, %p219
    %s222 = sadd.s32 %s221, 1
    %p225 = scmp.eq.s32.totalorder %s17, 1
    %p226 = scmp.ne.s32.totalorder %s221, %s223
    %p227 = scmp.eq.s32.totalorder %s17, 0
    %p228 = por %p226, %p227
    %p229 = scmp.ne.s32.totalorder %s221, %s223
    %p230 = scmp.eq.s32.totalorder %s22, 1
    %p231 = por %p229, %p230
    %p232 = scmp.ne.s32.totalorder %s223, %s224
    %p233 = scmp.eq.s32.totalorder %s22, 0
    %p234 = por %p232, %p233
    %p235 = scmp.ne.s32.totalorder %s223, %s224
    %p236 = scmp.eq.s32.totalorder %s23, 1
    %p237 = por %p235, %p236
    %p239 = scmp.ne.s32.totalorder %s224, %s238
    %p240 = scmp.eq.s32.totalorder %s23, 0
    %p241 = por %p239, %p240
    %s243 = sadd.s32 %s242, 1
    %p246 = scmp.eq.s32.totalorder %s17, 1
    %p247 = scmp.ne.s32.totalorder %s242, %s244
    %p248 = scmp.eq.s32.totalorder %s17, 0
    %p249 = por %p247, %p248
    %p250 = scmp.ne.s32.totalorder %s242, %s244
    %p251 = scmp.eq.s32.totalorder %s22, 1
    %p252 = por %p250, %p251
    %p253 = scmp.ne.s32.totalorder %s244, %s245
    %p254 = scmp.eq.s32.totalorder %s22, 0
    %p255 = por %p253, %p254
    %p256 = scmp.ne.s32.totalorder %s244, %s245
    %p257 = scmp.eq.s32.totalorder %s23, 1
    %p258 = por %p256, %p257
    %p260 = scmp.ne.s32.totalorder %s245, %s259
    %p261 = scmp.eq.s32.totalorder %s23, 0
    %p262 = por %p260, %p261
    %s263 = ssub.s32 %s24, %s36
    %s264 = ssub.s32 %s25, %s32
    %s265 = sor.u32 %s263, %s264
    %p266 = scmp.eq.s32.totalorder %s265, 0
    %s268 = sadd.s32 %s267, 1
    %s269 = scalar_select %p266, %s267, %s268
    %p272 = pneg %p266
    %p273 = scmp.eq.s32.totalorder %s17, 1
    %p274 = por %p272, %p273
    %p275 = scmp.ne.s32.totalorder %s267, %s270
    %p276 = scmp.eq.s32.totalorder %s17, 0
    %p277 = por %p275, %p276
    %p278 = scmp.ne.s32.totalorder %s267, %s270
    %p279 = scmp.eq.s32.totalorder %s22, 1
    %p280 = por %p278, %p279
    %p281 = scmp.ne.s32.totalorder %s270, %s271
    %p282 = scmp.eq.s32.totalorder %s22, 0
    %p283 = por %p281, %p282
    %p284 = scmp.ne.s32.totalorder %s270, %s271
    %p285 = scmp.eq.s32.totalorder %s23, 1
    %p286 = por %p284, %p285
    %p288 = scmp.ne.s32.totalorder %s271, %s287
    %p289 = scmp.eq.s32.totalorder %s23, 0
    %p290 = por %p288, %p289
    %s291 = ssub.s32 %s24, %s36
    %s292 = ssub.s32 %s25, %s32
    %s293 = sor.u32 %s291, %s292
    %p294 = scmp.eq.s32.totalorder %s293, 0
    %s296 = sadd.s32 %s295, 1
    %s297 = scalar_select %p294, %s295, %s296
    %p300 = pneg %p294
    %p301 = scmp.eq.s32.totalorder %s17, 1
    %p302 = por %p300, %p301
    %p303 = scmp.ne.s32.totalorder %s295, %s298
    %p304 = scmp.eq.s32.totalorder %s17, 0
    %p305 = por %p303, %p304
    %p306 = scmp.ne.s32.totalorder %s295, %s298
    %p307 = scmp.eq.s32.totalorder %s22, 1
    %p308 = por %p306, %p307
    %p309 = scmp.ne.s32.totalorder %s298, %s299
    %p310 = scmp.eq.s32.totalorder %s22, 0
    %p311 = por %p309, %p310
    %p312 = scmp.ne.s32.totalorder %s298, %s299
    %p313 = scmp.eq.s32.totalorder %s23, 1
    %p314 = por %p312, %p313
    %p316 = scmp.ne.s32.totalorder %s299, %s315
    %p317 = scmp.eq.s32.totalorder %s23, 0
    %p318 = por %p316, %p317
    %p319 = scmp.le.s32.totalorder 1, %s17
    %p320 = scmp.lt.s32.totalorder %s17, 3
    %p321 = pnand %p319, %p320
    %p322 = pneg %p321
    // Predicated region
    $region9: #{tpu_custom_call.1} parent=5 // pred_check
      _
    $region10: #{tpu_custom_call.1} parent=5 // pred_check_branch
      %324 = sbr.rel (%p321) target = $region12
    $region11: #{tpu_custom_call.1} parent=5 // pred_region
      %s325 = ssub.s32 %s17, 1
      // Predicated region
      $region13: #{tpu_custom_call.1} parent=11 // pred_check
        %p326 = pneg %p150
      $region14: #{tpu_custom_call.1} parent=11 // pred_check_branch
        %328 = sbr.rel (%p326) target = $region16
      $region15: #{tpu_custom_call.1} parent=11 // pred_region
        _
      $region16: #{tpu_custom_call.1} parent=11 // pred_fallthru
        _
      // Predicated region
      $region17: #{tpu_custom_call.1} parent=11 // pred_check
        %p329 = pneg %p171
      $region18: #{tpu_custom_call.1} parent=11 // pred_check_branch
        %331 = sbr.rel (%p329) target = $region20
      $region19: #{tpu_custom_call.1} parent=11 // pred_region
        _
      $region20: #{tpu_custom_call.1} parent=11 // pred_fallthru
        _
      // Predicated region
      $region21: #{tpu_custom_call.1} parent=11 // pred_check
        %p332 = pneg %p192
      $region22: #{tpu_custom_call.1} parent=11 // pred_check_branch
        %334 = sbr.rel (%p332) target = $region24
      $region23: #{tpu_custom_call.1} parent=11 // pred_region
        _
      $region24: #{tpu_custom_call.1} parent=11 // pred_fallthru
        _
      // Predicated region
      $region25: #{tpu_custom_call.1} parent=11 // pred_check
        %p335 = pneg %p213
      $region26: #{tpu_custom_call.1} parent=11 // pred_check_branch
        %337 = sbr.rel (%p335) target = $region28
      $region27: #{tpu_custom_call.1} parent=11 // pred_region
        _
      $region28: #{tpu_custom_call.1} parent=11 // pred_fallthru
        _
      // Predicated region
      $region29: #{tpu_custom_call.1} parent=11 // pred_check
        %p338 = pneg %p234
      $region30: #{tpu_custom_call.1} parent=11 // pred_check_branch
        %340 = sbr.rel (%p338) target = $region32
      $region31: #{tpu_custom_call.1} parent=11 // pred_region
        _
      $region32: #{tpu_custom_call.1} parent=11 // pred_fallthru
        _
      // Predicated region
      $region33: #{tpu_custom_call.1} parent=11 // pred_check
        %p341 = pneg %p255
      $region34: #{tpu_custom_call.1} parent=11 // pred_check_branch
        %343 = sbr.rel (%p341) target = $region36
      $region35: #{tpu_custom_call.1} parent=11 // pred_region
        _
      $region36: #{tpu_custom_call.1} parent=11 // pred_fallthru
        _
    $region12: #{tpu_custom_call.1} parent=5 // pred_fallthru
      _
    %p344 = scmp.lt.s32.totalorder %s17, 2
    // Predicated region
    $region37: #{tpu_custom_call.1} parent=5 // pred_check
      %p345 = pneg %p344
    $region38: #{tpu_custom_call.1} parent=5 // pred_check_branch
      %347 = sbr.rel (%p345) target = $region40
    $region39: #{tpu_custom_call.1} parent=5 // pred_region
      // Predicated region
      $region41: #{tpu_custom_call.1} parent=39 // pred_check
        %p348 = pneg %p51
      $region42: #{tpu_custom_call.1} parent=39 // pred_check_branch
        %350 = sbr.rel (%p348) target = $region44
      $region43: #{tpu_custom_call.1} parent=39 // pred_region
        %s351 = smul.u32 16, %s25
        %p352 = scmp.lt.s32.totalorder %s24, 1
        %s353 = scalar_select %p352, %s24, 1
        %p354 = scmp.lt.s32.totalorder %s351, 15
        %s355 = scalar_select %p354, %s351, 15
        %s356 = smul.addr %s355, 2
        %s357 = smul.addr %s353, 32
        %s358 = sadd.s32 %s356, %s357
        %s359 = smul.addr %s358, 8
        %s360 = scalar_lea.vmem %s0, %s359
        %s361 = smul.u32 16, %s25
      $region44: #{tpu_custom_call.1} parent=39 // pred_fallthru
        _
      // Predicated region
      $region45: #{tpu_custom_call.1} parent=39 // pred_check
        %p362 = pneg %p87
      $region46: #{tpu_custom_call.1} parent=39 // pred_check_branch
        %364 = sbr.rel (%p362) target = $region48
      $region47: #{tpu_custom_call.1} parent=39 // pred_region
        %s365 = smul.u32 %s25, 8
        %s366 = ssub.s32 %s365, 1
        %p367 = scmp.gt.s32.totalorder %s366, 0
        %s368 = scalar_select %p367, %s366, 0
        %s369 = smul.u32 2, %s368
        %p370 = scmp.lt.s32.totalorder %s24, 1
        %s371 = scalar_select %p370, %s24, 1
        %p372 = scmp.lt.s32.totalorder %s369, 15
        %s373 = scalar_select %p372, %s369, 15
        %s374 = smul.addr %s373, 2
        %s375 = smul.addr %s371, 32
        %s376 = sadd.s32 %s374, %s375
        %s377 = smul.addr %s376, 8
        %s378 = scalar_lea.vmem %s1, %s377
        %s379 = smul.u32 %s25, 8
        %s380 = ssub.s32 %s379, 1
        %p381 = scmp.gt.s32.totalorder %s380, 0
        %s382 = scalar_select %p381, %s380, 0
        %s383 = smul.u32 2, %s382
      $region48: #{tpu_custom_call.1} parent=39 // pred_fallthru
        _
      // Predicated region
      $region49: #{tpu_custom_call.1} parent=39 // pred_check
        %p384 = pneg %p123
      $region50: #{tpu_custom_call.1} parent=39 // pred_check_branch
        %386 = sbr.rel (%p384) target = $region52
      $region51: #{tpu_custom_call.1} parent=39 // pred_region
        %s387 = sadd.s32 %s25, 1
        %s388 = smul.u32 %s387, 8
        %p389 = scmp.lt.s32.totalorder %s388, 7
        %s390 = scalar_select %p389, %s388, 7
        %s391 = smul.u32 2, %s390
        %p392 = scmp.lt.s32.totalorder %s24, 1
        %s393 = scalar_select %p392, %s24, 1
        %p394 = scmp.lt.s32.totalorder %s391, 15
        %s395 = scalar_select %p394, %s391, 15
        %s396 = smul.addr %s395, 2
        %s397 = smul.addr %s393, 32
        %s398 = sadd.s32 %s396, %s397
        %s399 = smul.addr %s398, 8
        %s400 = scalar_lea.vmem %s2, %s399
        %s401 = sadd.s32 %s25, 1
        %s402 = smul.u32 %s401, 8
        %p403 = scmp.lt.s32.totalorder %s402, 7
        %s404 = scalar_select %p403, %s402, 7
        %s405 = smul.u32 2, %s404
      $region52: #{tpu_custom_call.1} parent=39 // pred_fallthru
        _
    $region40: #{tpu_custom_call.1} parent=5 // pred_fallthru
      _
    %p406 = scmp.le.s32.totalorder 1, %s17
    %p407 = scmp.lt.s32.totalorder %s17, 3
    %p408 = pnand %p406, %p407
    %p409 = pneg %p408
    // Predicated region
    $region53: #{tpu_custom_call.1} parent=5 // pred_check
      _
    $region54: #{tpu_custom_call.1} parent=5 // pred_check_branch
      %411 = sbr.rel (%p408) target = $region56
    $region55: #{tpu_custom_call.1} parent=5 // pred_region
      %s412 = ssub.s32 %s17, 1
      %s413 = smul.u32 16, %s27
      %p414 = scmp.lt.s32.totalorder %s26, 1
      %s415 = scalar_select %p414, %s26, 1
      %p416 = scmp.lt.s32.totalorder %s413, 15
      %s417 = scalar_select %p416, %s413, 15
      %s418 = smul.addr %s417, 2
      %s419 = smul.addr %s415, 32
      %s420 = sadd.s32 %s418, %s419
      %s421 = smul.addr %s420, 8
      %s422 = scalar_lea.vmem %s0, %s421
      %p423 = pneg %p57
      %p424 = pneg %p54
      %s425 = smul.u32 %s27, 8
      %s426 = ssub.s32 %s425, 1
      %p427 = scmp.gt.s32.totalorder %s426, 0
      %s428 = scalar_select %p427, %s426, 0
      %s429 = smul.u32 2, %s428
      %p430 = scmp.lt.s32.totalorder %s26, 1
      %s431 = scalar_select %p430, %s26, 1
      %p432 = scmp.lt.s32.totalorder %s429, 15
      %s433 = scalar_select %p432, %s429, 15
      %s434 = smul.addr %s433, 2
      %s435 = smul.addr %s431, 32
      %s436 = sadd.s32 %s434, %s435
      %s437 = smul.addr %s436, 8
      %s438 = scalar_lea.vmem %s1, %s437
      %p439 = pneg %p93
      %p440 = pneg %p90
      %s441 = sadd.s32 %s27, 1
      %s442 = smul.u32 %s441, 8
      %p443 = scmp.lt.s32.totalorder %s442, 7
      %s444 = scalar_select %p443, %s442, 7
      %s445 = smul.u32 2, %s444
      %p446 = scmp.lt.s32.totalorder %s26, 1
      %s447 = scalar_select %p446, %s26, 1
      %p448 = scmp.lt.s32.totalorder %s445, 15
      %s449 = scalar_select %p448, %s445, 15
      %s450 = smul.addr %s449, 2
      %s451 = smul.addr %s447, 32
      %s452 = sadd.s32 %s450, %s451
      %s453 = smul.addr %s452, 8
      %s454 = scalar_lea.vmem %s2, %s453
      %p455 = pneg %p129
      %p456 = pneg %p126
      %p457 = pneg %p150
      %p458 = pneg %p147
      %p459 = pneg %p171
      %p460 = pneg %p168
      %p461 = pneg %p192
      %p462 = pneg %p189
      %p463 = pneg %p213
      %p464 = pneg %p210
      %p465 = pneg %p234
      %p466 = pneg %p231
      %p467 = pneg %p255
      %p468 = pneg %p252
      %p469 = pneg %p283
      %p470 = pneg %p280
      %s471 = smul.u32 16, %s27
      %p472 = scmp.lt.s32.totalorder %s26, 1
      %s473 = scalar_select %p472, %s26, 1
      %p474 = scmp.lt.s32.totalorder %s471, 15
      %s475 = scalar_select %p474, %s471, 15
      %s476 = smul.addr %s475, 2
      %s477 = smul.addr %s473, 32
      %s478 = sadd.s32 %s476, %s477
      %s479 = smul.addr %s478, 8
      %s480 = scalar_lea.vmem %s9, %s479
      %p481 = pneg %p311
      %p482 = pneg %p308
      %s483 = smul.u32 16, %s27
      %p484 = scmp.lt.s32.totalorder %s26, 1
      %s485 = scalar_select %p484, %s26, 1
      %p486 = scmp.lt.s32.totalorder %s483, 15
      %s487 = scalar_select %p486, %s483, 15
      %s488 = smul.addr %s487, 2
      %s489 = smul.addr %s485, 32
      %s490 = sadd.s32 %s488, %s489
      %s491 = smul.addr %s490, 8
      %s492 = scalar_lea.vmem %s10, %s491
      %s493 = smul.u32 16, %s27
      %p494 = scmp.lt.s32.totalorder %s26, 1
      %s495 = scalar_select %p494, %s26, 1
      %p496 = scmp.lt.s32.totalorder %s493, 15
      %s497 = scalar_select %p496, %s493, 15
      %s498 = smul.addr %s497, 2
      %s499 = smul.addr %s495, 32
      %s500 = sadd.s32 %s498, %s499
      %s501 = smul.addr %s500, 8
      %s502 = scalar_lea.vmem %s0, %s501
      %s503 = smul.u32 16, %s27
      %s504 = smul.u32 %s27, 8
      %s505 = ssub.s32 %s504, 1
      %p506 = scmp.gt.s32.totalorder %s505, 0
      %s507 = scalar_select %p506, %s505, 0
      %s508 = smul.u32 2, %s507
      %p509 = scmp.lt.s32.totalorder %s26, 1
      %s510 = scalar_select %p509, %s26, 1
      %p511 = scmp.lt.s32.totalorder %s508, 15
      %s512 = scalar_select %p511, %s508, 15
      %s513 = smul.addr %s512, 2
      %s514 = smul.addr %s510, 32
      %s515 = sadd.s32 %s513, %s514
      %s516 = smul.addr %s515, 8
      %s517 = scalar_lea.vmem %s1, %s516
      %s518 = smul.u32 %s27, 8
      %s519 = ssub.s32 %s518, 1
      %p520 = scmp.gt.s32.totalorder %s519, 0
      %s521 = scalar_select %p520, %s519, 0
      %s522 = smul.u32 2, %s521
      %s523 = sadd.s32 %s27, 1
      %s524 = smul.u32 %s523, 8
      %p525 = scmp.lt.s32.totalorder %s524, 7
      %s526 = scalar_select %p525, %s524, 7
      %s527 = smul.u32 2, %s526
      %p528 = scmp.lt.s32.totalorder %s26, 1
      %s529 = scalar_select %p528, %s26, 1
      %p530 = scmp.lt.s32.totalorder %s527, 15
      %s531 = scalar_select %p530, %s527, 15
      %s532 = smul.addr %s531, 2
      %s533 = smul.addr %s529, 32
      %s534 = sadd.s32 %s532, %s533
      %s535 = smul.addr %s534, 8
      %s536 = scalar_lea.vmem %s2, %s535
      %s537 = sadd.s32 %s27, 1
      %s538 = smul.u32 %s537, 8
      %p539 = scmp.lt.s32.totalorder %s538, 7
      %s540 = scalar_select %p539, %s538, 7
      %s541 = smul.u32 2, %s540
      %s542 = smul.u32 16, %s27
      %p543 = scmp.lt.s32.totalorder %s26, 1
      %s544 = scalar_select %p543, %s26, 1
      %p545 = scmp.lt.s32.totalorder %s542, 15
      %s546 = scalar_select %p545, %s542, 15
      %s547 = smul.addr %s546, 2
      %s548 = smul.addr %s544, 32
      %s549 = sadd.s32 %s547, %s548
      %s550 = smul.addr %s549, 8
      %s551 = scalar_lea.vmem %s9, %s550
      %s552 = smul.u32 16, %s27
      %s553 = smul.u32 16, %s27
      %p554 = scmp.lt.s32.totalorder %s26, 1
      %s555 = scalar_select %p554, %s26, 1
      %p556 = scmp.lt.s32.totalorder %s553, 15
      %s557 = scalar_select %p556, %s553, 15
      %s558 = smul.addr %s557, 2
      %s559 = smul.addr %s555, 32
      %s560 = sadd.s32 %s558, %s559
      %s561 = smul.addr %s560, 8
      %s562 = scalar_lea.vmem %s10, %s561
      %s563 = smul.u32 16, %s27
      %v564 = vld [vmem:[%s3] sm:$0xf]
      %v565 = vld [vmem:[%s4] sm:$0x1]
      %v566 = vld [vmem:[%s5] sm:$0x1]
      %v567 = vld [vmem:[%s6] sm:$0x1f]
      %v568 = vld [vmem:[%s6 + $0x8] sm:$0x1f]
      %v569 = vld [vmem:[%s6 + $0x10] sm:$0x1f]
      %v570 = vld [vmem:[%s6 + $0x18] sm:$0x1f]
      %v571 = vld [vmem:[%s6 + $0x20] sm:$0x1f]
      %v572 = vld [vmem:[%s7] sm:$0x1]
      %v573 = vld [vmem:[%s8] sm:$0x1]
      %vm574 = vcmask 31744
      %575 = vst.msk [vmem:[#allocation2] sm:$0xff] %vm574, 0.0
      %576 = vst.msk [vmem:[#allocation2 + $0x20] sm:$0xff] %vm574, 0.0
      %577 = vst.msk [vmem:[#allocation2 + $0x40] sm:$0xff] %vm574, 0.0
      %578 = vst.msk [vmem:[#allocation2 + $0x60] sm:$0xff] %vm574, 0.0
      %579 = vst.msk [vmem:[#allocation2 + $0x80] sm:$0xff] %vm574, 0.0
      %580 = vst.msk [vmem:[#allocation2 + $0xa0] sm:$0xff] %vm574, 0.0
      %581 = vst.msk [vmem:[#allocation2 + $0xc0] sm:$0xff] %vm574, 0.0
      %582 = vst.msk [vmem:[#allocation2 + $0xe0] sm:$0xff] %vm574, 0.0
      %583 = vst.msk [vmem:[#allocation2 + $0x100] sm:$0xff] %vm574, 0.0
      %584 = vst.msk [vmem:[#allocation2 + $0x120] sm:$0xff] %vm574, 0.0
      %585 = vst.msk [vmem:[#allocation2 + $0x140] sm:$0xff] %vm574, 0.0
      %586 = vst.msk [vmem:[#allocation2 + $0x160] sm:$0xff] %vm574, 0.0
      %587 = vst.msk [vmem:[#allocation2 + $0x180] sm:$0xff] %vm574, 0.0
      %588 = vst.msk [vmem:[#allocation2 + $0x1a0] sm:$0xff] %vm574, 0.0
      %589 = vst.msk [vmem:[#allocation2 + $0x1c0] sm:$0xff] %vm574, 0.0
      %590 = vst.msk [vmem:[#allocation2 + $0x1e0] sm:$0xff] %vm574, 0.0
      %591 = vst.msk [vmem:[#allocation2 + $0x200] sm:$0xff] %vm574, 0.0
      %592 = vst.msk [vmem:[#allocation2 + $0x220] sm:$0xff] %vm574, 0.0
      %593 = vst.msk [vmem:[#allocation2 + $0x240] sm:$0xff] %vm574, 0.0
      %594 = vst.msk [vmem:[#allocation2 + $0x260] sm:$0xff] %vm574, 0.0
      %595 = vst.msk [vmem:[#allocation2 + $0x18] sm:$0xff] %vm574, 0.0
      %596 = vst.msk [vmem:[#allocation2 + $0x38] sm:$0xff] %vm574, 0.0
      %597 = vst.msk [vmem:[#allocation2 + $0x58] sm:$0xff] %vm574, 0.0
      %598 = vst.msk [vmem:[#allocation2 + $0x78] sm:$0xff] %vm574, 0.0
      %599 = vst.msk [vmem:[#allocation2 + $0x98] sm:$0xff] %vm574, 0.0
      %600 = vst.msk [vmem:[#allocation2 + $0xb8] sm:$0xff] %vm574, 0.0
      %601 = vst.msk [vmem:[#allocation2 + $0xd8] sm:$0xff] %vm574, 0.0
      %602 = vst.msk [vmem:[#allocation2 + $0xf8] sm:$0xff] %vm574, 0.0
      %603 = vst.msk [vmem:[#allocation2 + $0x118] sm:$0xff] %vm574, 0.0
      %604 = vst.msk [vmem:[#allocation2 + $0x138] sm:$0xff] %vm574, 0.0
      %605 = vst.msk [vmem:[#allocation2 + $0x158] sm:$0xff] %vm574, 0.0
      %606 = vst.msk [vmem:[#allocation2 + $0x178] sm:$0xff] %vm574, 0.0
      %607 = vst.msk [vmem:[#allocation2 + $0x198] sm:$0xff] %vm574, 0.0
      %608 = vst.msk [vmem:[#allocation2 + $0x1b8] sm:$0xff] %vm574, 0.0
      %609 = vst.msk [vmem:[#allocation2 + $0x1d8] sm:$0xff] %vm574, 0.0
      %610 = vst.msk [vmem:[#allocation2 + $0x1f8] sm:$0xff] %vm574, 0.0
      %611 = vst.msk [vmem:[#allocation2 + $0x218] sm:$0xff] %vm574, 0.0
      %612 = vst.msk [vmem:[#allocation2 + $0x238] sm:$0xff] %vm574, 0.0
      %613 = vst.msk [vmem:[#allocation2 + $0x258] sm:$0xff] %vm574, 0.0
      %614 = vst.msk [vmem:[#allocation2 + $0x278] sm:$0xff] %vm574, 0.0
      %v615 = vld [vmem:[%s502] sm:$0xff]
      %v616 = vld [vmem:[%s502 + $0x8] sm:$0xff]
      %v617 = vld [vmem:[%s502 + $0x10] sm:$0xff]
      %v618 = vld [vmem:[%s502 + $0x18] sm:$0xff]
      %v619 = vld [vmem:[%s502 + $0x20] sm:$0xff]
      %v620 = vld [vmem:[%s502 + $0x28] sm:$0xff]
      %v621 = vld [vmem:[%s502 + $0x30] sm:$0xff]
      %v622 = vld [vmem:[%s502 + $0x38] sm:$0xff]
      %v623 = vld [vmem:[%s502 + $0x40] sm:$0xff]
      %v624 = vld [vmem:[%s502 + $0x48] sm:$0xff]
      %v625 = vld [vmem:[%s502 + $0x50] sm:$0xff]
      %v626 = vld [vmem:[%s502 + $0x58] sm:$0xff]
      %v627 = vld [vmem:[%s502 + $0x60] sm:$0xff]
      %v628 = vld [vmem:[%s502 + $0x68] sm:$0xff]
      %v629 = vld [vmem:[%s502 + $0x70] sm:$0xff]
      %v630 = vld [vmem:[%s502 + $0x78] sm:$0xff]
      %v631 = vld [vmem:[%s502 + $0x80] sm:$0xff]
      %v632 = vld [vmem:[%s502 + $0x88] sm:$0xff]
      %v633 = vld [vmem:[%s502 + $0x90] sm:$0xff]
      %v634 = vld [vmem:[%s502 + $0x98] sm:$0xff]
      %v635 = vld [vmem:[%s502 + $0xa0] sm:$0xff]
      %v636 = vld [vmem:[%s502 + $0xa8] sm:$0xff]
      %v637 = vld [vmem:[%s502 + $0xb0] sm:$0xff]
      %v638 = vld [vmem:[%s502 + $0xb8] sm:$0xff]
      %v639 = vld [vmem:[%s502 + $0xc0] sm:$0xff]
      %v640 = vld [vmem:[%s502 + $0xc8] sm:$0xff]
      %v641 = vld [vmem:[%s502 + $0xd0] sm:$0xff]
      %v642 = vld [vmem:[%s502 + $0xd8] sm:$0xff]
      %v643 = vld [vmem:[%s502 + $0xe0] sm:$0xff]
      %v644 = vld [vmem:[%s502 + $0xe8] sm:$0xff]
      %v645 = vld [vmem:[%s502 + $0xf0] sm:$0xff]
      %v646 = vld [vmem:[%s502 + $0xf8] sm:$0xff]
      %648 = vset.pattern.permute.xlu0 0
      %649 = vperm.xlu0 %648, %v615
      %v650 = vpop.permute.xlu0 %649
      %653 = vset.pattern.permute.xlu0 0
      %654 = vperm.xlu0 %653, %v616
      %v655 = vpop.permute.xlu0 %654
      %658 = vset.pattern.permute.xlu0 0
      %659 = vperm.xlu0 %658, %v617
      %v660 = vpop.permute.xlu0 %659
      %663 = vset.pattern.permute.xlu0 0
      %664 = vperm.xlu0 %663, %v618
      %v665 = vpop.permute.xlu0 %664
      %668 = vset.pattern.permute.xlu0 0
      %669 = vperm.xlu0 %668, %v619
      %v670 = vpop.permute.xlu0 %669
      %673 = vset.pattern.permute.xlu0 0
      %674 = vperm.xlu0 %673, %v620
      %v675 = vpop.permute.xlu0 %674
      %678 = vset.pattern.permute.xlu0 0
      %679 = vperm.xlu0 %678, %v621
      %v680 = vpop.permute.xlu0 %679
      %683 = vset.pattern.permute.xlu0 0
      %684 = vperm.xlu0 %683, %v622
      %v685 = vpop.permute.xlu0 %684
      %688 = vset.pattern.permute.xlu0 0
      %689 = vperm.xlu0 %688, %v623
      %v690 = vpop.permute.xlu0 %689
      %693 = vset.pattern.permute.xlu0 0
      %694 = vperm.xlu0 %693, %v624
      %v695 = vpop.permute.xlu0 %694
      %698 = vset.pattern.permute.xlu0 0
      %699 = vperm.xlu0 %698, %v625
      %v700 = vpop.permute.xlu0 %699
      %703 = vset.pattern.permute.xlu0 0
      %704 = vperm.xlu0 %703, %v626
      %v705 = vpop.permute.xlu0 %704
      %708 = vset.pattern.permute.xlu0 0
      %709 = vperm.xlu0 %708, %v627
      %v710 = vpop.permute.xlu0 %709
      %713 = vset.pattern.permute.xlu0 0
      %714 = vperm.xlu0 %713, %v628
      %v715 = vpop.permute.xlu0 %714
      %718 = vset.pattern.permute.xlu0 0
      %719 = vperm.xlu0 %718, %v629
      %v720 = vpop.permute.xlu0 %719
      %723 = vset.pattern.permute.xlu0 0
      %724 = vperm.xlu0 %723, %v630
      %v725 = vpop.permute.xlu0 %724
      %728 = vset.pattern.permute.xlu0 0
      %729 = vperm.xlu0 %728, %v631
      %v730 = vpop.permute.xlu0 %729
      %733 = vset.pattern.permute.xlu0 0
      %734 = vperm.xlu0 %733, %v632
      %v735 = vpop.permute.xlu0 %734
      %738 = vset.pattern.permute.xlu0 0
      %739 = vperm.xlu0 %738, %v633
      %v740 = vpop.permute.xlu0 %739
      %743 = vset.pattern.permute.xlu0 0
      %744 = vperm.xlu0 %743, %v634
      %v745 = vpop.permute.xlu0 %744
      %748 = vset.pattern.permute.xlu0 0
      %749 = vperm.xlu0 %748, %v635
      %v750 = vpop.permute.xlu0 %749
      %753 = vset.pattern.permute.xlu0 0
      %754 = vperm.xlu0 %753, %v636
      %v755 = vpop.permute.xlu0 %754
      %758 = vset.pattern.permute.xlu0 0
      %759 = vperm.xlu0 %758, %v637
      %v760 = vpop.permute.xlu0 %759
      %763 = vset.pattern.permute.xlu0 0
      %764 = vperm.xlu0 %763, %v638
      %v765 = vpop.permute.xlu0 %764
      %768 = vset.pattern.permute.xlu0 0
      %769 = vperm.xlu0 %768, %v639
      %v770 = vpop.permute.xlu0 %769
      %773 = vset.pattern.permute.xlu0 0
      %774 = vperm.xlu0 %773, %v640
      %v775 = vpop.permute.xlu0 %774
      %778 = vset.pattern.permute.xlu0 0
      %779 = vperm.xlu0 %778, %v641
      %v780 = vpop.permute.xlu0 %779
      %783 = vset.pattern.permute.xlu0 0
      %784 = vperm.xlu0 %783, %v642
      %v785 = vpop.permute.xlu0 %784
      %788 = vset.pattern.permute.xlu0 0
      %789 = vperm.xlu0 %788, %v643
      %v790 = vpop.permute.xlu0 %789
      %793 = vset.pattern.permute.xlu0 0
      %794 = vperm.xlu0 %793, %v644
      %v795 = vpop.permute.xlu0 %794
      %798 = vset.pattern.permute.xlu0 0
      %799 = vperm.xlu0 %798, %v645
      %v800 = vpop.permute.xlu0 %799
      %803 = vset.pattern.permute.xlu0 0
      %804 = vperm.xlu0 %803, %v646
      %v805 = vpop.permute.xlu0 %804
      %v807 = vperm.slane %v564, 0
      %v808 = vmul.f32 %v650, %v807
      %v809 = vmul.f32 %v655, %v807
      %v810 = vmul.f32 %v660, %v807
      %v811 = vmul.f32 %v665, %v807
      %v812 = vmul.f32 %v670, %v807
      %v813 = vmul.f32 %v675, %v807
      %v814 = vmul.f32 %v680, %v807
      %v815 = vmul.f32 %v685, %v807
      %v816 = vmul.f32 %v690, %v807
      %v817 = vmul.f32 %v695, %v807
      %v818 = vmul.f32 %v700, %v807
      %v819 = vmul.f32 %v705, %v807
      %v820 = vmul.f32 %v710, %v807
      %v821 = vmul.f32 %v715, %v807
      %v822 = vmul.f32 %v720, %v807
      %v823 = vmul.f32 %v725, %v807
      %v824 = vmul.f32 %v730, %v807
      %v825 = vmul.f32 %v735, %v807
      %v826 = vmul.f32 %v740, %v807
      %v827 = vmul.f32 %v745, %v807
      %v828 = vmul.f32 %v750, %v807
      %v829 = vmul.f32 %v755, %v807
      %v830 = vmul.f32 %v760, %v807
      %v831 = vmul.f32 %v765, %v807
      %v832 = vmul.f32 %v770, %v807
      %v833 = vmul.f32 %v775, %v807
      %v834 = vmul.f32 %v780, %v807
      %v835 = vmul.f32 %v785, %v807
      %v836 = vmul.f32 %v790, %v807
      %v837 = vmul.f32 %v795, %v807
      %v838 = vmul.f32 %v800, %v807
      %v839 = vmul.f32 %v805, %v807
      %v840 = vadd.f32 %v808, 0.0
      %v841 = vadd.f32 %v809, 0.0
      %v842 = vadd.f32 %v810, 0.0
      %v843 = vadd.f32 %v811, 0.0
      %v844 = vadd.f32 %v812, 0.0
      %v845 = vadd.f32 %v813, 0.0
      %v846 = vadd.f32 %v814, 0.0
      %v847 = vadd.f32 %v815, 0.0
      %v848 = vadd.f32 %v816, 0.0
      %v849 = vadd.f32 %v817, 0.0
      %v850 = vadd.f32 %v818, 0.0
      %v851 = vadd.f32 %v819, 0.0
      %v852 = vadd.f32 %v820, 0.0
      %v853 = vadd.f32 %v821, 0.0
      %v854 = vadd.f32 %v822, 0.0
      %v855 = vadd.f32 %v823, 0.0
      %v856 = vadd.f32 %v824, 0.0
      %v857 = vadd.f32 %v825, 0.0
      %v858 = vadd.f32 %v826, 0.0
      %v859 = vadd.f32 %v827, 0.0
      %v860 = vadd.f32 %v828, 0.0
      %v861 = vadd.f32 %v829, 0.0
      %v862 = vadd.f32 %v830, 0.0
      %v863 = vadd.f32 %v831, 0.0
      %v864 = vadd.f32 %v832, 0.0
      %v865 = vadd.f32 %v833, 0.0
      %v866 = vadd.f32 %v834, 0.0
      %v867 = vadd.f32 %v835, 0.0
      %v868 = vadd.f32 %v836, 0.0
      %v869 = vadd.f32 %v837, 0.0
      %v870 = vadd.f32 %v838, 0.0
      %v871 = vadd.f32 %v839, 0.0
      %872 = vset.pattern.permute.xlu0 1
      %873 = vperm.xlu0 %872, %v615
      %v874 = vpop.permute.xlu0 %873
      %876 = vset.pattern.permute.xlu0 1
      %877 = vperm.xlu0 %876, %v616
      %v878 = vpop.permute.xlu0 %877
      %880 = vset.pattern.permute.xlu0 1
      %881 = vperm.xlu0 %880, %v617
      %v882 = vpop.permute.xlu0 %881
      %884 = vset.pattern.permute.xlu0 1
      %885 = vperm.xlu0 %884, %v618
      %v886 = vpop.permute.xlu0 %885
      %888 = vset.pattern.permute.xlu0 1
      %889 = vperm.xlu0 %888, %v619
      %v890 = vpop.permute.xlu0 %889
      %892 = vset.pattern.permute.xlu0 1
      %893 = vperm.xlu0 %892, %v620
      %v894 = vpop.permute.xlu0 %893
      %896 = vset.pattern.permute.xlu0 1
      %897 = vperm.xlu0 %896, %v621
      %v898 = vpop.permute.xlu0 %897
      %900 = vset.pattern.permute.xlu0 1
      %901 = vperm.xlu0 %900, %v622
      %v902 = vpop.permute.xlu0 %901
      %904 = vset.pattern.permute.xlu0 1
      %905 = vperm.xlu0 %904, %v623
      %v906 = vpop.permute.xlu0 %905
      %908 = vset.pattern.permute.xlu0 1
      %909 = vperm.xlu0 %908, %v624
      %v910 = vpop.permute.xlu0 %909
      %912 = vset.pattern.permute.xlu0 1
      %913 = vperm.xlu0 %912, %v625
      %v914 = vpop.permute.xlu0 %913
      %916 = vset.pattern.permute.xlu0 1
      %917 = vperm.xlu0 %916, %v626
      %v918 = vpop.permute.xlu0 %917
      %920 = vset.pattern.permute.xlu0 1
      %921 = vperm.xlu0 %920, %v627
      %v922 = vpop.permute.xlu0 %921
      %924 = vset.pattern.permute.xlu0 1
      %925 = vperm.xlu0 %924, %v628
      %v926 = vpop.permute.xlu0 %925
      %928 = vset.pattern.permute.xlu0 1
      %929 = vperm.xlu0 %928, %v629
      %v930 = vpop.permute.xlu0 %929
      %932 = vset.pattern.permute.xlu0 1
      %933 = vperm.xlu0 %932, %v630
      %v934 = vpop.permute.xlu0 %933
      %936 = vset.pattern.permute.xlu0 1
      %937 = vperm.xlu0 %936, %v631
      %v938 = vpop.permute.xlu0 %937
      %940 = vset.pattern.permute.xlu0 1
      %941 = vperm.xlu0 %940, %v632
      %v942 = vpop.permute.xlu0 %941
      %944 = vset.pattern.permute.xlu0 1
      %945 = vperm.xlu0 %944, %v633
      %v946 = vpop.permute.xlu0 %945
      %948 = vset.pattern.permute.xlu0 1
      %949 = vperm.xlu0 %948, %v634
      %v950 = vpop.permute.xlu0 %949
      %952 = vset.pattern.permute.xlu0 1
      %953 = vperm.xlu0 %952, %v635
      %v954 = vpop.permute.xlu0 %953
      %956 = vset.pattern.permute.xlu0 1
      %957 = vperm.xlu0 %956, %v636
      %v958 = vpop.permute.xlu0 %957
      %960 = vset.pattern.permute.xlu0 1
      %961 = vperm.xlu0 %960, %v637
      %v962 = vpop.permute.xlu0 %961
      %964 = vset.pattern.permute.xlu0 1
      %965 = vperm.xlu0 %964, %v638
      %v966 = vpop.permute.xlu0 %965
      %968 = vset.pattern.permute.xlu0 1
      %969 = vperm.xlu0 %968, %v639
      %v970 = vpop.permute.xlu0 %969
      %972 = vset.pattern.permute.xlu0 1
      %973 = vperm.xlu0 %972, %v640
      %v974 = vpop.permute.xlu0 %973
      %976 = vset.pattern.permute.xlu0 1
      %977 = vperm.xlu0 %976, %v641
      %v978 = vpop.permute.xlu0 %977
      %980 = vset.pattern.permute.xlu0 1
      %981 = vperm.xlu0 %980, %v642
      %v982 = vpop.permute.xlu0 %981
      %984 = vset.pattern.permute.xlu0 1
      %985 = vperm.xlu0 %984, %v643
      %v986 = vpop.permute.xlu0 %985
      %988 = vset.pattern.permute.xlu0 1
      %989 = vperm.xlu0 %988, %v644
      %v990 = vpop.permute.xlu0 %989
      %992 = vset.pattern.permute.xlu0 1
      %993 = vperm.xlu0 %992, %v645
      %v994 = vpop.permute.xlu0 %993
      %996 = vset.pattern.permute.xlu0 1
      %997 = vperm.xlu0 %996, %v646
      %v998 = vpop.permute.xlu0 %997
      %v1000 = vperm.slane %v564, 1
      %v1001 = vmul.f32 %v874, %v1000
      %v1002 = vmul.f32 %v878, %v1000
      %v1003 = vmul.f32 %v882, %v1000
      %v1004 = vmul.f32 %v886, %v1000
      %v1005 = vmul.f32 %v890, %v1000
      %v1006 = vmul.f32 %v894, %v1000
      %v1007 = vmul.f32 %v898, %v1000
      %v1008 = vmul.f32 %v902, %v1000
      %v1009 = vmul.f32 %v906, %v1000
      %v1010 = vmul.f32 %v910, %v1000
      %v1011 = vmul.f32 %v914, %v1000
      %v1012 = vmul.f32 %v918, %v1000
      %v1013 = vmul.f32 %v922, %v1000
      %v1014 = vmul.f32 %v926, %v1000
      %v1015 = vmul.f32 %v930, %v1000
      %v1016 = vmul.f32 %v934, %v1000
      %v1017 = vmul.f32 %v938, %v1000
      %v1018 = vmul.f32 %v942, %v1000
      %v1019 = vmul.f32 %v946, %v1000
      %v1020 = vmul.f32 %v950, %v1000
      %v1021 = vmul.f32 %v954, %v1000
      %v1022 = vmul.f32 %v958, %v1000
      %v1023 = vmul.f32 %v962, %v1000
      %v1024 = vmul.f32 %v966, %v1000
      %v1025 = vmul.f32 %v970, %v1000
      %v1026 = vmul.f32 %v974, %v1000
      %v1027 = vmul.f32 %v978, %v1000
      %v1028 = vmul.f32 %v982, %v1000
      %v1029 = vmul.f32 %v986, %v1000
      %v1030 = vmul.f32 %v990, %v1000
      %v1031 = vmul.f32 %v994, %v1000
      %v1032 = vmul.f32 %v998, %v1000
      %v1033 = vadd.f32 %v840, %v1001
      %v1034 = vadd.f32 %v841, %v1002
      %v1035 = vadd.f32 %v842, %v1003
      %v1036 = vadd.f32 %v843, %v1004
      %v1037 = vadd.f32 %v844, %v1005
      %v1038 = vadd.f32 %v845, %v1006
      %v1039 = vadd.f32 %v846, %v1007
      %v1040 = vadd.f32 %v847, %v1008
      %v1041 = vadd.f32 %v848, %v1009
      %v1042 = vadd.f32 %v849, %v1010
      %v1043 = vadd.f32 %v850, %v1011
      %v1044 = vadd.f32 %v851, %v1012
      %v1045 = vadd.f32 %v852, %v1013
      %v1046 = vadd.f32 %v853, %v1014
      %v1047 = vadd.f32 %v854, %v1015
      %v1048 = vadd.f32 %v855, %v1016
      %v1049 = vadd.f32 %v856, %v1017
      %v1050 = vadd.f32 %v857, %v1018
      %v1051 = vadd.f32 %v858, %v1019
      %v1052 = vadd.f32 %v859, %v1020
      %v1053 = vadd.f32 %v860, %v1021
      %v1054 = vadd.f32 %v861, %v1022
      %v1055 = vadd.f32 %v862, %v1023
      %v1056 = vadd.f32 %v863, %v1024
      %v1057 = vadd.f32 %v864, %v1025
      %v1058 = vadd.f32 %v865, %v1026
      %v1059 = vadd.f32 %v866, %v1027
      %v1060 = vadd.f32 %v867, %v1028
      %v1061 = vadd.f32 %v868, %v1029
      %v1062 = vadd.f32 %v869, %v1030
      %v1063 = vadd.f32 %v870, %v1031
      %v1064 = vadd.f32 %v871, %v1032
      %1065 = vset.pattern.permute.xlu0 2
      %1066 = vperm.xlu0 %1065, %v615
      %v1067 = vpop.permute.xlu0 %1066
      %1069 = vset.pattern.permute.xlu0 2
      %1070 = vperm.xlu0 %1069, %v616
      %v1071 = vpop.permute.xlu0 %1070
      %1073 = vset.pattern.permute.xlu0 2
      %1074 = vperm.xlu0 %1073, %v617
      %v1075 = vpop.permute.xlu0 %1074
      %1077 = vset.pattern.permute.xlu0 2
      %1078 = vperm.xlu0 %1077, %v618
      %v1079 = vpop.permute.xlu0 %1078
      %1081 = vset.pattern.permute.xlu0 2
      %1082 = vperm.xlu0 %1081, %v619
      %v1083 = vpop.permute.xlu0 %1082
      %1085 = vset.pattern.permute.xlu0 2
      %1086 = vperm.xlu0 %1085, %v620
      %v1087 = vpop.permute.xlu0 %1086
      %1089 = vset.pattern.permute.xlu0 2
      %1090 = vperm.xlu0 %1089, %v621
      %v1091 = vpop.permute.xlu0 %1090
      %1093 = vset.pattern.permute.xlu0 2
      %1094 = vperm.xlu0 %1093, %v622
      %v1095 = vpop.permute.xlu0 %1094
      %1097 = vset.pattern.permute.xlu0 2
      %1098 = vperm.xlu0 %1097, %v623
      %v1099 = vpop.permute.xlu0 %1098
      %1101 = vset.pattern.permute.xlu0 2
      %1102 = vperm.xlu0 %1101, %v624
      %v1103 = vpop.permute.xlu0 %1102
      %1105 = vset.pattern.permute.xlu0 2
      %1106 = vperm.xlu0 %1105, %v625
      %v1107 = vpop.permute.xlu0 %1106
      %1109 = vset.pattern.permute.xlu0 2
      %1110 = vperm.xlu0 %1109, %v626
      %v1111 = vpop.permute.xlu0 %1110
      %1113 = vset.pattern.permute.xlu0 2
      %1114 = vperm.xlu0 %1113, %v627
      %v1115 = vpop.permute.xlu0 %1114
      %1117 = vset.pattern.permute.xlu0 2
      %1118 = vperm.xlu0 %1117, %v628
      %v1119 = vpop.permute.xlu0 %1118
      %1121 = vset.pattern.permute.xlu0 2
      %1122 = vperm.xlu0 %1121, %v629
      %v1123 = vpop.permute.xlu0 %1122
      %1125 = vset.pattern.permute.xlu0 2
      %1126 = vperm.xlu0 %1125, %v630
      %v1127 = vpop.permute.xlu0 %1126
      %1129 = vset.pattern.permute.xlu0 2
      %1130 = vperm.xlu0 %1129, %v631
      %v1131 = vpop.permute.xlu0 %1130
      %1133 = vset.pattern.permute.xlu0 2
      %1134 = vperm.xlu0 %1133, %v632
      %v1135 = vpop.permute.xlu0 %1134
      %1137 = vset.pattern.permute.xlu0 2
      %1138 = vperm.xlu0 %1137, %v633
      %v1139 = vpop.permute.xlu0 %1138
      %1141 = vset.pattern.permute.xlu0 2
      %1142 = vperm.xlu0 %1141, %v634
      %v1143 = vpop.permute.xlu0 %1142
      %1145 = vset.pattern.permute.xlu0 2
      %1146 = vperm.xlu0 %1145, %v635
      %v1147 = vpop.permute.xlu0 %1146
      %1149 = vset.pattern.permute.xlu0 2
      %1150 = vperm.xlu0 %1149, %v636
      %v1151 = vpop.permute.xlu0 %1150
      %1153 = vset.pattern.permute.xlu0 2
      %1154 = vperm.xlu0 %1153, %v637
      %v1155 = vpop.permute.xlu0 %1154
      %1157 = vset.pattern.permute.xlu0 2
      %1158 = vperm.xlu0 %1157, %v638
      %v1159 = vpop.permute.xlu0 %1158
      %1161 = vset.pattern.permute.xlu0 2
      %1162 = vperm.xlu0 %1161, %v639
      %v1163 = vpop.permute.xlu0 %1162
      %1165 = vset.pattern.permute.xlu0 2
      %1166 = vperm.xlu0 %1165, %v640
      %v1167 = vpop.permute.xlu0 %1166
      %1169 = vset.pattern.permute.xlu0 2
      %1170 = vperm.xlu0 %1169, %v641
      %v1171 = vpop.permute.xlu0 %1170
      %1173 = vset.pattern.permute.xlu0 2
      %1174 = vperm.xlu0 %1173, %v642
      %v1175 = vpop.permute.xlu0 %1174
      %1177 = vset.pattern.permute.xlu0 2
      %1178 = vperm.xlu0 %1177, %v643
      %v1179 = vpop.permute.xlu0 %1178
      %1181 = vset.pattern.permute.xlu0 2
      %1182 = vperm.xlu0 %1181, %v644
      %v1183 = vpop.permute.xlu0 %1182
      %1185 = vset.pattern.permute.xlu0 2
      %1186 = vperm.xlu0 %1185, %v645
      %v1187 = vpop.permute.xlu0 %1186
      %1189 = vset.pattern.permute.xlu0 2
      %1190 = vperm.xlu0 %1189, %v646
      %v1191 = vpop.permute.xlu0 %1190
      %v1193 = vperm.slane %v564, 2
      %v1194 = vmul.f32 %v1067, %v1193
      %v1195 = vmul.f32 %v1071, %v1193
      %v1196 = vmul.f32 %v1075, %v1193
      %v1197 = vmul.f32 %v1079, %v1193
      %v1198 = vmul.f32 %v1083, %v1193
      %v1199 = vmul.f32 %v1087, %v1193
      %v1200 = vmul.f32 %v1091, %v1193
      %v1201 = vmul.f32 %v1095, %v1193
      %v1202 = vmul.f32 %v1099, %v1193
      %v1203 = vmul.f32 %v1103, %v1193
      %v1204 = vmul.f32 %v1107, %v1193
      %v1205 = vmul.f32 %v1111, %v1193
      %v1206 = vmul.f32 %v1115, %v1193
      %v1207 = vmul.f32 %v1119, %v1193
      %v1208 = vmul.f32 %v1123, %v1193
      %v1209 = vmul.f32 %v1127, %v1193
      %v1210 = vmul.f32 %v1131, %v1193
      %v1211 = vmul.f32 %v1135, %v1193
      %v1212 = vmul.f32 %v1139, %v1193
      %v1213 = vmul.f32 %v1143, %v1193
      %v1214 = vmul.f32 %v1147, %v1193
      %v1215 = vmul.f32 %v1151, %v1193
      %v1216 = vmul.f32 %v1155, %v1193
      %v1217 = vmul.f32 %v1159, %v1193
      %v1218 = vmul.f32 %v1163, %v1193
      %v1219 = vmul.f32 %v1167, %v1193
      %v1220 = vmul.f32 %v1171, %v1193
      %v1221 = vmul.f32 %v1175, %v1193
      %v1222 = vmul.f32 %v1179, %v1193
      %v1223 = vmul.f32 %v1183, %v1193
      %v1224 = vmul.f32 %v1187, %v1193
      %v1225 = vmul.f32 %v1191, %v1193
      %v1226 = vadd.f32 %v1033, %v1194
      %v1227 = vadd.f32 %v1034, %v1195
      %v1228 = vadd.f32 %v1035, %v1196
      %v1229 = vadd.f32 %v1036, %v1197
      %v1230 = vadd.f32 %v1037, %v1198
      %v1231 = vadd.f32 %v1038, %v1199
      %v1232 = vadd.f32 %v1039, %v1200
      %v1233 = vadd.f32 %v1040, %v1201
      %v1234 = vadd.f32 %v1041, %v1202
      %v1235 = vadd.f32 %v1042, %v1203
      %v1236 = vadd.f32 %v1043, %v1204
      %v1237 = vadd.f32 %v1044, %v1205
      %v1238 = vadd.f32 %v1045, %v1206
      %v1239 = vadd.f32 %v1046, %v1207
      %v1240 = vadd.f32 %v1047, %v1208
      %v1241 = vadd.f32 %v1048, %v1209
      %v1242 = vadd.f32 %v1049, %v1210
      %v1243 = vadd.f32 %v1050, %v1211
      %v1244 = vadd.f32 %v1051, %v1212
      %v1245 = vadd.f32 %v1052, %v1213
      %v1246 = vadd.f32 %v1053, %v1214
      %v1247 = vadd.f32 %v1054, %v1215
      %v1248 = vadd.f32 %v1055, %v1216
      %v1249 = vadd.f32 %v1056, %v1217
      %v1250 = vadd.f32 %v1057, %v1218
      %v1251 = vadd.f32 %v1058, %v1219
      %v1252 = vadd.f32 %v1059, %v1220
      %v1253 = vadd.f32 %v1060, %v1221
      %v1254 = vadd.f32 %v1061, %v1222
      %v1255 = vadd.f32 %v1062, %v1223
      %v1256 = vadd.f32 %v1063, %v1224
      %v1257 = vadd.f32 %v1064, %v1225
      %1258 = vset.pattern.permute.xlu0 3
      %1259 = vperm.xlu0 %1258, %v615
      %v1260 = vpop.permute.xlu0 %1259
      %1262 = vset.pattern.permute.xlu0 3
      %1263 = vperm.xlu0 %1262, %v616
      %v1264 = vpop.permute.xlu0 %1263
      %1266 = vset.pattern.permute.xlu0 3
      %1267 = vperm.xlu0 %1266, %v617
      %v1268 = vpop.permute.xlu0 %1267
      %1270 = vset.pattern.permute.xlu0 3
      %1271 = vperm.xlu0 %1270, %v618
      %v1272 = vpop.permute.xlu0 %1271
      %1274 = vset.pattern.permute.xlu0 3
      %1275 = vperm.xlu0 %1274, %v619
      %v1276 = vpop.permute.xlu0 %1275
      %1278 = vset.pattern.permute.xlu0 3
      %1279 = vperm.xlu0 %1278, %v620
      %v1280 = vpop.permute.xlu0 %1279
      %1282 = vset.pattern.permute.xlu0 3
      %1283 = vperm.xlu0 %1282, %v621
      %v1284 = vpop.permute.xlu0 %1283
      %1286 = vset.pattern.permute.xlu0 3
      %1287 = vperm.xlu0 %1286, %v622
      %v1288 = vpop.permute.xlu0 %1287
      %1290 = vset.pattern.permute.xlu0 3
      %1291 = vperm.xlu0 %1290, %v623
      %v1292 = vpop.permute.xlu0 %1291
      %1294 = vset.pattern.permute.xlu0 3
      %1295 = vperm.xlu0 %1294, %v624
      %v1296 = vpop.permute.xlu0 %1295
      %1298 = vset.pattern.permute.xlu0 3
      %1299 = vperm.xlu0 %1298, %v625
      %v1300 = vpop.permute.xlu0 %1299
      %1302 = vset.pattern.permute.xlu0 3
      %1303 = vperm.xlu0 %1302, %v626
      %v1304 = vpop.permute.xlu0 %1303
      %1306 = vset.pattern.permute.xlu0 3
      %1307 = vperm.xlu0 %1306, %v627
      %v1308 = vpop.permute.xlu0 %1307
      %1310 = vset.pattern.permute.xlu0 3
      %1311 = vperm.xlu0 %1310, %v628
      %v1312 = vpop.permute.xlu0 %1311
      %1314 = vset.pattern.permute.xlu0 3
      %1315 = vperm.xlu0 %1314, %v629
      %v1316 = vpop.permute.xlu0 %1315
      %1318 = vset.pattern.permute.xlu0 3
      %1319 = vperm.xlu0 %1318, %v630
      %v1320 = vpop.permute.xlu0 %1319
      %1322 = vset.pattern.permute.xlu0 3
      %1323 = vperm.xlu0 %1322, %v631
      %v1324 = vpop.permute.xlu0 %1323
      %1326 = vset.pattern.permute.xlu0 3
      %1327 = vperm.xlu0 %1326, %v632
      %v1328 = vpop.permute.xlu0 %1327
      %1330 = vset.pattern.permute.xlu0 3
      %1331 = vperm.xlu0 %1330, %v633
      %v1332 = vpop.permute.xlu0 %1331
      %1334 = vset.pattern.permute.xlu0 3
      %1335 = vperm.xlu0 %1334, %v634
      %v1336 = vpop.permute.xlu0 %1335
      %1338 = vset.pattern.permute.xlu0 3
      %1339 = vperm.xlu0 %1338, %v635
      %v1340 = vpop.permute.xlu0 %1339
      %1342 = vset.pattern.permute.xlu0 3
      %1343 = vperm.xlu0 %1342, %v636
      %v1344 = vpop.permute.xlu0 %1343
      %1346 = vset.pattern.permute.xlu0 3
      %1347 = vperm.xlu0 %1346, %v637
      %v1348 = vpop.permute.xlu0 %1347
      %1350 = vset.pattern.permute.xlu0 3
      %1351 = vperm.xlu0 %1350, %v638
      %v1352 = vpop.permute.xlu0 %1351
      %1354 = vset.pattern.permute.xlu0 3
      %1355 = vperm.xlu0 %1354, %v639
      %v1356 = vpop.permute.xlu0 %1355
      %1358 = vset.pattern.permute.xlu0 3
      %1359 = vperm.xlu0 %1358, %v640
      %v1360 = vpop.permute.xlu0 %1359
      %1362 = vset.pattern.permute.xlu0 3
      %1363 = vperm.xlu0 %1362, %v641
      %v1364 = vpop.permute.xlu0 %1363
      %1366 = vset.pattern.permute.xlu0 3
      %1367 = vperm.xlu0 %1366, %v642
      %v1368 = vpop.permute.xlu0 %1367
      %1370 = vset.pattern.permute.xlu0 3
      %1371 = vperm.xlu0 %1370, %v643
      %v1372 = vpop.permute.xlu0 %1371
      %1374 = vset.pattern.permute.xlu0 3
      %1375 = vperm.xlu0 %1374, %v644
      %v1376 = vpop.permute.xlu0 %1375
      %1378 = vset.pattern.permute.xlu0 3
      %1379 = vperm.xlu0 %1378, %v645
      %v1380 = vpop.permute.xlu0 %1379
      %1382 = vset.pattern.permute.xlu0 3
      %1383 = vperm.xlu0 %1382, %v646
      %v1384 = vpop.permute.xlu0 %1383
      %v1386 = vperm.slane %v564, 3
      %v1387 = vmul.f32 %v1260, %v1386
      %v1388 = vmul.f32 %v1264, %v1386
      %v1389 = vmul.f32 %v1268, %v1386
      %v1390 = vmul.f32 %v1272, %v1386
      %v1391 = vmul.f32 %v1276, %v1386
      %v1392 = vmul.f32 %v1280, %v1386
      %v1393 = vmul.f32 %v1284, %v1386
      %v1394 = vmul.f32 %v1288, %v1386
      %v1395 = vmul.f32 %v1292, %v1386
      %v1396 = vmul.f32 %v1296, %v1386
      %v1397 = vmul.f32 %v1300, %v1386
      %v1398 = vmul.f32 %v1304, %v1386
      %v1399 = vmul.f32 %v1308, %v1386
      %v1400 = vmul.f32 %v1312, %v1386
      %v1401 = vmul.f32 %v1316, %v1386
      %v1402 = vmul.f32 %v1320, %v1386
      %v1403 = vmul.f32 %v1324, %v1386
      %v1404 = vmul.f32 %v1328, %v1386
      %v1405 = vmul.f32 %v1332, %v1386
      %v1406 = vmul.f32 %v1336, %v1386
      %v1407 = vmul.f32 %v1340, %v1386
      %v1408 = vmul.f32 %v1344, %v1386
      %v1409 = vmul.f32 %v1348, %v1386
      %v1410 = vmul.f32 %v1352, %v1386
      %v1411 = vmul.f32 %v1356, %v1386
      %v1412 = vmul.f32 %v1360, %v1386
      %v1413 = vmul.f32 %v1364, %v1386
      %v1414 = vmul.f32 %v1368, %v1386
      %v1415 = vmul.f32 %v1372, %v1386
      %v1416 = vmul.f32 %v1376, %v1386
      %v1417 = vmul.f32 %v1380, %v1386
      %v1418 = vmul.f32 %v1384, %v1386
      %v1419 = vadd.f32 %v1226, %v1387
      %v1420 = vadd.f32 %v1227, %v1388
      %v1421 = vadd.f32 %v1228, %v1389
      %v1422 = vadd.f32 %v1229, %v1390
      %v1423 = vadd.f32 %v1230, %v1391
      %v1424 = vadd.f32 %v1231, %v1392
      %v1425 = vadd.f32 %v1232, %v1393
      %v1426 = vadd.f32 %v1233, %v1394
      %v1427 = vadd.f32 %v1234, %v1395
      %v1428 = vadd.f32 %v1235, %v1396
      %v1429 = vadd.f32 %v1236, %v1397
      %v1430 = vadd.f32 %v1237, %v1398
      %v1431 = vadd.f32 %v1238, %v1399
      %v1432 = vadd.f32 %v1239, %v1400
      %v1433 = vadd.f32 %v1240, %v1401
      %v1434 = vadd.f32 %v1241, %v1402
      %v1435 = vadd.f32 %v1242, %v1403
      %v1436 = vadd.f32 %v1243, %v1404
      %v1437 = vadd.f32 %v1244, %v1405
      %v1438 = vadd.f32 %v1245, %v1406
      %v1439 = vadd.f32 %v1246, %v1407
      %v1440 = vadd.f32 %v1247, %v1408
      %v1441 = vadd.f32 %v1248, %v1409
      %v1442 = vadd.f32 %v1249, %v1410
      %v1443 = vadd.f32 %v1250, %v1411
      %v1444 = vadd.f32 %v1251, %v1412
      %v1445 = vadd.f32 %v1252, %v1413
      %v1446 = vadd.f32 %v1253, %v1414
      %v1447 = vadd.f32 %v1254, %v1415
      %v1448 = vadd.f32 %v1255, %v1416
      %v1449 = vadd.f32 %v1256, %v1417
      %v1450 = vadd.f32 %v1257, %v1418
      %v1452 = vperm.slane %v565, 0
      %v1454 = vmul.f32 %v1419, %v1452
      %v1455 = vmul.f32 %v1420, %v1452
      %v1456 = vmul.f32 %v1421, %v1452
      %v1457 = vmul.f32 %v1422, %v1452
      %v1458 = vmul.f32 %v1423, %v1452
      %v1459 = vmul.f32 %v1424, %v1452
      %v1460 = vmul.f32 %v1425, %v1452
      %v1461 = vmul.f32 %v1426, %v1452
      %v1462 = vmul.f32 %v1427, %v1452
      %v1463 = vmul.f32 %v1428, %v1452
      %v1464 = vmul.f32 %v1429, %v1452
      %v1465 = vmul.f32 %v1430, %v1452
      %v1466 = vmul.f32 %v1431, %v1452
      %v1467 = vmul.f32 %v1432, %v1452
      %v1468 = vmul.f32 %v1433, %v1452
      %v1469 = vmul.f32 %v1434, %v1452
      %v1470 = vmul.f32 %v1435, %v1452
      %v1471 = vmul.f32 %v1436, %v1452
      %v1472 = vmul.f32 %v1437, %v1452
      %v1473 = vmul.f32 %v1438, %v1452
      %v1474 = vmul.f32 %v1439, %v1452
      %v1475 = vmul.f32 %v1440, %v1452
      %v1476 = vmul.f32 %v1441, %v1452
      %v1477 = vmul.f32 %v1442, %v1452
      %v1478 = vmul.f32 %v1443, %v1452
      %v1479 = vmul.f32 %v1444, %v1452
      %v1480 = vmul.f32 %v1445, %v1452
      %v1481 = vmul.f32 %v1446, %v1452
      %v1482 = vmul.f32 %v1447, %v1452
      %v1483 = vmul.f32 %v1448, %v1452
      %v1484 = vmul.f32 %v1449, %v1452
      %v1485 = vmul.f32 %v1450, %v1452
      %v1487 = vperm.slane %v566, 0
      %v1489 = vadd.f32 %v1454, %v1487
      %v1490 = vadd.f32 %v1455, %v1487
      %v1491 = vadd.f32 %v1456, %v1487
      %v1492 = vadd.f32 %v1457, %v1487
      %v1493 = vadd.f32 %v1458, %v1487
      %v1494 = vadd.f32 %v1459, %v1487
      %v1495 = vadd.f32 %v1460, %v1487
      %v1496 = vadd.f32 %v1461, %v1487
      %v1497 = vadd.f32 %v1462, %v1487
      %v1498 = vadd.f32 %v1463, %v1487
      %v1499 = vadd.f32 %v1464, %v1487
      %v1500 = vadd.f32 %v1465, %v1487
      %v1501 = vadd.f32 %v1466, %v1487
      %v1502 = vadd.f32 %v1467, %v1487
      %v1503 = vadd.f32 %v1468, %v1487
      %v1504 = vadd.f32 %v1469, %v1487
      %v1505 = vadd.f32 %v1470, %v1487
      %v1506 = vadd.f32 %v1471, %v1487
      %v1507 = vadd.f32 %v1472, %v1487
      %v1508 = vadd.f32 %v1473, %v1487
      %v1509 = vadd.f32 %v1474, %v1487
      %v1510 = vadd.f32 %v1475, %v1487
      %v1511 = vadd.f32 %v1476, %v1487
      %v1512 = vadd.f32 %v1477, %v1487
      %v1513 = vadd.f32 %v1478, %v1487
      %v1514 = vadd.f32 %v1479, %v1487
      %v1515 = vadd.f32 %v1480, %v1487
      %v1516 = vadd.f32 %v1481, %v1487
      %v1517 = vadd.f32 %v1482, %v1487
      %v1518 = vadd.f32 %v1483, %v1487
      %v1519 = vadd.f32 %v1484, %v1487
      %v1520 = vadd.f32 %v1485, %v1487
      %v1521 = vxor.u32 %v1489, 2147483648
      %v1522 = vxor.u32 %v1490, 2147483648
      %v1523 = vxor.u32 %v1491, 2147483648
      %v1524 = vxor.u32 %v1492, 2147483648
      %v1525 = vxor.u32 %v1493, 2147483648
      %v1526 = vxor.u32 %v1494, 2147483648
      %v1527 = vxor.u32 %v1495, 2147483648
      %v1528 = vxor.u32 %v1496, 2147483648
      %v1529 = vxor.u32 %v1497, 2147483648
      %v1530 = vxor.u32 %v1498, 2147483648
      %v1531 = vxor.u32 %v1499, 2147483648
      %v1532 = vxor.u32 %v1500, 2147483648
      %v1533 = vxor.u32 %v1501, 2147483648
      %v1534 = vxor.u32 %v1502, 2147483648
      %v1535 = vxor.u32 %v1503, 2147483648
      %v1536 = vxor.u32 %v1504, 2147483648
      %v1537 = vxor.u32 %v1505, 2147483648
      %v1538 = vxor.u32 %v1506, 2147483648
      %v1539 = vxor.u32 %v1507, 2147483648
      %v1540 = vxor.u32 %v1508, 2147483648
      %v1541 = vxor.u32 %v1509, 2147483648
      %v1542 = vxor.u32 %v1510, 2147483648
      %v1543 = vxor.u32 %v1511, 2147483648
      %v1544 = vxor.u32 %v1512, 2147483648
      %v1545 = vxor.u32 %v1513, 2147483648
      %v1546 = vxor.u32 %v1514, 2147483648
      %v1547 = vxor.u32 %v1515, 2147483648
      %v1548 = vxor.u32 %v1516, 2147483648
      %v1549 = vxor.u32 %v1517, 2147483648
      %v1550 = vxor.u32 %v1518, 2147483648
      %v1551 = vxor.u32 %v1519, 2147483648
      %v1552 = vxor.u32 %v1520, 2147483648
      %v1553 = vmul.f32 %v1521, 1.442695
      %v1554 = vpow.pop %v1553
      %v1555 = vmul.f32 %v1522, 1.442695
      %v1556 = vpow.pop %v1555
      %v1557 = vmul.f32 %v1523, 1.442695
      %v1558 = vpow.pop %v1557
      %v1559 = vmul.f32 %v1524, 1.442695
      %v1560 = vpow.pop %v1559
      %v1561 = vmul.f32 %v1525, 1.442695
      %v1562 = vpow.pop %v1561
      %v1563 = vmul.f32 %v1526, 1.442695
      %v1564 = vpow.pop %v1563
      %v1565 = vmul.f32 %v1527, 1.442695
      %v1566 = vpow.pop %v1565
      %v1567 = vmul.f32 %v1528, 1.442695
      %v1568 = vpow.pop %v1567
      %v1569 = vmul.f32 %v1529, 1.442695
      %v1570 = vpow.pop %v1569
      %v1571 = vmul.f32 %v1530, 1.442695
      %v1572 = vpow.pop %v1571
      %v1573 = vmul.f32 %v1531, 1.442695
      %v1574 = vpow.pop %v1573
      %v1575 = vmul.f32 %v1532, 1.442695
      %v1576 = vpow.pop %v1575
      %v1577 = vmul.f32 %v1533, 1.442695
      %v1578 = vpow.pop %v1577
      %v1579 = vmul.f32 %v1534, 1.442695
      %v1580 = vpow.pop %v1579
      %v1581 = vmul.f32 %v1535, 1.442695
      %v1582 = vpow.pop %v1581
      %v1583 = vmul.f32 %v1536, 1.442695
      %v1584 = vpow.pop %v1583
      %v1585 = vmul.f32 %v1537, 1.442695
      %v1586 = vpow.pop %v1585
      %v1587 = vmul.f32 %v1538, 1.442695
      %v1588 = vpow.pop %v1587
      %v1589 = vmul.f32 %v1539, 1.442695
      %v1590 = vpow.pop %v1589
      %v1591 = vmul.f32 %v1540, 1.442695
      %v1592 = vpow.pop %v1591
      %v1593 = vmul.f32 %v1541, 1.442695
      %v1594 = vpow.pop %v1593
      %v1595 = vmul.f32 %v1542, 1.442695
      %v1596 = vpow.pop %v1595
      %v1597 = vmul.f32 %v1543, 1.442695
      %v1598 = vpow.pop %v1597
      %v1599 = vmul.f32 %v1544, 1.442695
      %v1600 = vpow.pop %v1599
      %v1601 = vmul.f32 %v1545, 1.442695
      %v1602 = vpow.pop %v1601
      %v1603 = vmul.f32 %v1546, 1.442695
      %v1604 = vpow.pop %v1603
      %v1605 = vmul.f32 %v1547, 1.442695
      %v1606 = vpow.pop %v1605
      %v1607 = vmul.f32 %v1548, 1.442695
      %v1608 = vpow.pop %v1607
      %v1609 = vmul.f32 %v1549, 1.442695
      %v1610 = vpow.pop %v1609
      %v1611 = vmul.f32 %v1550, 1.442695
      %v1612 = vpow.pop %v1611
      %v1613 = vmul.f32 %v1551, 1.442695
      %v1614 = vpow.pop %v1613
      %v1615 = vmul.f32 %v1552, 1.442695
      %v1616 = vpow.pop %v1615
      %v1617 = vadd.f32 %v1554, 1.0
      %v1618 = vadd.f32 %v1556, 1.0
      %v1619 = vadd.f32 %v1558, 1.0
      %v1620 = vadd.f32 %v1560, 1.0
      %v1621 = vadd.f32 %v1562, 1.0
      %v1622 = vadd.f32 %v1564, 1.0
      %v1623 = vadd.f32 %v1566, 1.0
      %v1624 = vadd.f32 %v1568, 1.0
      %v1625 = vadd.f32 %v1570, 1.0
      %v1626 = vadd.f32 %v1572, 1.0
      %v1627 = vadd.f32 %v1574, 1.0
      %v1628 = vadd.f32 %v1576, 1.0
      %v1629 = vadd.f32 %v1578, 1.0
      %v1630 = vadd.f32 %v1580, 1.0
      %v1631 = vadd.f32 %v1582, 1.0
      %v1632 = vadd.f32 %v1584, 1.0
      %v1633 = vadd.f32 %v1586, 1.0
      %v1634 = vadd.f32 %v1588, 1.0
      %v1635 = vadd.f32 %v1590, 1.0
      %v1636 = vadd.f32 %v1592, 1.0
      %v1637 = vadd.f32 %v1594, 1.0
      %v1638 = vadd.f32 %v1596, 1.0
      %v1639 = vadd.f32 %v1598, 1.0
      %v1640 = vadd.f32 %v1600, 1.0
      %v1641 = vadd.f32 %v1602, 1.0
      %v1642 = vadd.f32 %v1604, 1.0
      %v1643 = vadd.f32 %v1606, 1.0
      %v1644 = vadd.f32 %v1608, 1.0
      %v1645 = vadd.f32 %v1610, 1.0
      %v1646 = vadd.f32 %v1612, 1.0
      %v1647 = vadd.f32 %v1614, 1.0
      %v1648 = vadd.f32 %v1616, 1.0
      %v1649 = vrcp.pop %v1617
      %v1650 = vmul.f32 %v1617, %v1649
      %v1651 = vsub.f32 1.0, %v1650
      %v1652 = vmul.f32 %v1649, %v1651
      %v1653 = vadd.f32 %v1649, %v1652
      %vm1654 = vweird.f32 %v1617
      %vm1655 = vweird.f32 %v1649
      %vm1656 = vmor %vm1654, %vm1655
      %v1657 = vsel %vm1656, %v1649, %v1653
      %v1658 = vand.u32 2147483647, %v1617
      %vm1659 = vcmp.eq.f32.partialorder %v1658, 8.507059e+37
      %v1660 = vand.u32 %v1617, 2147483648
      %v1661 = vor.u32 1.1754944e-38, %v1660
      %v1662 = vsel %vm1659, %v1661, %v1657
      %v1663 = vmul.f32 1.0, %v1662
      %v1664 = vrcp.pop %v1618
      %v1665 = vmul.f32 %v1618, %v1664
      %v1666 = vsub.f32 1.0, %v1665
      %v1667 = vmul.f32 %v1664, %v1666
      %v1668 = vadd.f32 %v1664, %v1667
      %vm1669 = vweird.f32 %v1618
      %vm1670 = vweird.f32 %v1664
      %vm1671 = vmor %vm1669, %vm1670
      %v1672 = vsel %vm1671, %v1664, %v1668
      %v1673 = vand.u32 2147483647, %v1618
      %vm1674 = vcmp.eq.f32.partialorder %v1673, 8.507059e+37
      %v1675 = vand.u32 %v1618, 2147483648
      %v1676 = vor.u32 1.1754944e-38, %v1675
      %v1677 = vsel %vm1674, %v1676, %v1672
      %v1678 = vmul.f32 1.0, %v1677
      %v1679 = vrcp.pop %v1619
      %v1680 = vmul.f32 %v1619, %v1679
      %v1681 = vsub.f32 1.0, %v1680
      %v1682 = vmul.f32 %v1679, %v1681
      %v1683 = vadd.f32 %v1679, %v1682
      %vm1684 = vweird.f32 %v1619
      %vm1685 = vweird.f32 %v1679
      %vm1686 = vmor %vm1684, %vm1685
      %v1687 = vsel %vm1686, %v1679, %v1683
      %v1688 = vand.u32 2147483647, %v1619
      %vm1689 = vcmp.eq.f32.partialorder %v1688, 8.507059e+37
      %v1690 = vand.u32 %v1619, 2147483648
      %v1691 = vor.u32 1.1754944e-38, %v1690
      %v1692 = vsel %vm1689, %v1691, %v1687
      %v1693 = vmul.f32 1.0, %v1692
      %v1694 = vrcp.pop %v1620
      %v1695 = vmul.f32 %v1620, %v1694
      %v1696 = vsub.f32 1.0, %v1695
      %v1697 = vmul.f32 %v1694, %v1696
      %v1698 = vadd.f32 %v1694, %v1697
      %vm1699 = vweird.f32 %v1620
      %vm1700 = vweird.f32 %v1694
      %vm1701 = vmor %vm1699, %vm1700
      %v1702 = vsel %vm1701, %v1694, %v1698
      %v1703 = vand.u32 2147483647, %v1620
      %vm1704 = vcmp.eq.f32.partialorder %v1703, 8.507059e+37
      %v1705 = vand.u32 %v1620, 2147483648
      %v1706 = vor.u32 1.1754944e-38, %v1705
      %v1707 = vsel %vm1704, %v1706, %v1702
      %v1708 = vmul.f32 1.0, %v1707
      %v1709 = vrcp.pop %v1621
      %v1710 = vmul.f32 %v1621, %v1709
      %v1711 = vsub.f32 1.0, %v1710
      %v1712 = vmul.f32 %v1709, %v1711
      %v1713 = vadd.f32 %v1709, %v1712
      %vm1714 = vweird.f32 %v1621
      %vm1715 = vweird.f32 %v1709
      %vm1716 = vmor %vm1714, %vm1715
      %v1717 = vsel %vm1716, %v1709, %v1713
      %v1718 = vand.u32 2147483647, %v1621
      %vm1719 = vcmp.eq.f32.partialorder %v1718, 8.507059e+37
      %v1720 = vand.u32 %v1621, 2147483648
      %v1721 = vor.u32 1.1754944e-38, %v1720
      %v1722 = vsel %vm1719, %v1721, %v1717
      %v1723 = vmul.f32 1.0, %v1722
      %v1724 = vrcp.pop %v1622
      %v1725 = vmul.f32 %v1622, %v1724
      %v1726 = vsub.f32 1.0, %v1725
      %v1727 = vmul.f32 %v1724, %v1726
      %v1728 = vadd.f32 %v1724, %v1727
      %vm1729 = vweird.f32 %v1622
      %vm1730 = vweird.f32 %v1724
      %vm1731 = vmor %vm1729, %vm1730
      %v1732 = vsel %vm1731, %v1724, %v1728
      %v1733 = vand.u32 2147483647, %v1622
      %vm1734 = vcmp.eq.f32.partialorder %v1733, 8.507059e+37
      %v1735 = vand.u32 %v1622, 2147483648
      %v1736 = vor.u32 1.1754944e-38, %v1735
      %v1737 = vsel %vm1734, %v1736, %v1732
      %v1738 = vmul.f32 1.0, %v1737
      %v1739 = vrcp.pop %v1623
      %v1740 = vmul.f32 %v1623, %v1739
      %v1741 = vsub.f32 1.0, %v1740
      %v1742 = vmul.f32 %v1739, %v1741
      %v1743 = vadd.f32 %v1739, %v1742
      %vm1744 = vweird.f32 %v1623
      %vm1745 = vweird.f32 %v1739
      %vm1746 = vmor %vm1744, %vm1745
      %v1747 = vsel %vm1746, %v1739, %v1743
      %v1748 = vand.u32 2147483647, %v1623
      %vm1749 = vcmp.eq.f32.partialorder %v1748, 8.507059e+37
      %v1750 = vand.u32 %v1623, 2147483648
      %v1751 = vor.u32 1.1754944e-38, %v1750
      %v1752 = vsel %vm1749, %v1751, %v1747
      %v1753 = vmul.f32 1.0, %v1752
      %v1754 = vrcp.pop %v1624
      %v1755 = vmul.f32 %v1624, %v1754
      %v1756 = vsub.f32 1.0, %v1755
      %v1757 = vmul.f32 %v1754, %v1756
      %v1758 = vadd.f32 %v1754, %v1757
      %vm1759 = vweird.f32 %v1624
      %vm1760 = vweird.f32 %v1754
      %vm1761 = vmor %vm1759, %vm1760
      %v1762 = vsel %vm1761, %v1754, %v1758
      %v1763 = vand.u32 2147483647, %v1624
      %vm1764 = vcmp.eq.f32.partialorder %v1763, 8.507059e+37
      %v1765 = vand.u32 %v1624, 2147483648
      %v1766 = vor.u32 1.1754944e-38, %v1765
      %v1767 = vsel %vm1764, %v1766, %v1762
      %v1768 = vmul.f32 1.0, %v1767
      %v1769 = vrcp.pop %v1625
      %v1770 = vmul.f32 %v1625, %v1769
      %v1771 = vsub.f32 1.0, %v1770
      %v1772 = vmul.f32 %v1769, %v1771
      %v1773 = vadd.f32 %v1769, %v1772
      %vm1774 = vweird.f32 %v1625
      %vm1775 = vweird.f32 %v1769
      %vm1776 = vmor %vm1774, %vm1775
      %v1777 = vsel %vm1776, %v1769, %v1773
      %v1778 = vand.u32 2147483647, %v1625
      %vm1779 = vcmp.eq.f32.partialorder %v1778, 8.507059e+37
      %v1780 = vand.u32 %v1625, 2147483648
      %v1781 = vor.u32 1.1754944e-38, %v1780
      %v1782 = vsel %vm1779, %v1781, %v1777
      %v1783 = vmul.f32 1.0, %v1782
      %v1784 = vrcp.pop %v1626
      %v1785 = vmul.f32 %v1626, %v1784
      %v1786 = vsub.f32 1.0, %v1785
      %v1787 = vmul.f32 %v1784, %v1786
      %v1788 = vadd.f32 %v1784, %v1787
      %vm1789 = vweird.f32 %v1626
      %vm1790 = vweird.f32 %v1784
      %vm1791 = vmor %vm1789, %vm1790
      %v1792 = vsel %vm1791, %v1784, %v1788
      %v1793 = vand.u32 2147483647, %v1626
      %vm1794 = vcmp.eq.f32.partialorder %v1793, 8.507059e+37
      %v1795 = vand.u32 %v1626, 2147483648
      %v1796 = vor.u32 1.1754944e-38, %v1795
      %v1797 = vsel %vm1794, %v1796, %v1792
      %v1798 = vmul.f32 1.0, %v1797
      %v1799 = vrcp.pop %v1627
      %v1800 = vmul.f32 %v1627, %v1799
      %v1801 = vsub.f32 1.0, %v1800
      %v1802 = vmul.f32 %v1799, %v1801
      %v1803 = vadd.f32 %v1799, %v1802
      %vm1804 = vweird.f32 %v1627
      %vm1805 = vweird.f32 %v1799
      %vm1806 = vmor %vm1804, %vm1805
      %v1807 = vsel %vm1806, %v1799, %v1803
      %v1808 = vand.u32 2147483647, %v1627
      %vm1809 = vcmp.eq.f32.partialorder %v1808, 8.507059e+37
      %v1810 = vand.u32 %v1627, 2147483648
      %v1811 = vor.u32 1.1754944e-38, %v1810
      %v1812 = vsel %vm1809, %v1811, %v1807
      %v1813 = vmul.f32 1.0, %v1812
      %v1814 = vrcp.pop %v1628
      %v1815 = vmul.f32 %v1628, %v1814
      %v1816 = vsub.f32 1.0, %v1815
      %v1817 = vmul.f32 %v1814, %v1816
      %v1818 = vadd.f32 %v1814, %v1817
      %vm1819 = vweird.f32 %v1628
      %vm1820 = vweird.f32 %v1814
      %vm1821 = vmor %vm1819, %vm1820
      %v1822 = vsel %vm1821, %v1814, %v1818
      %v1823 = vand.u32 2147483647, %v1628
      %vm1824 = vcmp.eq.f32.partialorder %v1823, 8.507059e+37
      %v1825 = vand.u32 %v1628, 2147483648
      %v1826 = vor.u32 1.1754944e-38, %v1825
      %v1827 = vsel %vm1824, %v1826, %v1822
      %v1828 = vmul.f32 1.0, %v1827
      %v1829 = vrcp.pop %v1629
      %v1830 = vmul.f32 %v1629, %v1829
      %v1831 = vsub.f32 1.0, %v1830
      %v1832 = vmul.f32 %v1829, %v1831
      %v1833 = vadd.f32 %v1829, %v1832
      %vm1834 = vweird.f32 %v1629
      %vm1835 = vweird.f32 %v1829
      %vm1836 = vmor %vm1834, %vm1835
      %v1837 = vsel %vm1836, %v1829, %v1833
      %v1838 = vand.u32 2147483647, %v1629
      %vm1839 = vcmp.eq.f32.partialorder %v1838, 8.507059e+37
      %v1840 = vand.u32 %v1629, 2147483648
      %v1841 = vor.u32 1.1754944e-38, %v1840
      %v1842 = vsel %vm1839, %v1841, %v1837
      %v1843 = vmul.f32 1.0, %v1842
      %v1844 = vrcp.pop %v1630
      %v1845 = vmul.f32 %v1630, %v1844
      %v1846 = vsub.f32 1.0, %v1845
      %v1847 = vmul.f32 %v1844, %v1846
      %v1848 = vadd.f32 %v1844, %v1847
      %vm1849 = vweird.f32 %v1630
      %vm1850 = vweird.f32 %v1844
      %vm1851 = vmor %vm1849, %vm1850
      %v1852 = vsel %vm1851, %v1844, %v1848
      %v1853 = vand.u32 2147483647, %v1630
      %vm1854 = vcmp.eq.f32.partialorder %v1853, 8.507059e+37
      %v1855 = vand.u32 %v1630, 2147483648
      %v1856 = vor.u32 1.1754944e-38, %v1855
      %v1857 = vsel %vm1854, %v1856, %v1852
      %v1858 = vmul.f32 1.0, %v1857
      %v1859 = vrcp.pop %v1631
      %v1860 = vmul.f32 %v1631, %v1859
      %v1861 = vsub.f32 1.0, %v1860
      %v1862 = vmul.f32 %v1859, %v1861
      %v1863 = vadd.f32 %v1859, %v1862
      %vm1864 = vweird.f32 %v1631
      %vm1865 = vweird.f32 %v1859
      %vm1866 = vmor %vm1864, %vm1865
      %v1867 = vsel %vm1866, %v1859, %v1863
      %v1868 = vand.u32 2147483647, %v1631
      %vm1869 = vcmp.eq.f32.partialorder %v1868, 8.507059e+37
      %v1870 = vand.u32 %v1631, 2147483648
      %v1871 = vor.u32 1.1754944e-38, %v1870
      %v1872 = vsel %vm1869, %v1871, %v1867
      %v1873 = vmul.f32 1.0, %v1872
      %v1874 = vrcp.pop %v1632
      %v1875 = vmul.f32 %v1632, %v1874
      %v1876 = vsub.f32 1.0, %v1875
      %v1877 = vmul.f32 %v1874, %v1876
      %v1878 = vadd.f32 %v1874, %v1877
      %vm1879 = vweird.f32 %v1632
      %vm1880 = vweird.f32 %v1874
      %vm1881 = vmor %vm1879, %vm1880
      %v1882 = vsel %vm1881, %v1874, %v1878
      %v1883 = vand.u32 2147483647, %v1632
      %vm1884 = vcmp.eq.f32.partialorder %v1883, 8.507059e+37
      %v1885 = vand.u32 %v1632, 2147483648
      %v1886 = vor.u32 1.1754944e-38, %v1885
      %v1887 = vsel %vm1884, %v1886, %v1882
      %v1888 = vmul.f32 1.0, %v1887
      %v1889 = vrcp.pop %v1633
      %v1890 = vmul.f32 %v1633, %v1889
      %v1891 = vsub.f32 1.0, %v1890
      %v1892 = vmul.f32 %v1889, %v1891
      %v1893 = vadd.f32 %v1889, %v1892
      %vm1894 = vweird.f32 %v1633
      %vm1895 = vweird.f32 %v1889
      %vm1896 = vmor %vm1894, %vm1895
      %v1897 = vsel %vm1896, %v1889, %v1893
      %v1898 = vand.u32 2147483647, %v1633
      %vm1899 = vcmp.eq.f32.partialorder %v1898, 8.507059e+37
      %v1900 = vand.u32 %v1633, 2147483648
      %v1901 = vor.u32 1.1754944e-38, %v1900
      %v1902 = vsel %vm1899, %v1901, %v1897
      %v1903 = vmul.f32 1.0, %v1902
      %v1904 = vrcp.pop %v1634
      %v1905 = vmul.f32 %v1634, %v1904
      %v1906 = vsub.f32 1.0, %v1905
      %v1907 = vmul.f32 %v1904, %v1906
      %v1908 = vadd.f32 %v1904, %v1907
      %vm1909 = vweird.f32 %v1634
      %vm1910 = vweird.f32 %v1904
      %vm1911 = vmor %vm1909, %vm1910
      %v1912 = vsel %vm1911, %v1904, %v1908
      %v1913 = vand.u32 2147483647, %v1634
      %vm1914 = vcmp.eq.f32.partialorder %v1913, 8.507059e+37
      %v1915 = vand.u32 %v1634, 2147483648
      %v1916 = vor.u32 1.1754944e-38, %v1915
      %v1917 = vsel %vm1914, %v1916, %v1912
      %v1918 = vmul.f32 1.0, %v1917
      %v1919 = vrcp.pop %v1635
      %v1920 = vmul.f32 %v1635, %v1919
      %v1921 = vsub.f32 1.0, %v1920
      %v1922 = vmul.f32 %v1919, %v1921
      %v1923 = vadd.f32 %v1919, %v1922
      %vm1924 = vweird.f32 %v1635
      %vm1925 = vweird.f32 %v1919
      %vm1926 = vmor %vm1924, %vm1925
      %v1927 = vsel %vm1926, %v1919, %v1923
      %v1928 = vand.u32 2147483647, %v1635
      %vm1929 = vcmp.eq.f32.partialorder %v1928, 8.507059e+37
      %v1930 = vand.u32 %v1635, 2147483648
      %v1931 = vor.u32 1.1754944e-38, %v1930
      %v1932 = vsel %vm1929, %v1931, %v1927
      %v1933 = vmul.f32 1.0, %v1932
      %v1934 = vrcp.pop %v1636
      %v1935 = vmul.f32 %v1636, %v1934
      %v1936 = vsub.f32 1.0, %v1935
      %v1937 = vmul.f32 %v1934, %v1936
      %v1938 = vadd.f32 %v1934, %v1937
      %vm1939 = vweird.f32 %v1636
      %vm1940 = vweird.f32 %v1934
      %vm1941 = vmor %vm1939, %vm1940
      %v1942 = vsel %vm1941, %v1934, %v1938
      %v1943 = vand.u32 2147483647, %v1636
      %vm1944 = vcmp.eq.f32.partialorder %v1943, 8.507059e+37
      %v1945 = vand.u32 %v1636, 2147483648
      %v1946 = vor.u32 1.1754944e-38, %v1945
      %v1947 = vsel %vm1944, %v1946, %v1942
      %v1948 = vmul.f32 1.0, %v1947
      %v1949 = vrcp.pop %v1637
      %v1950 = vmul.f32 %v1637, %v1949
      %v1951 = vsub.f32 1.0, %v1950
      %v1952 = vmul.f32 %v1949, %v1951
      %v1953 = vadd.f32 %v1949, %v1952
      %vm1954 = vweird.f32 %v1637
      %vm1955 = vweird.f32 %v1949
      %vm1956 = vmor %vm1954, %vm1955
      %v1957 = vsel %vm1956, %v1949, %v1953
      %v1958 = vand.u32 2147483647, %v1637
      %vm1959 = vcmp.eq.f32.partialorder %v1958, 8.507059e+37
      %v1960 = vand.u32 %v1637, 2147483648
      %v1961 = vor.u32 1.1754944e-38, %v1960
      %v1962 = vsel %vm1959, %v1961, %v1957
      %v1963 = vmul.f32 1.0, %v1962
      %v1964 = vrcp.pop %v1638
      %v1965 = vmul.f32 %v1638, %v1964
      %v1966 = vsub.f32 1.0, %v1965
      %v1967 = vmul.f32 %v1964, %v1966
      %v1968 = vadd.f32 %v1964, %v1967
      %vm1969 = vweird.f32 %v1638
      %vm1970 = vweird.f32 %v1964
      %vm1971 = vmor %vm1969, %vm1970
      %v1972 = vsel %vm1971, %v1964, %v1968
      %v1973 = vand.u32 2147483647, %v1638
      %vm1974 = vcmp.eq.f32.partialorder %v1973, 8.507059e+37
      %v1975 = vand.u32 %v1638, 2147483648
      %v1976 = vor.u32 1.1754944e-38, %v1975
      %v1977 = vsel %vm1974, %v1976, %v1972
      %v1978 = vmul.f32 1.0, %v1977
      %v1979 = vrcp.pop %v1639
      %v1980 = vmul.f32 %v1639, %v1979
      %v1981 = vsub.f32 1.0, %v1980
      %v1982 = vmul.f32 %v1979, %v1981
      %v1983 = vadd.f32 %v1979, %v1982
      %vm1984 = vweird.f32 %v1639
      %vm1985 = vweird.f32 %v1979
      %vm1986 = vmor %vm1984, %vm1985
      %v1987 = vsel %vm1986, %v1979, %v1983
      %v1988 = vand.u32 2147483647, %v1639
      %vm1989 = vcmp.eq.f32.partialorder %v1988, 8.507059e+37
      %v1990 = vand.u32 %v1639, 2147483648
      %v1991 = vor.u32 1.1754944e-38, %v1990
      %v1992 = vsel %vm1989, %v1991, %v1987
      %v1993 = vmul.f32 1.0, %v1992
      %v1994 = vrcp.pop %v1640
      %v1995 = vmul.f32 %v1640, %v1994
      %v1996 = vsub.f32 1.0, %v1995
      %v1997 = vmul.f32 %v1994, %v1996
      %v1998 = vadd.f32 %v1994, %v1997
      %vm1999 = vweird.f32 %v1640
      %vm2000 = vweird.f32 %v1994
      %vm2001 = vmor %vm1999, %vm2000
      %v2002 = vsel %vm2001, %v1994, %v1998
      %v2003 = vand.u32 2147483647, %v1640
      %vm2004 = vcmp.eq.f32.partialorder %v2003, 8.507059e+37
      %v2005 = vand.u32 %v1640, 2147483648
      %v2006 = vor.u32 1.1754944e-38, %v2005
      %v2007 = vsel %vm2004, %v2006, %v2002
      %v2008 = vmul.f32 1.0, %v2007
      %v2009 = vrcp.pop %v1641
      %v2010 = vmul.f32 %v1641, %v2009
      %v2011 = vsub.f32 1.0, %v2010
      %v2012 = vmul.f32 %v2009, %v2011
      %v2013 = vadd.f32 %v2009, %v2012
      %vm2014 = vweird.f32 %v1641
      %vm2015 = vweird.f32 %v2009
      %vm2016 = vmor %vm2014, %vm2015
      %v2017 = vsel %vm2016, %v2009, %v2013
      %v2018 = vand.u32 2147483647, %v1641
      %vm2019 = vcmp.eq.f32.partialorder %v2018, 8.507059e+37
      %v2020 = vand.u32 %v1641, 2147483648
      %v2021 = vor.u32 1.1754944e-38, %v2020
      %v2022 = vsel %vm2019, %v2021, %v2017
      %v2023 = vmul.f32 1.0, %v2022
      %v2024 = vrcp.pop %v1642
      %v2025 = vmul.f32 %v1642, %v2024
      %v2026 = vsub.f32 1.0, %v2025
      %v2027 = vmul.f32 %v2024, %v2026
      %v2028 = vadd.f32 %v2024, %v2027
      %vm2029 = vweird.f32 %v1642
      %vm2030 = vweird.f32 %v2024
      %vm2031 = vmor %vm2029, %vm2030
      %v2032 = vsel %vm2031, %v2024, %v2028
      %v2033 = vand.u32 2147483647, %v1642
      %vm2034 = vcmp.eq.f32.partialorder %v2033, 8.507059e+37
      %v2035 = vand.u32 %v1642, 2147483648
      %v2036 = vor.u32 1.1754944e-38, %v2035
      %v2037 = vsel %vm2034, %v2036, %v2032
      %v2038 = vmul.f32 1.0, %v2037
      %v2039 = vrcp.pop %v1643
      %v2040 = vmul.f32 %v1643, %v2039
      %v2041 = vsub.f32 1.0, %v2040
      %v2042 = vmul.f32 %v2039, %v2041
      %v2043 = vadd.f32 %v2039, %v2042
      %vm2044 = vweird.f32 %v1643
      %vm2045 = vweird.f32 %v2039
      %vm2046 = vmor %vm2044, %vm2045
      %v2047 = vsel %vm2046, %v2039, %v2043
      %v2048 = vand.u32 2147483647, %v1643
      %vm2049 = vcmp.eq.f32.partialorder %v2048, 8.507059e+37
      %v2050 = vand.u32 %v1643, 2147483648
      %v2051 = vor.u32 1.1754944e-38, %v2050
      %v2052 = vsel %vm2049, %v2051, %v2047
      %v2053 = vmul.f32 1.0, %v2052
      %v2054 = vrcp.pop %v1644
      %v2055 = vmul.f32 %v1644, %v2054
      %v2056 = vsub.f32 1.0, %v2055
      %v2057 = vmul.f32 %v2054, %v2056
      %v2058 = vadd.f32 %v2054, %v2057
      %vm2059 = vweird.f32 %v1644
      %vm2060 = vweird.f32 %v2054
      %vm2061 = vmor %vm2059, %vm2060
      %v2062 = vsel %vm2061, %v2054, %v2058
      %v2063 = vand.u32 2147483647, %v1644
      %vm2064 = vcmp.eq.f32.partialorder %v2063, 8.507059e+37
      %v2065 = vand.u32 %v1644, 2147483648
      %v2066 = vor.u32 1.1754944e-38, %v2065
      %v2067 = vsel %vm2064, %v2066, %v2062
      %v2068 = vmul.f32 1.0, %v2067
      %v2069 = vrcp.pop %v1645
      %v2070 = vmul.f32 %v1645, %v2069
      %v2071 = vsub.f32 1.0, %v2070
      %v2072 = vmul.f32 %v2069, %v2071
      %v2073 = vadd.f32 %v2069, %v2072
      %vm2074 = vweird.f32 %v1645
      %vm2075 = vweird.f32 %v2069
      %vm2076 = vmor %vm2074, %vm2075
      %v2077 = vsel %vm2076, %v2069, %v2073
      %v2078 = vand.u32 2147483647, %v1645
      %vm2079 = vcmp.eq.f32.partialorder %v2078, 8.507059e+37
      %v2080 = vand.u32 %v1645, 2147483648
      %v2081 = vor.u32 1.1754944e-38, %v2080
      %v2082 = vsel %vm2079, %v2081, %v2077
      %v2083 = vmul.f32 1.0, %v2082
      %v2084 = vrcp.pop %v1646
      %v2085 = vmul.f32 %v1646, %v2084
      %v2086 = vsub.f32 1.0, %v2085
      %v2087 = vmul.f32 %v2084, %v2086
      %v2088 = vadd.f32 %v2084, %v2087
      %vm2089 = vweird.f32 %v1646
      %vm2090 = vweird.f32 %v2084
      %vm2091 = vmor %vm2089, %vm2090
      %v2092 = vsel %vm2091, %v2084, %v2088
      %v2093 = vand.u32 2147483647, %v1646
      %vm2094 = vcmp.eq.f32.partialorder %v2093, 8.507059e+37
      %v2095 = vand.u32 %v1646, 2147483648
      %v2096 = vor.u32 1.1754944e-38, %v2095
      %v2097 = vsel %vm2094, %v2096, %v2092
      %v2098 = vmul.f32 1.0, %v2097
      %v2099 = vrcp.pop %v1647
      %v2100 = vmul.f32 %v1647, %v2099
      %v2101 = vsub.f32 1.0, %v2100
      %v2102 = vmul.f32 %v2099, %v2101
      %v2103 = vadd.f32 %v2099, %v2102
      %vm2104 = vweird.f32 %v1647
      %vm2105 = vweird.f32 %v2099
      %vm2106 = vmor %vm2104, %vm2105
      %v2107 = vsel %vm2106, %v2099, %v2103
      %v2108 = vand.u32 2147483647, %v1647
      %vm2109 = vcmp.eq.f32.partialorder %v2108, 8.507059e+37
      %v2110 = vand.u32 %v1647, 2147483648
      %v2111 = vor.u32 1.1754944e-38, %v2110
      %v2112 = vsel %vm2109, %v2111, %v2107
      %v2113 = vmul.f32 1.0, %v2112
      %v2114 = vrcp.pop %v1648
      %v2115 = vmul.f32 %v1648, %v2114
      %v2116 = vsub.f32 1.0, %v2115
      %v2117 = vmul.f32 %v2114, %v2116
      %v2118 = vadd.f32 %v2114, %v2117
      %vm2119 = vweird.f32 %v1648
      %vm2120 = vweird.f32 %v2114
      %vm2121 = vmor %vm2119, %vm2120
      %v2122 = vsel %vm2121, %v2114, %v2118
      %v2123 = vand.u32 2147483647, %v1648
      %vm2124 = vcmp.eq.f32.partialorder %v2123, 8.507059e+37
      %v2125 = vand.u32 %v1648, 2147483648
      %v2126 = vor.u32 1.1754944e-38, %v2125
      %v2127 = vsel %vm2124, %v2126, %v2122
      %v2128 = vmul.f32 1.0, %v2127
      %v2129 = vmul.f32 %v1489, %v1663
      %v2130 = vmul.f32 %v1490, %v1678
      %v2131 = vmul.f32 %v1491, %v1693
      %v2132 = vmul.f32 %v1492, %v1708
      %v2133 = vmul.f32 %v1493, %v1723
      %v2134 = vmul.f32 %v1494, %v1738
      %v2135 = vmul.f32 %v1495, %v1753
      %v2136 = vmul.f32 %v1496, %v1768
      %v2137 = vmul.f32 %v1497, %v1783
      %v2138 = vmul.f32 %v1498, %v1798
      %v2139 = vmul.f32 %v1499, %v1813
      %v2140 = vmul.f32 %v1500, %v1828
      %v2141 = vmul.f32 %v1501, %v1843
      %v2142 = vmul.f32 %v1502, %v1858
      %v2143 = vmul.f32 %v1503, %v1873
      %v2144 = vmul.f32 %v1504, %v1888
      %v2145 = vmul.f32 %v1505, %v1903
      %v2146 = vmul.f32 %v1506, %v1918
      %v2147 = vmul.f32 %v1507, %v1933
      %v2148 = vmul.f32 %v1508, %v1948
      %v2149 = vmul.f32 %v1509, %v1963
      %v2150 = vmul.f32 %v1510, %v1978
      %v2151 = vmul.f32 %v1511, %v1993
      %v2152 = vmul.f32 %v1512, %v2008
      %v2153 = vmul.f32 %v1513, %v2023
      %v2154 = vmul.f32 %v1514, %v2038
      %v2155 = vmul.f32 %v1515, %v2053
      %v2156 = vmul.f32 %v1516, %v2068
      %v2157 = vmul.f32 %v1517, %v2083
      %v2158 = vmul.f32 %v1518, %v2098
      %v2159 = vmul.f32 %v1519, %v2113
      %v2160 = vmul.f32 %v1520, %v2128
      %s2161 = scalar_lea.vmem [#allocation2], 64
      %2162 = vst.msk [vmem:[%s2161 + $0x8] sm:$0xff] %vm574, %v2129
      %2163 = vst.msk [vmem:[%s2161 + $0x10] sm:$0xff] %vm574, %v2130
      %2164 = vst.msk [vmem:[%s2161 + $0x28] sm:$0xff] %vm574, %v2131
      %2165 = vst.msk [vmem:[%s2161 + $0x30] sm:$0xff] %vm574, %v2132
      %2166 = vst.msk [vmem:[%s2161 + $0x48] sm:$0xff] %vm574, %v2133
      %2167 = vst.msk [vmem:[%s2161 + $0x50] sm:$0xff] %vm574, %v2134
      %2168 = vst.msk [vmem:[%s2161 + $0x68] sm:$0xff] %vm574, %v2135
      %2169 = vst.msk [vmem:[%s2161 + $0x70] sm:$0xff] %vm574, %v2136
      %2170 = vst.msk [vmem:[%s2161 + $0x88] sm:$0xff] %vm574, %v2137
      %2171 = vst.msk [vmem:[%s2161 + $0x90] sm:$0xff] %vm574, %v2138
      %2172 = vst.msk [vmem:[%s2161 + $0xa8] sm:$0xff] %vm574, %v2139
      %2173 = vst.msk [vmem:[%s2161 + $0xb0] sm:$0xff] %vm574, %v2140
      %2174 = vst.msk [vmem:[%s2161 + $0xc8] sm:$0xff] %vm574, %v2141
      %2175 = vst.msk [vmem:[%s2161 + $0xd0] sm:$0xff] %vm574, %v2142
      %2176 = vst.msk [vmem:[%s2161 + $0xe8] sm:$0xff] %vm574, %v2143
      %2177 = vst.msk [vmem:[%s2161 + $0xf0] sm:$0xff] %vm574, %v2144
      %2178 = vst.msk [vmem:[%s2161 + $0x108] sm:$0xff] %vm574, %v2145
      %2179 = vst.msk [vmem:[%s2161 + $0x110] sm:$0xff] %vm574, %v2146
      %2180 = vst.msk [vmem:[%s2161 + $0x128] sm:$0xff] %vm574, %v2147
      %2181 = vst.msk [vmem:[%s2161 + $0x130] sm:$0xff] %vm574, %v2148
      %2182 = vst.msk [vmem:[%s2161 + $0x148] sm:$0xff] %vm574, %v2149
      %2183 = vst.msk [vmem:[%s2161 + $0x150] sm:$0xff] %vm574, %v2150
      %2184 = vst.msk [vmem:[%s2161 + $0x168] sm:$0xff] %vm574, %v2151
      %2185 = vst.msk [vmem:[%s2161 + $0x170] sm:$0xff] %vm574, %v2152
      %2186 = vst.msk [vmem:[%s2161 + $0x188] sm:$0xff] %vm574, %v2153
      %2187 = vst.msk [vmem:[%s2161 + $0x190] sm:$0xff] %vm574, %v2154
      %2188 = vst.msk [vmem:[%s2161 + $0x1a8] sm:$0xff] %vm574, %v2155
      %2189 = vst.msk [vmem:[%s2161 + $0x1b0] sm:$0xff] %vm574, %v2156
      %2190 = vst.msk [vmem:[%s2161 + $0x1c8] sm:$0xff] %vm574, %v2157
      %2191 = vst.msk [vmem:[%s2161 + $0x1d0] sm:$0xff] %vm574, %v2158
      %2192 = vst.msk [vmem:[%s2161 + $0x1e8] sm:$0xff] %vm574, %v2159
      %2193 = vst.msk [vmem:[%s2161 + $0x1f0] sm:$0xff] %vm574, %v2160
      %2194 = vst.msk [vmem:[%s551] sm:$0xff] %vm574, %v2129
      %2195 = vst.msk [vmem:[%s551 + $0x8] sm:$0xff] %vm574, %v2130
      %2196 = vst.msk [vmem:[%s551 + $0x10] sm:$0xff] %vm574, %v2131
      %2197 = vst.msk [vmem:[%s551 + $0x18] sm:$0xff] %vm574, %v2132
      %2198 = vst.msk [vmem:[%s551 + $0x20] sm:$0xff] %vm574, %v2133
      %2199 = vst.msk [vmem:[%s551 + $0x28] sm:$0xff] %vm574, %v2134
      %2200 = vst.msk [vmem:[%s551 + $0x30] sm:$0xff] %vm574, %v2135
      %2201 = vst.msk [vmem:[%s551 + $0x38] sm:$0xff] %vm574, %v2136
      %2202 = vst.msk [vmem:[%s551 + $0x40] sm:$0xff] %vm574, %v2137
      %2203 = vst.msk [vmem:[%s551 + $0x48] sm:$0xff] %vm574, %v2138
      %2204 = vst.msk [vmem:[%s551 + $0x50] sm:$0xff] %vm574, %v2139
      %2205 = vst.msk [vmem:[%s551 + $0x58] sm:$0xff] %vm574, %v2140
      %2206 = vst.msk [vmem:[%s551 + $0x60] sm:$0xff] %vm574, %v2141
      %2207 = vst.msk [vmem:[%s551 + $0x68] sm:$0xff] %vm574, %v2142
      %2208 = vst.msk [vmem:[%s551 + $0x70] sm:$0xff] %vm574, %v2143
      %2209 = vst.msk [vmem:[%s551 + $0x78] sm:$0xff] %vm574, %v2144
      %2210 = vst.msk [vmem:[%s551 + $0x80] sm:$0xff] %vm574, %v2145
      %2211 = vst.msk [vmem:[%s551 + $0x88] sm:$0xff] %vm574, %v2146
      %2212 = vst.msk [vmem:[%s551 + $0x90] sm:$0xff] %vm574, %v2147
      %2213 = vst.msk [vmem:[%s551 + $0x98] sm:$0xff] %vm574, %v2148
      %2214 = vst.msk [vmem:[%s551 + $0xa0] sm:$0xff] %vm574, %v2149
      %2215 = vst.msk [vmem:[%s551 + $0xa8] sm:$0xff] %vm574, %v2150
      %2216 = vst.msk [vmem:[%s551 + $0xb0] sm:$0xff] %vm574, %v2151
      %2217 = vst.msk [vmem:[%s551 + $0xb8] sm:$0xff] %vm574, %v2152
      %2218 = vst.msk [vmem:[%s551 + $0xc0] sm:$0xff] %vm574, %v2153
      %2219 = vst.msk [vmem:[%s551 + $0xc8] sm:$0xff] %vm574, %v2154
      %2220 = vst.msk [vmem:[%s551 + $0xd0] sm:$0xff] %vm574, %v2155
      %2221 = vst.msk [vmem:[%s551 + $0xd8] sm:$0xff] %vm574, %v2156
      %2222 = vst.msk [vmem:[%s551 + $0xe0] sm:$0xff] %vm574, %v2157
      %2223 = vst.msk [vmem:[%s551 + $0xe8] sm:$0xff] %vm574, %v2158
      %2224 = vst.msk [vmem:[%s551 + $0xf0] sm:$0xff] %vm574, %v2159
      %2225 = vst.msk [vmem:[%s551 + $0xf8] sm:$0xff] %vm574, %v2160
      %p2226 = scmp.gt.s32.totalorder %s27, 0
      // Predicated region
      $region57: #{tpu_custom_call.1} parent=55 // pred_check
        %p2227 = pneg %p2226
      $region58: #{tpu_custom_call.1} parent=55 // pred_check_branch
        %2229 = sbr.rel (%p2227) target = $region60
      $region59: #{tpu_custom_call.1} parent=55 // pred_region
        %v2230 = vld [vmem:[%s517] sm:$0xff]
        %v2231 = vld [vmem:[%s517 + $0x8] sm:$0xff]
        %v2232 = vld [vmem:[%s517 + $0x10] sm:$0xff]
        %v2233 = vld [vmem:[%s517 + $0x18] sm:$0xff]
        %2235 = vset.pattern.permute.xlu0 0
        %2236 = vperm.xlu0 %2235, %v2230
        %v2237 = vpop.permute.xlu0 %2236
        %2240 = vset.pattern.permute.xlu0 0
        %2241 = vperm.xlu0 %2240, %v2231
        %v2242 = vpop.permute.xlu0 %2241
        %2245 = vset.pattern.permute.xlu0 0
        %2246 = vperm.xlu0 %2245, %v2232
        %v2247 = vpop.permute.xlu0 %2246
        %2250 = vset.pattern.permute.xlu0 0
        %2251 = vperm.xlu0 %2250, %v2233
        %v2252 = vpop.permute.xlu0 %2251
        %v2254 = vmul.f32 %v2237, %v807
        %v2255 = vmul.f32 %v2242, %v807
        %v2256 = vmul.f32 %v2247, %v807
        %v2257 = vmul.f32 %v2252, %v807
        %v2258 = vadd.f32 %v2254, 0.0
        %v2259 = vadd.f32 %v2255, 0.0
        %v2260 = vadd.f32 %v2256, 0.0
        %v2261 = vadd.f32 %v2257, 0.0
        %2262 = vset.pattern.permute.xlu0 1
        %2263 = vperm.xlu0 %2262, %v2230
        %v2264 = vpop.permute.xlu0 %2263
        %2266 = vset.pattern.permute.xlu0 1
        %2267 = vperm.xlu0 %2266, %v2231
        %v2268 = vpop.permute.xlu0 %2267
        %2270 = vset.pattern.permute.xlu0 1
        %2271 = vperm.xlu0 %2270, %v2232
        %v2272 = vpop.permute.xlu0 %2271
        %2274 = vset.pattern.permute.xlu0 1
        %2275 = vperm.xlu0 %2274, %v2233
        %v2276 = vpop.permute.xlu0 %2275
        %v2278 = vmul.f32 %v2264, %v1000
        %v2279 = vmul.f32 %v2268, %v1000
        %v2280 = vmul.f32 %v2272, %v1000
        %v2281 = vmul.f32 %v2276, %v1000
        %v2282 = vadd.f32 %v2258, %v2278
        %v2283 = vadd.f32 %v2259, %v2279
        %v2284 = vadd.f32 %v2260, %v2280
        %v2285 = vadd.f32 %v2261, %v2281
        %2286 = vset.pattern.permute.xlu0 2
        %2287 = vperm.xlu0 %2286, %v2230
        %v2288 = vpop.permute.xlu0 %2287
        %2290 = vset.pattern.permute.xlu0 2
        %2291 = vperm.xlu0 %2290, %v2231
        %v2292 = vpop.permute.xlu0 %2291
        %2294 = vset.pattern.permute.xlu0 2
        %2295 = vperm.xlu0 %2294, %v2232
        %v2296 = vpop.permute.xlu0 %2295
        %2298 = vset.pattern.permute.xlu0 2
        %2299 = vperm.xlu0 %2298, %v2233
        %v2300 = vpop.permute.xlu0 %2299
        %v2302 = vmul.f32 %v2288, %v1193
        %v2303 = vmul.f32 %v2292, %v1193
        %v2304 = vmul.f32 %v2296, %v1193
        %v2305 = vmul.f32 %v2300, %v1193
        %v2306 = vadd.f32 %v2282, %v2302
        %v2307 = vadd.f32 %v2283, %v2303
        %v2308 = vadd.f32 %v2284, %v2304
        %v2309 = vadd.f32 %v2285, %v2305
        %2310 = vset.pattern.permute.xlu0 3
        %2311 = vperm.xlu0 %2310, %v2230
        %v2312 = vpop.permute.xlu0 %2311
        %2314 = vset.pattern.permute.xlu0 3
        %2315 = vperm.xlu0 %2314, %v2231
        %v2316 = vpop.permute.xlu0 %2315
        %2318 = vset.pattern.permute.xlu0 3
        %2319 = vperm.xlu0 %2318, %v2232
        %v2320 = vpop.permute.xlu0 %2319
        %2322 = vset.pattern.permute.xlu0 3
        %2323 = vperm.xlu0 %2322, %v2233
        %v2324 = vpop.permute.xlu0 %2323
        %v2326 = vmul.f32 %v2312, %v1386
        %v2327 = vmul.f32 %v2316, %v1386
        %v2328 = vmul.f32 %v2320, %v1386
        %v2329 = vmul.f32 %v2324, %v1386
        %v2330 = vadd.f32 %v2306, %v2326
        %v2331 = vadd.f32 %v2307, %v2327
        %v2332 = vadd.f32 %v2308, %v2328
        %v2333 = vadd.f32 %v2309, %v2329
        %v2334 = vmul.f32 %v2330, %v1452
        %v2335 = vmul.f32 %v2331, %v1452
        %v2336 = vmul.f32 %v2332, %v1452
        %v2337 = vmul.f32 %v2333, %v1452
        %v2338 = vadd.f32 %v2334, %v1487
        %v2339 = vadd.f32 %v2335, %v1487
        %v2340 = vadd.f32 %v2336, %v1487
        %v2341 = vadd.f32 %v2337, %v1487
        %v2342 = vxor.u32 %v2338, 2147483648
        %v2343 = vxor.u32 %v2339, 2147483648
        %v2344 = vxor.u32 %v2340, 2147483648
        %v2345 = vxor.u32 %v2341, 2147483648
        %v2346 = vmul.f32 %v2342, 1.442695
        %v2347 = vpow.pop %v2346
        %v2348 = vmul.f32 %v2343, 1.442695
        %v2349 = vpow.pop %v2348
        %v2350 = vmul.f32 %v2344, 1.442695
        %v2351 = vpow.pop %v2350
        %v2352 = vmul.f32 %v2345, 1.442695
        %v2353 = vpow.pop %v2352
        %v2354 = vadd.f32 %v2347, 1.0
        %v2355 = vadd.f32 %v2349, 1.0
        %v2356 = vadd.f32 %v2351, 1.0
        %v2357 = vadd.f32 %v2353, 1.0
        %v2358 = vrcp.pop %v2354
        %v2359 = vmul.f32 %v2354, %v2358
        %v2360 = vsub.f32 1.0, %v2359
        %v2361 = vmul.f32 %v2358, %v2360
        %v2362 = vadd.f32 %v2358, %v2361
        %vm2363 = vweird.f32 %v2354
        %vm2364 = vweird.f32 %v2358
        %vm2365 = vmor %vm2363, %vm2364
        %v2366 = vsel %vm2365, %v2358, %v2362
        %v2367 = vand.u32 2147483647, %v2354
        %vm2368 = vcmp.eq.f32.partialorder %v2367, 8.507059e+37
        %v2369 = vand.u32 %v2354, 2147483648
        %v2370 = vor.u32 1.1754944e-38, %v2369
        %v2371 = vsel %vm2368, %v2370, %v2366
        %v2372 = vmul.f32 1.0, %v2371
        %v2373 = vrcp.pop %v2355
        %v2374 = vmul.f32 %v2355, %v2373
        %v2375 = vsub.f32 1.0, %v2374
        %v2376 = vmul.f32 %v2373, %v2375
        %v2377 = vadd.f32 %v2373, %v2376
        %vm2378 = vweird.f32 %v2355
        %vm2379 = vweird.f32 %v2373
        %vm2380 = vmor %vm2378, %vm2379
        %v2381 = vsel %vm2380, %v2373, %v2377
        %v2382 = vand.u32 2147483647, %v2355
        %vm2383 = vcmp.eq.f32.partialorder %v2382, 8.507059e+37
        %v2384 = vand.u32 %v2355, 2147483648
        %v2385 = vor.u32 1.1754944e-38, %v2384
        %v2386 = vsel %vm2383, %v2385, %v2381
        %v2387 = vmul.f32 1.0, %v2386
        %v2388 = vrcp.pop %v2356
        %v2389 = vmul.f32 %v2356, %v2388
        %v2390 = vsub.f32 1.0, %v2389
        %v2391 = vmul.f32 %v2388, %v2390
        %v2392 = vadd.f32 %v2388, %v2391
        %vm2393 = vweird.f32 %v2356
        %vm2394 = vweird.f32 %v2388
        %vm2395 = vmor %vm2393, %vm2394
        %v2396 = vsel %vm2395, %v2388, %v2392
        %v2397 = vand.u32 2147483647, %v2356
        %vm2398 = vcmp.eq.f32.partialorder %v2397, 8.507059e+37
        %v2399 = vand.u32 %v2356, 2147483648
        %v2400 = vor.u32 1.1754944e-38, %v2399
        %v2401 = vsel %vm2398, %v2400, %v2396
        %v2402 = vmul.f32 1.0, %v2401
        %v2403 = vrcp.pop %v2357
        %v2404 = vmul.f32 %v2357, %v2403
        %v2405 = vsub.f32 1.0, %v2404
        %v2406 = vmul.f32 %v2403, %v2405
        %v2407 = vadd.f32 %v2403, %v2406
        %vm2408 = vweird.f32 %v2357
        %vm2409 = vweird.f32 %v2403
        %vm2410 = vmor %vm2408, %vm2409
        %v2411 = vsel %vm2410, %v2403, %v2407
        %v2412 = vand.u32 2147483647, %v2357
        %vm2413 = vcmp.eq.f32.partialorder %v2412, 8.507059e+37
        %v2414 = vand.u32 %v2357, 2147483648
        %v2415 = vor.u32 1.1754944e-38, %v2414
        %v2416 = vsel %vm2413, %v2415, %v2411
        %v2417 = vmul.f32 1.0, %v2416
        %v2418 = vmul.f32 %v2338, %v2372
        %v2419 = vmul.f32 %v2339, %v2387
        %v2420 = vmul.f32 %v2340, %v2402
        %v2421 = vmul.f32 %v2341, %v2417
        %2422 = vst.msk [vmem:[#allocation2 + $0x8] sm:$0xff] %vm574, %v2418
        %2423 = vst.msk [vmem:[#allocation2 + $0x10] sm:$0xff] %vm574, %v2419
        %2424 = vst.msk [vmem:[#allocation2 + $0x28] sm:$0xff] %vm574, %v2420
        %2425 = vst.msk [vmem:[#allocation2 + $0x30] sm:$0xff] %vm574, %v2421
      $region60: #{tpu_custom_call.1} parent=55 // pred_fallthru
        _
      %p2426 = scmp.eq.s32.totalorder %s27, 0
      // Predicated region
      $region61: #{tpu_custom_call.1} parent=55 // pred_check
        %p2427 = pneg %p2426
      $region62: #{tpu_custom_call.1} parent=55 // pred_check_branch
        %2429 = sbr.rel (%p2427) target = $region64
      $region63: #{tpu_custom_call.1} parent=55 // pred_region
        %2430 = vst.msk [vmem:[#allocation2 + $0x8] sm:$0xff] %vm574, 0.0
        %2431 = vst.msk [vmem:[#allocation2 + $0x10] sm:$0xff] %vm574, 0.0
        %2432 = vst.msk [vmem:[#allocation2 + $0x28] sm:$0xff] %vm574, 0.0
        %2433 = vst.msk [vmem:[#allocation2 + $0x30] sm:$0xff] %vm574, 0.0
      $region64: #{tpu_custom_call.1} parent=55 // pred_fallthru
        _
      %p2434 = scmp.lt.s32.totalorder %s27, 0
      // Predicated region
      $region65: #{tpu_custom_call.1} parent=55 // pred_check
        %p2435 = pneg %p2434
      $region66: #{tpu_custom_call.1} parent=55 // pred_check_branch
        %2437 = sbr.rel (%p2435) target = $region68
      $region67: #{tpu_custom_call.1} parent=55 // pred_region
        %v2438 = vld [vmem:[%s536] sm:$0xff]
        %v2439 = vld [vmem:[%s536 + $0x8] sm:$0xff]
        %v2440 = vld [vmem:[%s536 + $0x10] sm:$0xff]
        %v2441 = vld [vmem:[%s536 + $0x18] sm:$0xff]
        %2443 = vset.pattern.permute.xlu0 0
        %2444 = vperm.xlu0 %2443, %v2438
        %v2445 = vpop.permute.xlu0 %2444
        %2448 = vset.pattern.permute.xlu0 0
        %2449 = vperm.xlu0 %2448, %v2439
        %v2450 = vpop.permute.xlu0 %2449
        %2453 = vset.pattern.permute.xlu0 0
        %2454 = vperm.xlu0 %2453, %v2440
        %v2455 = vpop.permute.xlu0 %2454
        %2458 = vset.pattern.permute.xlu0 0
        %2459 = vperm.xlu0 %2458, %v2441
        %v2460 = vpop.permute.xlu0 %2459
        %v2462 = vmul.f32 %v2445, %v807
        %v2463 = vmul.f32 %v2450, %v807
        %v2464 = vmul.f32 %v2455, %v807
        %v2465 = vmul.f32 %v2460, %v807
        %v2466 = vadd.f32 %v2462, 0.0
        %v2467 = vadd.f32 %v2463, 0.0
        %v2468 = vadd.f32 %v2464, 0.0
        %v2469 = vadd.f32 %v2465, 0.0
        %2470 = vset.pattern.permute.xlu0 1
        %2471 = vperm.xlu0 %2470, %v2438
        %v2472 = vpop.permute.xlu0 %2471
        %2474 = vset.pattern.permute.xlu0 1
        %2475 = vperm.xlu0 %2474, %v2439
        %v2476 = vpop.permute.xlu0 %2475
        %2478 = vset.pattern.permute.xlu0 1
        %2479 = vperm.xlu0 %2478, %v2440
        %v2480 = vpop.permute.xlu0 %2479
        %2482 = vset.pattern.permute.xlu0 1
        %2483 = vperm.xlu0 %2482, %v2441
        %v2484 = vpop.permute.xlu0 %2483
        %v2486 = vmul.f32 %v2472, %v1000
        %v2487 = vmul.f32 %v2476, %v1000
        %v2488 = vmul.f32 %v2480, %v1000
        %v2489 = vmul.f32 %v2484, %v1000
        %v2490 = vadd.f32 %v2466, %v2486
        %v2491 = vadd.f32 %v2467, %v2487
        %v2492 = vadd.f32 %v2468, %v2488
        %v2493 = vadd.f32 %v2469, %v2489
        %2494 = vset.pattern.permute.xlu0 2
        %2495 = vperm.xlu0 %2494, %v2438
        %v2496 = vpop.permute.xlu0 %2495
        %2498 = vset.pattern.permute.xlu0 2
        %2499 = vperm.xlu0 %2498, %v2439
        %v2500 = vpop.permute.xlu0 %2499
        %2502 = vset.pattern.permute.xlu0 2
        %2503 = vperm.xlu0 %2502, %v2440
        %v2504 = vpop.permute.xlu0 %2503
        %2506 = vset.pattern.permute.xlu0 2
        %2507 = vperm.xlu0 %2506, %v2441
        %v2508 = vpop.permute.xlu0 %2507
        %v2510 = vmul.f32 %v2496, %v1193
        %v2511 = vmul.f32 %v2500, %v1193
        %v2512 = vmul.f32 %v2504, %v1193
        %v2513 = vmul.f32 %v2508, %v1193
        %v2514 = vadd.f32 %v2490, %v2510
        %v2515 = vadd.f32 %v2491, %v2511
        %v2516 = vadd.f32 %v2492, %v2512
        %v2517 = vadd.f32 %v2493, %v2513
        %2518 = vset.pattern.permute.xlu0 3
        %2519 = vperm.xlu0 %2518, %v2438
        %v2520 = vpop.permute.xlu0 %2519
        %2522 = vset.pattern.permute.xlu0 3
        %2523 = vperm.xlu0 %2522, %v2439
        %v2524 = vpop.permute.xlu0 %2523
        %2526 = vset.pattern.permute.xlu0 3
        %2527 = vperm.xlu0 %2526, %v2440
        %v2528 = vpop.permute.xlu0 %2527
        %2530 = vset.pattern.permute.xlu0 3
        %2531 = vperm.xlu0 %2530, %v2441
        %v2532 = vpop.permute.xlu0 %2531
        %v2534 = vmul.f32 %v2520, %v1386
        %v2535 = vmul.f32 %v2524, %v1386
        %v2536 = vmul.f32 %v2528, %v1386
        %v2537 = vmul.f32 %v2532, %v1386
        %v2538 = vadd.f32 %v2514, %v2534
        %v2539 = vadd.f32 %v2515, %v2535
        %v2540 = vadd.f32 %v2516, %v2536
        %v2541 = vadd.f32 %v2517, %v2537
        %v2542 = vmul.f32 %v2538, %v1452
        %v2543 = vmul.f32 %v2539, %v1452
        %v2544 = vmul.f32 %v2540, %v1452
        %v2545 = vmul.f32 %v2541, %v1452
        %v2546 = vadd.f32 %v2542, %v1487
        %v2547 = vadd.f32 %v2543, %v1487
        %v2548 = vadd.f32 %v2544, %v1487
        %v2549 = vadd.f32 %v2545, %v1487
        %v2550 = vxor.u32 %v2546, 2147483648
        %v2551 = vxor.u32 %v2547, 2147483648
        %v2552 = vxor.u32 %v2548, 2147483648
        %v2553 = vxor.u32 %v2549, 2147483648
        %v2554 = vmul.f32 %v2550, 1.442695
        %v2555 = vpow.pop %v2554
        %v2556 = vmul.f32 %v2551, 1.442695
        %v2557 = vpow.pop %v2556
        %v2558 = vmul.f32 %v2552, 1.442695
        %v2559 = vpow.pop %v2558
        %v2560 = vmul.f32 %v2553, 1.442695
        %v2561 = vpow.pop %v2560
        %v2562 = vadd.f32 %v2555, 1.0
        %v2563 = vadd.f32 %v2557, 1.0
        %v2564 = vadd.f32 %v2559, 1.0
        %v2565 = vadd.f32 %v2561, 1.0
        %v2566 = vrcp.pop %v2562
        %v2567 = vmul.f32 %v2562, %v2566
        %v2568 = vsub.f32 1.0, %v2567
        %v2569 = vmul.f32 %v2566, %v2568
        %v2570 = vadd.f32 %v2566, %v2569
        %vm2571 = vweird.f32 %v2562
        %vm2572 = vweird.f32 %v2566
        %vm2573 = vmor %vm2571, %vm2572
        %v2574 = vsel %vm2573, %v2566, %v2570
        %v2575 = vand.u32 2147483647, %v2562
        %vm2576 = vcmp.eq.f32.partialorder %v2575, 8.507059e+37
        %v2577 = vand.u32 %v2562, 2147483648
        %v2578 = vor.u32 1.1754944e-38, %v2577
        %v2579 = vsel %vm2576, %v2578, %v2574
        %v2580 = vmul.f32 1.0, %v2579
        %v2581 = vrcp.pop %v2563
        %v2582 = vmul.f32 %v2563, %v2581
        %v2583 = vsub.f32 1.0, %v2582
        %v2584 = vmul.f32 %v2581, %v2583
        %v2585 = vadd.f32 %v2581, %v2584
        %vm2586 = vweird.f32 %v2563
        %vm2587 = vweird.f32 %v2581
        %vm2588 = vmor %vm2586, %vm2587
        %v2589 = vsel %vm2588, %v2581, %v2585
        %v2590 = vand.u32 2147483647, %v2563
        %vm2591 = vcmp.eq.f32.partialorder %v2590, 8.507059e+37
        %v2592 = vand.u32 %v2563, 2147483648
        %v2593 = vor.u32 1.1754944e-38, %v2592
        %v2594 = vsel %vm2591, %v2593, %v2589
        %v2595 = vmul.f32 1.0, %v2594
        %v2596 = vrcp.pop %v2564
        %v2597 = vmul.f32 %v2564, %v2596
        %v2598 = vsub.f32 1.0, %v2597
        %v2599 = vmul.f32 %v2596, %v2598
        %v2600 = vadd.f32 %v2596, %v2599
        %vm2601 = vweird.f32 %v2564
        %vm2602 = vweird.f32 %v2596
        %vm2603 = vmor %vm2601, %vm2602
        %v2604 = vsel %vm2603, %v2596, %v2600
        %v2605 = vand.u32 2147483647, %v2564
        %vm2606 = vcmp.eq.f32.partialorder %v2605, 8.507059e+37
        %v2607 = vand.u32 %v2564, 2147483648
        %v2608 = vor.u32 1.1754944e-38, %v2607
        %v2609 = vsel %vm2606, %v2608, %v2604
        %v2610 = vmul.f32 1.0, %v2609
        %v2611 = vrcp.pop %v2565
        %v2612 = vmul.f32 %v2565, %v2611
        %v2613 = vsub.f32 1.0, %v2612
        %v2614 = vmul.f32 %v2611, %v2613
        %v2615 = vadd.f32 %v2611, %v2614
        %vm2616 = vweird.f32 %v2565
        %vm2617 = vweird.f32 %v2611
        %vm2618 = vmor %vm2616, %vm2617
        %v2619 = vsel %vm2618, %v2611, %v2615
        %v2620 = vand.u32 2147483647, %v2565
        %vm2621 = vcmp.eq.f32.partialorder %v2620, 8.507059e+37
        %v2622 = vand.u32 %v2565, 2147483648
        %v2623 = vor.u32 1.1754944e-38, %v2622
        %v2624 = vsel %vm2621, %v2623, %v2619
        %v2625 = vmul.f32 1.0, %v2624
        %v2626 = vmul.f32 %v2546, %v2580
        %v2627 = vmul.f32 %v2547, %v2595
        %v2628 = vmul.f32 %v2548, %v2610
        %v2629 = vmul.f32 %v2549, %v2625
        %s2630 = scalar_lea.vmem [#allocation2], 576
        %2631 = vst.msk [vmem:[%s2630 + $0x8] sm:$0xff] %vm574, %v2626
        %2632 = vst.msk [vmem:[%s2630 + $0x10] sm:$0xff] %vm574, %v2627
        %2633 = vst.msk [vmem:[%s2630 + $0x28] sm:$0xff] %vm574, %v2628
        %2634 = vst.msk [vmem:[%s2630 + $0x30] sm:$0xff] %vm574, %v2629
      $region68: #{tpu_custom_call.1} parent=55 // pred_fallthru
        _
      %p2635 = scmp.ge.s32.totalorder %s27, 0
      // Predicated region
      $region69: #{tpu_custom_call.1} parent=55 // pred_check
        %p2636 = pneg %p2635
      $region70: #{tpu_custom_call.1} parent=55 // pred_check_branch
        %2638 = sbr.rel (%p2636) target = $region72
      $region71: #{tpu_custom_call.1} parent=55 // pred_region
        %s2639 = scalar_lea.vmem [#allocation2], 576
        %2640 = vst.msk [vmem:[%s2639 + $0x8] sm:$0xff] %vm574, 0.0
        %2641 = vst.msk [vmem:[%s2639 + $0x10] sm:$0xff] %vm574, 0.0
        %2642 = vst.msk [vmem:[%s2639 + $0x28] sm:$0xff] %vm574, 0.0
        %2643 = vst.msk [vmem:[%s2639 + $0x30] sm:$0xff] %vm574, 0.0
      $region72: #{tpu_custom_call.1} parent=55 // pred_fallthru
        _
      %v2644 = vld [vmem:[#allocation2 + $0x6] sm:$0xff]
      %v2645 = vld [vmem:[#allocation2 + $0xe] sm:$0xff]
      %v2646 = vld [vmem:[#allocation2 + $0x26] sm:$0xff]
      %v2647 = vld [vmem:[#allocation2 + $0x2e] sm:$0xff]
      %v2648 = vld [vmem:[#allocation2 + $0x46] sm:$0xff]
      %v2649 = vld [vmem:[#allocation2 + $0x4e] sm:$0xff]
      %v2650 = vld [vmem:[#allocation2 + $0x66] sm:$0xff]
      %v2651 = vld [vmem:[#allocation2 + $0x6e] sm:$0xff]
      %v2652 = vld [vmem:[#allocation2 + $0x86] sm:$0xff]
      %v2653 = vld [vmem:[#allocation2 + $0x8e] sm:$0xff]
      %v2654 = vld [vmem:[#allocation2 + $0xa6] sm:$0xff]
      %v2655 = vld [vmem:[#allocation2 + $0xae] sm:$0xff]
      %v2656 = vld [vmem:[#allocation2 + $0xc6] sm:$0xff]
      %v2657 = vld [vmem:[#allocation2 + $0xce] sm:$0xff]
      %v2658 = vld [vmem:[#allocation2 + $0xe6] sm:$0xff]
      %v2659 = vld [vmem:[#allocation2 + $0xee] sm:$0xff]
      %v2660 = vld [vmem:[#allocation2 + $0x106] sm:$0xff]
      %v2661 = vld [vmem:[#allocation2 + $0x10e] sm:$0xff]
      %v2662 = vld [vmem:[#allocation2 + $0x126] sm:$0xff]
      %v2663 = vld [vmem:[#allocation2 + $0x12e] sm:$0xff]
      %v2664 = vld [vmem:[#allocation2 + $0x146] sm:$0xff]
      %v2665 = vld [vmem:[#allocation2 + $0x14e] sm:$0xff]
      %v2666 = vld [vmem:[#allocation2 + $0x166] sm:$0xff]
      %v2667 = vld [vmem:[#allocation2 + $0x16e] sm:$0xff]
      %v2668 = vld [vmem:[#allocation2 + $0x186] sm:$0xff]
      %v2669 = vld [vmem:[#allocation2 + $0x18e] sm:$0xff]
      %v2670 = vld [vmem:[#allocation2 + $0x1a6] sm:$0xff]
      %v2671 = vld [vmem:[#allocation2 + $0x1ae] sm:$0xff]
      %v2672 = vld [vmem:[#allocation2 + $0x1c6] sm:$0xff]
      %v2673 = vld [vmem:[#allocation2 + $0x1ce] sm:$0xff]
      %v2674 = vld [vmem:[#allocation2 + $0x1e6] sm:$0xff]
      %v2675 = vld [vmem:[#allocation2 + $0x1ee] sm:$0xff]
      %v2676 = vld [vmem:[#allocation2 + $0x206] sm:$0xff]
      %v2677 = vld [vmem:[#allocation2 + $0x20e] sm:$0xff]
      %v2678 = vld [vmem:[#allocation2 + $0x226] sm:$0xff]
      %v2679 = vld [vmem:[#allocation2 + $0x22e] sm:$0xff]
      %v2680 = vld [vmem:[#allocation2 + $0x246] sm:$0xff]
      %v2681 = vld [vmem:[#allocation2 + $0x24e] sm:$0xff]
      %v2682 = vld [vmem:[#allocation2 + $0x266] sm:$0xff]
      %v2683 = vld [vmem:[#allocation2 + $0x26e] sm:$0xff]
      %v2684 = vperm.slane %v567, 0
      %v2685 = vmul.f32 %v2644, %v2684
      %v2686 = vmul.f32 %v2645, %v2684
      %v2687 = vmul.f32 %v2646, %v2684
      %v2688 = vmul.f32 %v2647, %v2684
      %v2689 = vmul.f32 %v2648, %v2684
      %v2690 = vmul.f32 %v2649, %v2684
      %v2691 = vmul.f32 %v2650, %v2684
      %v2692 = vmul.f32 %v2651, %v2684
      %v2693 = vmul.f32 %v2652, %v2684
      %v2694 = vmul.f32 %v2653, %v2684
      %v2695 = vmul.f32 %v2654, %v2684
      %v2696 = vmul.f32 %v2655, %v2684
      %v2697 = vmul.f32 %v2656, %v2684
      %v2698 = vmul.f32 %v2657, %v2684
      %v2699 = vmul.f32 %v2658, %v2684
      %v2700 = vmul.f32 %v2659, %v2684
      %v2701 = vmul.f32 %v2660, %v2684
      %v2702 = vmul.f32 %v2661, %v2684
      %v2703 = vmul.f32 %v2662, %v2684
      %v2704 = vmul.f32 %v2663, %v2684
      %v2705 = vmul.f32 %v2664, %v2684
      %v2706 = vmul.f32 %v2665, %v2684
      %v2707 = vmul.f32 %v2666, %v2684
      %v2708 = vmul.f32 %v2667, %v2684
      %v2709 = vmul.f32 %v2668, %v2684
      %v2710 = vmul.f32 %v2669, %v2684
      %v2711 = vmul.f32 %v2670, %v2684
      %v2712 = vmul.f32 %v2671, %v2684
      %v2713 = vmul.f32 %v2672, %v2684
      %v2714 = vmul.f32 %v2673, %v2684
      %v2715 = vmul.f32 %v2674, %v2684
      %v2716 = vmul.f32 %v2675, %v2684
      %v2717 = vadd.f32 %v2685, 0.0
      %v2718 = vadd.f32 %v2686, 0.0
      %v2719 = vadd.f32 %v2687, 0.0
      %v2720 = vadd.f32 %v2688, 0.0
      %v2721 = vadd.f32 %v2689, 0.0
      %v2722 = vadd.f32 %v2690, 0.0
      %v2723 = vadd.f32 %v2691, 0.0
      %v2724 = vadd.f32 %v2692, 0.0
      %v2725 = vadd.f32 %v2693, 0.0
      %v2726 = vadd.f32 %v2694, 0.0
      %v2727 = vadd.f32 %v2695, 0.0
      %v2728 = vadd.f32 %v2696, 0.0
      %v2729 = vadd.f32 %v2697, 0.0
      %v2730 = vadd.f32 %v2698, 0.0
      %v2731 = vadd.f32 %v2699, 0.0
      %v2732 = vadd.f32 %v2700, 0.0
      %v2733 = vadd.f32 %v2701, 0.0
      %v2734 = vadd.f32 %v2702, 0.0
      %v2735 = vadd.f32 %v2703, 0.0
      %v2736 = vadd.f32 %v2704, 0.0
      %v2737 = vadd.f32 %v2705, 0.0
      %v2738 = vadd.f32 %v2706, 0.0
      %v2739 = vadd.f32 %v2707, 0.0
      %v2740 = vadd.f32 %v2708, 0.0
      %v2741 = vadd.f32 %v2709, 0.0
      %v2742 = vadd.f32 %v2710, 0.0
      %v2743 = vadd.f32 %v2711, 0.0
      %v2744 = vadd.f32 %v2712, 0.0
      %v2745 = vadd.f32 %v2713, 0.0
      %v2746 = vadd.f32 %v2714, 0.0
      %v2747 = vadd.f32 %v2715, 0.0
      %v2748 = vadd.f32 %v2716, 0.0
      %v2749 = vperm.slane %v568, 0
      %v2750 = vmul.f32 %v2646, %v2749
      %v2751 = vmul.f32 %v2647, %v2749
      %v2752 = vmul.f32 %v2648, %v2749
      %v2753 = vmul.f32 %v2649, %v2749
      %v2754 = vmul.f32 %v2650, %v2749
      %v2755 = vmul.f32 %v2651, %v2749
      %v2756 = vmul.f32 %v2652, %v2749
      %v2757 = vmul.f32 %v2653, %v2749
      %v2758 = vmul.f32 %v2654, %v2749
      %v2759 = vmul.f32 %v2655, %v2749
      %v2760 = vmul.f32 %v2656, %v2749
      %v2761 = vmul.f32 %v2657, %v2749
      %v2762 = vmul.f32 %v2658, %v2749
      %v2763 = vmul.f32 %v2659, %v2749
      %v2764 = vmul.f32 %v2660, %v2749
      %v2765 = vmul.f32 %v2661, %v2749
      %v2766 = vmul.f32 %v2662, %v2749
      %v2767 = vmul.f32 %v2663, %v2749
      %v2768 = vmul.f32 %v2664, %v2749
      %v2769 = vmul.f32 %v2665, %v2749
      %v2770 = vmul.f32 %v2666, %v2749
      %v2771 = vmul.f32 %v2667, %v2749
      %v2772 = vmul.f32 %v2668, %v2749
      %v2773 = vmul.f32 %v2669, %v2749
      %v2774 = vmul.f32 %v2670, %v2749
      %v2775 = vmul.f32 %v2671, %v2749
      %v2776 = vmul.f32 %v2672, %v2749
      %v2777 = vmul.f32 %v2673, %v2749
      %v2778 = vmul.f32 %v2674, %v2749
      %v2779 = vmul.f32 %v2675, %v2749
      %v2780 = vmul.f32 %v2676, %v2749
      %v2781 = vmul.f32 %v2677, %v2749
      %v2782 = vadd.f32 %v2717, %v2750
      %v2783 = vadd.f32 %v2718, %v2751
      %v2784 = vadd.f32 %v2719, %v2752
      %v2785 = vadd.f32 %v2720, %v2753
      %v2786 = vadd.f32 %v2721, %v2754
      %v2787 = vadd.f32 %v2722, %v2755
      %v2788 = vadd.f32 %v2723, %v2756
      %v2789 = vadd.f32 %v2724, %v2757
      %v2790 = vadd.f32 %v2725, %v2758
      %v2791 = vadd.f32 %v2726, %v2759
      %v2792 = vadd.f32 %v2727, %v2760
      %v2793 = vadd.f32 %v2728, %v2761
      %v2794 = vadd.f32 %v2729, %v2762
      %v2795 = vadd.f32 %v2730, %v2763
      %v2796 = vadd.f32 %v2731, %v2764
      %v2797 = vadd.f32 %v2732, %v2765
      %v2798 = vadd.f32 %v2733, %v2766
      %v2799 = vadd.f32 %v2734, %v2767
      %v2800 = vadd.f32 %v2735, %v2768
      %v2801 = vadd.f32 %v2736, %v2769
      %v2802 = vadd.f32 %v2737, %v2770
      %v2803 = vadd.f32 %v2738, %v2771
      %v2804 = vadd.f32 %v2739, %v2772
      %v2805 = vadd.f32 %v2740, %v2773
      %v2806 = vadd.f32 %v2741, %v2774
      %v2807 = vadd.f32 %v2742, %v2775
      %v2808 = vadd.f32 %v2743, %v2776
      %v2809 = vadd.f32 %v2744, %v2777
      %v2810 = vadd.f32 %v2745, %v2778
      %v2811 = vadd.f32 %v2746, %v2779
      %v2812 = vadd.f32 %v2747, %v2780
      %v2813 = vadd.f32 %v2748, %v2781
      %v2814 = vperm.slane %v569, 0
      %v2815 = vmul.f32 %v2648, %v2814
      %v2816 = vmul.f32 %v2649, %v2814
      %v2817 = vmul.f32 %v2650, %v2814
      %v2818 = vmul.f32 %v2651, %v2814
      %v2819 = vmul.f32 %v2652, %v2814
      %v2820 = vmul.f32 %v2653, %v2814
      %v2821 = vmul.f32 %v2654, %v2814
      %v2822 = vmul.f32 %v2655, %v2814
      %v2823 = vmul.f32 %v2656, %v2814
      %v2824 = vmul.f32 %v2657, %v2814
      %v2825 = vmul.f32 %v2658, %v2814
      %v2826 = vmul.f32 %v2659, %v2814
      %v2827 = vmul.f32 %v2660, %v2814
      %v2828 = vmul.f32 %v2661, %v2814
      %v2829 = vmul.f32 %v2662, %v2814
      %v2830 = vmul.f32 %v2663, %v2814
      %v2831 = vmul.f32 %v2664, %v2814
      %v2832 = vmul.f32 %v2665, %v2814
      %v2833 = vmul.f32 %v2666, %v2814
      %v2834 = vmul.f32 %v2667, %v2814
      %v2835 = vmul.f32 %v2668, %v2814
      %v2836 = vmul.f32 %v2669, %v2814
      %v2837 = vmul.f32 %v2670, %v2814
      %v2838 = vmul.f32 %v2671, %v2814
      %v2839 = vmul.f32 %v2672, %v2814
      %v2840 = vmul.f32 %v2673, %v2814
      %v2841 = vmul.f32 %v2674, %v2814
      %v2842 = vmul.f32 %v2675, %v2814
      %v2843 = vmul.f32 %v2676, %v2814
      %v2844 = vmul.f32 %v2677, %v2814
      %v2845 = vmul.f32 %v2678, %v2814
      %v2846 = vmul.f32 %v2679, %v2814
      %v2847 = vadd.f32 %v2782, %v2815
      %v2848 = vadd.f32 %v2783, %v2816
      %v2849 = vadd.f32 %v2784, %v2817
      %v2850 = vadd.f32 %v2785, %v2818
      %v2851 = vadd.f32 %v2786, %v2819
      %v2852 = vadd.f32 %v2787, %v2820
      %v2853 = vadd.f32 %v2788, %v2821
      %v2854 = vadd.f32 %v2789, %v2822
      %v2855 = vadd.f32 %v2790, %v2823
      %v2856 = vadd.f32 %v2791, %v2824
      %v2857 = vadd.f32 %v2792, %v2825
      %v2858 = vadd.f32 %v2793, %v2826
      %v2859 = vadd.f32 %v2794, %v2827
      %v2860 = vadd.f32 %v2795, %v2828
      %v2861 = vadd.f32 %v2796, %v2829
      %v2862 = vadd.f32 %v2797, %v2830
      %v2863 = vadd.f32 %v2798, %v2831
      %v2864 = vadd.f32 %v2799, %v2832
      %v2865 = vadd.f32 %v2800, %v2833
      %v2866 = vadd.f32 %v2801, %v2834
      %v2867 = vadd.f32 %v2802, %v2835
      %v2868 = vadd.f32 %v2803, %v2836
      %v2869 = vadd.f32 %v2804, %v2837
      %v2870 = vadd.f32 %v2805, %v2838
      %v2871 = vadd.f32 %v2806, %v2839
      %v2872 = vadd.f32 %v2807, %v2840
      %v2873 = vadd.f32 %v2808, %v2841
      %v2874 = vadd.f32 %v2809, %v2842
      %v2875 = vadd.f32 %v2810, %v2843
      %v2876 = vadd.f32 %v2811, %v2844
      %v2877 = vadd.f32 %v2812, %v2845
      %v2878 = vadd.f32 %v2813, %v2846
      %v2879 = vperm.slane %v570, 0
      %v2880 = vmul.f32 %v2650, %v2879
      %v2881 = vmul.f32 %v2651, %v2879
      %v2882 = vmul.f32 %v2652, %v2879
      %v2883 = vmul.f32 %v2653, %v2879
      %v2884 = vmul.f32 %v2654, %v2879
      %v2885 = vmul.f32 %v2655, %v2879
      %v2886 = vmul.f32 %v2656, %v2879
      %v2887 = vmul.f32 %v2657, %v2879
      %v2888 = vmul.f32 %v2658, %v2879
      %v2889 = vmul.f32 %v2659, %v2879
      %v2890 = vmul.f32 %v2660, %v2879
      %v2891 = vmul.f32 %v2661, %v2879
      %v2892 = vmul.f32 %v2662, %v2879
      %v2893 = vmul.f32 %v2663, %v2879
      %v2894 = vmul.f32 %v2664, %v2879
      %v2895 = vmul.f32 %v2665, %v2879
      %v2896 = vmul.f32 %v2666, %v2879
      %v2897 = vmul.f32 %v2667, %v2879
      %v2898 = vmul.f32 %v2668, %v2879
      %v2899 = vmul.f32 %v2669, %v2879
      %v2900 = vmul.f32 %v2670, %v2879
      %v2901 = vmul.f32 %v2671, %v2879
      %v2902 = vmul.f32 %v2672, %v2879
      %v2903 = vmul.f32 %v2673, %v2879
      %v2904 = vmul.f32 %v2674, %v2879
      %v2905 = vmul.f32 %v2675, %v2879
      %v2906 = vmul.f32 %v2676, %v2879
      %v2907 = vmul.f32 %v2677, %v2879
      %v2908 = vmul.f32 %v2678, %v2879
      %v2909 = vmul.f32 %v2679, %v2879
      %v2910 = vmul.f32 %v2680, %v2879
      %v2911 = vmul.f32 %v2681, %v2879
      %v2912 = vadd.f32 %v2847, %v2880
      %v2913 = vadd.f32 %v2848, %v2881
      %v2914 = vadd.f32 %v2849, %v2882
      %v2915 = vadd.f32 %v2850, %v2883
      %v2916 = vadd.f32 %v2851, %v2884
      %v2917 = vadd.f32 %v2852, %v2885
      %v2918 = vadd.f32 %v2853, %v2886
      %v2919 = vadd.f32 %v2854, %v2887
      %v2920 = vadd.f32 %v2855, %v2888
      %v2921 = vadd.f32 %v2856, %v2889
      %v2922 = vadd.f32 %v2857, %v2890
      %v2923 = vadd.f32 %v2858, %v2891
      %v2924 = vadd.f32 %v2859, %v2892
      %v2925 = vadd.f32 %v2860, %v2893
      %v2926 = vadd.f32 %v2861, %v2894
      %v2927 = vadd.f32 %v2862, %v2895
      %v2928 = vadd.f32 %v2863, %v2896
      %v2929 = vadd.f32 %v2864, %v2897
      %v2930 = vadd.f32 %v2865, %v2898
      %v2931 = vadd.f32 %v2866, %v2899
      %v2932 = vadd.f32 %v2867, %v2900
      %v2933 = vadd.f32 %v2868, %v2901
      %v2934 = vadd.f32 %v2869, %v2902
      %v2935 = vadd.f32 %v2870, %v2903
      %v2936 = vadd.f32 %v2871, %v2904
      %v2937 = vadd.f32 %v2872, %v2905
      %v2938 = vadd.f32 %v2873, %v2906
      %v2939 = vadd.f32 %v2874, %v2907
      %v2940 = vadd.f32 %v2875, %v2908
      %v2941 = vadd.f32 %v2876, %v2909
      %v2942 = vadd.f32 %v2877, %v2910
      %v2943 = vadd.f32 %v2878, %v2911
      %v2944 = vperm.slane %v571, 0
      %v2945 = vmul.f32 %v2652, %v2944
      %v2946 = vmul.f32 %v2653, %v2944
      %v2947 = vmul.f32 %v2654, %v2944
      %v2948 = vmul.f32 %v2655, %v2944
      %v2949 = vmul.f32 %v2656, %v2944
      %v2950 = vmul.f32 %v2657, %v2944
      %v2951 = vmul.f32 %v2658, %v2944
      %v2952 = vmul.f32 %v2659, %v2944
      %v2953 = vmul.f32 %v2660, %v2944
      %v2954 = vmul.f32 %v2661, %v2944
      %v2955 = vmul.f32 %v2662, %v2944
      %v2956 = vmul.f32 %v2663, %v2944
      %v2957 = vmul.f32 %v2664, %v2944
      %v2958 = vmul.f32 %v2665, %v2944
      %v2959 = vmul.f32 %v2666, %v2944
      %v2960 = vmul.f32 %v2667, %v2944
      %v2961 = vmul.f32 %v2668, %v2944
      %v2962 = vmul.f32 %v2669, %v2944
      %v2963 = vmul.f32 %v2670, %v2944
      %v2964 = vmul.f32 %v2671, %v2944
      %v2965 = vmul.f32 %v2672, %v2944
      %v2966 = vmul.f32 %v2673, %v2944
      %v2967 = vmul.f32 %v2674, %v2944
      %v2968 = vmul.f32 %v2675, %v2944
      %v2969 = vmul.f32 %v2676, %v2944
      %v2970 = vmul.f32 %v2677, %v2944
      %v2971 = vmul.f32 %v2678, %v2944
      %v2972 = vmul.f32 %v2679, %v2944
      %v2973 = vmul.f32 %v2680, %v2944
      %v2974 = vmul.f32 %v2681, %v2944
      %v2975 = vmul.f32 %v2682, %v2944
      %v2976 = vmul.f32 %v2683, %v2944
      %v2977 = vadd.f32 %v2912, %v2945
      %v2978 = vadd.f32 %v2913, %v2946
      %v2979 = vadd.f32 %v2914, %v2947
      %v2980 = vadd.f32 %v2915, %v2948
      %v2981 = vadd.f32 %v2916, %v2949
      %v2982 = vadd.f32 %v2917, %v2950
      %v2983 = vadd.f32 %v2918, %v2951
      %v2984 = vadd.f32 %v2919, %v2952
      %v2985 = vadd.f32 %v2920, %v2953
      %v2986 = vadd.f32 %v2921, %v2954
      %v2987 = vadd.f32 %v2922, %v2955
      %v2988 = vadd.f32 %v2923, %v2956
      %v2989 = vadd.f32 %v2924, %v2957
      %v2990 = vadd.f32 %v2925, %v2958
      %v2991 = vadd.f32 %v2926, %v2959
      %v2992 = vadd.f32 %v2927, %v2960
      %v2993 = vadd.f32 %v2928, %v2961
      %v2994 = vadd.f32 %v2929, %v2962
      %v2995 = vadd.f32 %v2930, %v2963
      %v2996 = vadd.f32 %v2931, %v2964
      %v2997 = vadd.f32 %v2932, %v2965
      %v2998 = vadd.f32 %v2933, %v2966
      %v2999 = vadd.f32 %v2934, %v2967
      %v3000 = vadd.f32 %v2935, %v2968
      %v3001 = vadd.f32 %v2936, %v2969
      %v3002 = vadd.f32 %v2937, %v2970
      %v3003 = vadd.f32 %v2938, %v2971
      %v3004 = vadd.f32 %v2939, %v2972
      %v3005 = vadd.f32 %v2940, %v2973
      %v3006 = vadd.f32 %v2941, %v2974
      %v3007 = vadd.f32 %v2942, %v2975
      %v3008 = vadd.f32 %v2943, %v2976
      %v3009 = vld [vmem:[#allocation2 + $0x7] sm:$0xff]
      %v3010 = vld [vmem:[#allocation2 + $0xf] sm:$0xff]
      %v3011 = vld [vmem:[#allocation2 + $0x27] sm:$0xff]
      %v3012 = vld [vmem:[#allocation2 + $0x2f] sm:$0xff]
      %v3013 = vld [vmem:[#allocation2 + $0x47] sm:$0xff]
      %v3014 = vld [vmem:[#allocation2 + $0x4f] sm:$0xff]
      %v3015 = vld [vmem:[#allocation2 + $0x67] sm:$0xff]
      %v3016 = vld [vmem:[#allocation2 + $0x6f] sm:$0xff]
      %v3017 = vld [vmem:[#allocation2 + $0x87] sm:$0xff]
      %v3018 = vld [vmem:[#allocation2 + $0x8f] sm:$0xff]
      %v3019 = vld [vmem:[#allocation2 + $0xa7] sm:$0xff]
      %v3020 = vld [vmem:[#allocation2 + $0xaf] sm:$0xff]
      %v3021 = vld [vmem:[#allocation2 + $0xc7] sm:$0xff]
      %v3022 = vld [vmem:[#allocation2 + $0xcf] sm:$0xff]
      %v3023 = vld [vmem:[#allocation2 + $0xe7] sm:$0xff]
      %v3024 = vld [vmem:[#allocation2 + $0xef] sm:$0xff]
      %v3025 = vld [vmem:[#allocation2 + $0x107] sm:$0xff]
      %v3026 = vld [vmem:[#allocation2 + $0x10f] sm:$0xff]
      %v3027 = vld [vmem:[#allocation2 + $0x127] sm:$0xff]
      %v3028 = vld [vmem:[#allocation2 + $0x12f] sm:$0xff]
      %v3029 = vld [vmem:[#allocation2 + $0x147] sm:$0xff]
      %v3030 = vld [vmem:[#allocation2 + $0x14f] sm:$0xff]
      %v3031 = vld [vmem:[#allocation2 + $0x167] sm:$0xff]
      %v3032 = vld [vmem:[#allocation2 + $0x16f] sm:$0xff]
      %v3033 = vld [vmem:[#allocation2 + $0x187] sm:$0xff]
      %v3034 = vld [vmem:[#allocation2 + $0x18f] sm:$0xff]
      %v3035 = vld [vmem:[#allocation2 + $0x1a7] sm:$0xff]
      %v3036 = vld [vmem:[#allocation2 + $0x1af] sm:$0xff]
      %v3037 = vld [vmem:[#allocation2 + $0x1c7] sm:$0xff]
      %v3038 = vld [vmem:[#allocation2 + $0x1cf] sm:$0xff]
      %v3039 = vld [vmem:[#allocation2 + $0x1e7] sm:$0xff]
      %v3040 = vld [vmem:[#allocation2 + $0x1ef] sm:$0xff]
      %v3041 = vld [vmem:[#allocation2 + $0x207] sm:$0xff]
      %v3042 = vld [vmem:[#allocation2 + $0x20f] sm:$0xff]
      %v3043 = vld [vmem:[#allocation2 + $0x227] sm:$0xff]
      %v3044 = vld [vmem:[#allocation2 + $0x22f] sm:$0xff]
      %v3045 = vld [vmem:[#allocation2 + $0x247] sm:$0xff]
      %v3046 = vld [vmem:[#allocation2 + $0x24f] sm:$0xff]
      %v3047 = vld [vmem:[#allocation2 + $0x267] sm:$0xff]
      %v3048 = vld [vmem:[#allocation2 + $0x26f] sm:$0xff]
      %v3049 = vperm.slane %v567, 1
      %v3050 = vmul.f32 %v3009, %v3049
      %v3051 = vmul.f32 %v3010, %v3049
      %v3052 = vmul.f32 %v3011, %v3049
      %v3053 = vmul.f32 %v3012, %v3049
      %v3054 = vmul.f32 %v3013, %v3049
      %v3055 = vmul.f32 %v3014, %v3049
      %v3056 = vmul.f32 %v3015, %v3049
      %v3057 = vmul.f32 %v3016, %v3049
      %v3058 = vmul.f32 %v3017, %v3049
      %v3059 = vmul.f32 %v3018, %v3049
      %v3060 = vmul.f32 %v3019, %v3049
      %v3061 = vmul.f32 %v3020, %v3049
      %v3062 = vmul.f32 %v3021, %v3049
      %v3063 = vmul.f32 %v3022, %v3049
      %v3064 = vmul.f32 %v3023, %v3049
      %v3065 = vmul.f32 %v3024, %v3049
      %v3066 = vmul.f32 %v3025, %v3049
      %v3067 = vmul.f32 %v3026, %v3049
      %v3068 = vmul.f32 %v3027, %v3049
      %v3069 = vmul.f32 %v3028, %v3049
      %v3070 = vmul.f32 %v3029, %v3049
      %v3071 = vmul.f32 %v3030, %v3049
      %v3072 = vmul.f32 %v3031, %v3049
      %v3073 = vmul.f32 %v3032, %v3049
      %v3074 = vmul.f32 %v3033, %v3049
      %v3075 = vmul.f32 %v3034, %v3049
      %v3076 = vmul.f32 %v3035, %v3049
      %v3077 = vmul.f32 %v3036, %v3049
      %v3078 = vmul.f32 %v3037, %v3049
      %v3079 = vmul.f32 %v3038, %v3049
      %v3080 = vmul.f32 %v3039, %v3049
      %v3081 = vmul.f32 %v3040, %v3049
      %v3082 = vadd.f32 %v2977, %v3050
      %v3083 = vadd.f32 %v2978, %v3051
      %v3084 = vadd.f32 %v2979, %v3052
      %v3085 = vadd.f32 %v2980, %v3053
      %v3086 = vadd.f32 %v2981, %v3054
      %v3087 = vadd.f32 %v2982, %v3055
      %v3088 = vadd.f32 %v2983, %v3056
      %v3089 = vadd.f32 %v2984, %v3057
      %v3090 = vadd.f32 %v2985, %v3058
      %v3091 = vadd.f32 %v2986, %v3059
      %v3092 = vadd.f32 %v2987, %v3060
      %v3093 = vadd.f32 %v2988, %v3061
      %v3094 = vadd.f32 %v2989, %v3062
      %v3095 = vadd.f32 %v2990, %v3063
      %v3096 = vadd.f32 %v2991, %v3064
      %v3097 = vadd.f32 %v2992, %v3065
      %v3098 = vadd.f32 %v2993, %v3066
      %v3099 = vadd.f32 %v2994, %v3067
      %v3100 = vadd.f32 %v2995, %v3068
      %v3101 = vadd.f32 %v2996, %v3069
      %v3102 = vadd.f32 %v2997, %v3070
      %v3103 = vadd.f32 %v2998, %v3071
      %v3104 = vadd.f32 %v2999, %v3072
      %v3105 = vadd.f32 %v3000, %v3073
      %v3106 = vadd.f32 %v3001, %v3074
      %v3107 = vadd.f32 %v3002, %v3075
      %v3108 = vadd.f32 %v3003, %v3076
      %v3109 = vadd.f32 %v3004, %v3077
      %v3110 = vadd.f32 %v3005, %v3078
      %v3111 = vadd.f32 %v3006, %v3079
      %v3112 = vadd.f32 %v3007, %v3080
      %v3113 = vadd.f32 %v3008, %v3081
      %v3114 = vperm.slane %v568, 1
      %v3115 = vmul.f32 %v3011, %v3114
      %v3116 = vmul.f32 %v3012, %v3114
      %v3117 = vmul.f32 %v3013, %v3114
      %v3118 = vmul.f32 %v3014, %v3114
      %v3119 = vmul.f32 %v3015, %v3114
      %v3120 = vmul.f32 %v3016, %v3114
      %v3121 = vmul.f32 %v3017, %v3114
      %v3122 = vmul.f32 %v3018, %v3114
      %v3123 = vmul.f32 %v3019, %v3114
      %v3124 = vmul.f32 %v3020, %v3114
      %v3125 = vmul.f32 %v3021, %v3114
      %v3126 = vmul.f32 %v3022, %v3114
      %v3127 = vmul.f32 %v3023, %v3114
      %v3128 = vmul.f32 %v3024, %v3114
      %v3129 = vmul.f32 %v3025, %v3114
      %v3130 = vmul.f32 %v3026, %v3114
      %v3131 = vmul.f32 %v3027, %v3114
      %v3132 = vmul.f32 %v3028, %v3114
      %v3133 = vmul.f32 %v3029, %v3114
      %v3134 = vmul.f32 %v3030, %v3114
      %v3135 = vmul.f32 %v3031, %v3114
      %v3136 = vmul.f32 %v3032, %v3114
      %v3137 = vmul.f32 %v3033, %v3114
      %v3138 = vmul.f32 %v3034, %v3114
      %v3139 = vmul.f32 %v3035, %v3114
      %v3140 = vmul.f32 %v3036, %v3114
      %v3141 = vmul.f32 %v3037, %v3114
      %v3142 = vmul.f32 %v3038, %v3114
      %v3143 = vmul.f32 %v3039, %v3114
      %v3144 = vmul.f32 %v3040, %v3114
      %v3145 = vmul.f32 %v3041, %v3114
      %v3146 = vmul.f32 %v3042, %v3114
      %v3147 = vadd.f32 %v3082, %v3115
      %v3148 = vadd.f32 %v3083, %v3116
      %v3149 = vadd.f32 %v3084, %v3117
      %v3150 = vadd.f32 %v3085, %v3118
      %v3151 = vadd.f32 %v3086, %v3119
      %v3152 = vadd.f32 %v3087, %v3120
      %v3153 = vadd.f32 %v3088, %v3121
      %v3154 = vadd.f32 %v3089, %v3122
      %v3155 = vadd.f32 %v3090, %v3123
      %v3156 = vadd.f32 %v3091, %v3124
      %v3157 = vadd.f32 %v3092, %v3125
      %v3158 = vadd.f32 %v3093, %v3126
      %v3159 = vadd.f32 %v3094, %v3127
      %v3160 = vadd.f32 %v3095, %v3128
      %v3161 = vadd.f32 %v3096, %v3129
      %v3162 = vadd.f32 %v3097, %v3130
      %v3163 = vadd.f32 %v3098, %v3131
      %v3164 = vadd.f32 %v3099, %v3132
      %v3165 = vadd.f32 %v3100, %v3133
      %v3166 = vadd.f32 %v3101, %v3134
      %v3167 = vadd.f32 %v3102, %v3135
      %v3168 = vadd.f32 %v3103, %v3136
      %v3169 = vadd.f32 %v3104, %v3137
      %v3170 = vadd.f32 %v3105, %v3138
      %v3171 = vadd.f32 %v3106, %v3139
      %v3172 = vadd.f32 %v3107, %v3140
      %v3173 = vadd.f32 %v3108, %v3141
      %v3174 = vadd.f32 %v3109, %v3142
      %v3175 = vadd.f32 %v3110, %v3143
      %v3176 = vadd.f32 %v3111, %v3144
      %v3177 = vadd.f32 %v3112, %v3145
      %v3178 = vadd.f32 %v3113, %v3146
      %v3179 = vperm.slane %v569, 1
      %v3180 = vmul.f32 %v3013, %v3179
      %v3181 = vmul.f32 %v3014, %v3179
      %v3182 = vmul.f32 %v3015, %v3179
      %v3183 = vmul.f32 %v3016, %v3179
      %v3184 = vmul.f32 %v3017, %v3179
      %v3185 = vmul.f32 %v3018, %v3179
      %v3186 = vmul.f32 %v3019, %v3179
      %v3187 = vmul.f32 %v3020, %v3179
      %v3188 = vmul.f32 %v3021, %v3179
      %v3189 = vmul.f32 %v3022, %v3179
      %v3190 = vmul.f32 %v3023, %v3179
      %v3191 = vmul.f32 %v3024, %v3179
      %v3192 = vmul.f32 %v3025, %v3179
      %v3193 = vmul.f32 %v3026, %v3179
      %v3194 = vmul.f32 %v3027, %v3179
      %v3195 = vmul.f32 %v3028, %v3179
      %v3196 = vmul.f32 %v3029, %v3179
      %v3197 = vmul.f32 %v3030, %v3179
      %v3198 = vmul.f32 %v3031, %v3179
      %v3199 = vmul.f32 %v3032, %v3179
      %v3200 = vmul.f32 %v3033, %v3179
      %v3201 = vmul.f32 %v3034, %v3179
      %v3202 = vmul.f32 %v3035, %v3179
      %v3203 = vmul.f32 %v3036, %v3179
      %v3204 = vmul.f32 %v3037, %v3179
      %v3205 = vmul.f32 %v3038, %v3179
      %v3206 = vmul.f32 %v3039, %v3179
      %v3207 = vmul.f32 %v3040, %v3179
      %v3208 = vmul.f32 %v3041, %v3179
      %v3209 = vmul.f32 %v3042, %v3179
      %v3210 = vmul.f32 %v3043, %v3179
      %v3211 = vmul.f32 %v3044, %v3179
      %v3212 = vadd.f32 %v3147, %v3180
      %v3213 = vadd.f32 %v3148, %v3181
      %v3214 = vadd.f32 %v3149, %v3182
      %v3215 = vadd.f32 %v3150, %v3183
      %v3216 = vadd.f32 %v3151, %v3184
      %v3217 = vadd.f32 %v3152, %v3185
      %v3218 = vadd.f32 %v3153, %v3186
      %v3219 = vadd.f32 %v3154, %v3187
      %v3220 = vadd.f32 %v3155, %v3188
      %v3221 = vadd.f32 %v3156, %v3189
      %v3222 = vadd.f32 %v3157, %v3190
      %v3223 = vadd.f32 %v3158, %v3191
      %v3224 = vadd.f32 %v3159, %v3192
      %v3225 = vadd.f32 %v3160, %v3193
      %v3226 = vadd.f32 %v3161, %v3194
      %v3227 = vadd.f32 %v3162, %v3195
      %v3228 = vadd.f32 %v3163, %v3196
      %v3229 = vadd.f32 %v3164, %v3197
      %v3230 = vadd.f32 %v3165, %v3198
      %v3231 = vadd.f32 %v3166, %v3199
      %v3232 = vadd.f32 %v3167, %v3200
      %v3233 = vadd.f32 %v3168, %v3201
      %v3234 = vadd.f32 %v3169, %v3202
      %v3235 = vadd.f32 %v3170, %v3203
      %v3236 = vadd.f32 %v3171, %v3204
      %v3237 = vadd.f32 %v3172, %v3205
      %v3238 = vadd.f32 %v3173, %v3206
      %v3239 = vadd.f32 %v3174, %v3207
      %v3240 = vadd.f32 %v3175, %v3208
      %v3241 = vadd.f32 %v3176, %v3209
      %v3242 = vadd.f32 %v3177, %v3210
      %v3243 = vadd.f32 %v3178, %v3211
      %v3244 = vperm.slane %v570, 1
      %v3245 = vmul.f32 %v3015, %v3244
      %v3246 = vmul.f32 %v3016, %v3244
      %v3247 = vmul.f32 %v3017, %v3244
      %v3248 = vmul.f32 %v3018, %v3244
      %v3249 = vmul.f32 %v3019, %v3244
      %v3250 = vmul.f32 %v3020, %v3244
      %v3251 = vmul.f32 %v3021, %v3244
      %v3252 = vmul.f32 %v3022, %v3244
      %v3253 = vmul.f32 %v3023, %v3244
      %v3254 = vmul.f32 %v3024, %v3244
      %v3255 = vmul.f32 %v3025, %v3244
      %v3256 = vmul.f32 %v3026, %v3244
      %v3257 = vmul.f32 %v3027, %v3244
      %v3258 = vmul.f32 %v3028, %v3244
      %v3259 = vmul.f32 %v3029, %v3244
      %v3260 = vmul.f32 %v3030, %v3244
      %v3261 = vmul.f32 %v3031, %v3244
      %v3262 = vmul.f32 %v3032, %v3244
      %v3263 = vmul.f32 %v3033, %v3244
      %v3264 = vmul.f32 %v3034, %v3244
      %v3265 = vmul.f32 %v3035, %v3244
      %v3266 = vmul.f32 %v3036, %v3244
      %v3267 = vmul.f32 %v3037, %v3244
      %v3268 = vmul.f32 %v3038, %v3244
      %v3269 = vmul.f32 %v3039, %v3244
      %v3270 = vmul.f32 %v3040, %v3244
      %v3271 = vmul.f32 %v3041, %v3244
      %v3272 = vmul.f32 %v3042, %v3244
      %v3273 = vmul.f32 %v3043, %v3244
      %v3274 = vmul.f32 %v3044, %v3244
      %v3275 = vmul.f32 %v3045, %v3244
      %v3276 = vmul.f32 %v3046, %v3244
      %v3277 = vadd.f32 %v3212, %v3245
      %v3278 = vadd.f32 %v3213, %v3246
      %v3279 = vadd.f32 %v3214, %v3247
      %v3280 = vadd.f32 %v3215, %v3248
      %v3281 = vadd.f32 %v3216, %v3249
      %v3282 = vadd.f32 %v3217, %v3250
      %v3283 = vadd.f32 %v3218, %v3251
      %v3284 = vadd.f32 %v3219, %v3252
      %v3285 = vadd.f32 %v3220, %v3253
      %v3286 = vadd.f32 %v3221, %v3254
      %v3287 = vadd.f32 %v3222, %v3255
      %v3288 = vadd.f32 %v3223, %v3256
      %v3289 = vadd.f32 %v3224, %v3257
      %v3290 = vadd.f32 %v3225, %v3258
      %v3291 = vadd.f32 %v3226, %v3259
      %v3292 = vadd.f32 %v3227, %v3260
      %v3293 = vadd.f32 %v3228, %v3261
      %v3294 = vadd.f32 %v3229, %v3262
      %v3295 = vadd.f32 %v3230, %v3263
      %v3296 = vadd.f32 %v3231, %v3264
      %v3297 = vadd.f32 %v3232, %v3265
      %v3298 = vadd.f32 %v3233, %v3266
      %v3299 = vadd.f32 %v3234, %v3267
      %v3300 = vadd.f32 %v3235, %v3268
      %v3301 = vadd.f32 %v3236, %v3269
      %v3302 = vadd.f32 %v3237, %v3270
      %v3303 = vadd.f32 %v3238, %v3271
      %v3304 = vadd.f32 %v3239, %v3272
      %v3305 = vadd.f32 %v3240, %v3273
      %v3306 = vadd.f32 %v3241, %v3274
      %v3307 = vadd.f32 %v3242, %v3275
      %v3308 = vadd.f32 %v3243, %v3276
      %v3309 = vperm.slane %v571, 1
      %v3310 = vmul.f32 %v3017, %v3309
      %v3311 = vmul.f32 %v3018, %v3309
      %v3312 = vmul.f32 %v3019, %v3309
      %v3313 = vmul.f32 %v3020, %v3309
      %v3314 = vmul.f32 %v3021, %v3309
      %v3315 = vmul.f32 %v3022, %v3309
      %v3316 = vmul.f32 %v3023, %v3309
      %v3317 = vmul.f32 %v3024, %v3309
      %v3318 = vmul.f32 %v3025, %v3309
      %v3319 = vmul.f32 %v3026, %v3309
      %v3320 = vmul.f32 %v3027, %v3309
      %v3321 = vmul.f32 %v3028, %v3309
      %v3322 = vmul.f32 %v3029, %v3309
      %v3323 = vmul.f32 %v3030, %v3309
      %v3324 = vmul.f32 %v3031, %v3309
      %v3325 = vmul.f32 %v3032, %v3309
      %v3326 = vmul.f32 %v3033, %v3309
      %v3327 = vmul.f32 %v3034, %v3309
      %v3328 = vmul.f32 %v3035, %v3309
      %v3329 = vmul.f32 %v3036, %v3309
      %v3330 = vmul.f32 %v3037, %v3309
      %v3331 = vmul.f32 %v3038, %v3309
      %v3332 = vmul.f32 %v3039, %v3309
      %v3333 = vmul.f32 %v3040, %v3309
      %v3334 = vmul.f32 %v3041, %v3309
      %v3335 = vmul.f32 %v3042, %v3309
      %v3336 = vmul.f32 %v3043, %v3309
      %v3337 = vmul.f32 %v3044, %v3309
      %v3338 = vmul.f32 %v3045, %v3309
      %v3339 = vmul.f32 %v3046, %v3309
      %v3340 = vmul.f32 %v3047, %v3309
      %v3341 = vmul.f32 %v3048, %v3309
      %v3342 = vadd.f32 %v3277, %v3310
      %v3343 = vadd.f32 %v3278, %v3311
      %v3344 = vadd.f32 %v3279, %v3312
      %v3345 = vadd.f32 %v3280, %v3313
      %v3346 = vadd.f32 %v3281, %v3314
      %v3347 = vadd.f32 %v3282, %v3315
      %v3348 = vadd.f32 %v3283, %v3316
      %v3349 = vadd.f32 %v3284, %v3317
      %v3350 = vadd.f32 %v3285, %v3318
      %v3351 = vadd.f32 %v3286, %v3319
      %v3352 = vadd.f32 %v3287, %v3320
      %v3353 = vadd.f32 %v3288, %v3321
      %v3354 = vadd.f32 %v3289, %v3322
      %v3355 = vadd.f32 %v3290, %v3323
      %v3356 = vadd.f32 %v3291, %v3324
      %v3357 = vadd.f32 %v3292, %v3325
      %v3358 = vadd.f32 %v3293, %v3326
      %v3359 = vadd.f32 %v3294, %v3327
      %v3360 = vadd.f32 %v3295, %v3328
      %v3361 = vadd.f32 %v3296, %v3329
      %v3362 = vadd.f32 %v3297, %v3330
      %v3363 = vadd.f32 %v3298, %v3331
      %v3364 = vadd.f32 %v3299, %v3332
      %v3365 = vadd.f32 %v3300, %v3333
      %v3366 = vadd.f32 %v3301, %v3334
      %v3367 = vadd.f32 %v3302, %v3335
      %v3368 = vadd.f32 %v3303, %v3336
      %v3369 = vadd.f32 %v3304, %v3337
      %v3370 = vadd.f32 %v3305, %v3338
      %v3371 = vadd.f32 %v3306, %v3339
      %v3372 = vadd.f32 %v3307, %v3340
      %v3373 = vadd.f32 %v3308, %v3341
      %v3374 = vld [vmem:[#allocation2 + $0x8] sm:$0xff]
      %v3375 = vld [vmem:[#allocation2 + $0x10] sm:$0xff]
      %v3376 = vld [vmem:[#allocation2 + $0x28] sm:$0xff]
      %v3377 = vld [vmem:[#allocation2 + $0x30] sm:$0xff]
      %v3378 = vld [vmem:[#allocation2 + $0x48] sm:$0xff]
      %v3379 = vld [vmem:[#allocation2 + $0x50] sm:$0xff]
      %v3380 = vld [vmem:[#allocation2 + $0x68] sm:$0xff]
      %v3381 = vld [vmem:[#allocation2 + $0x70] sm:$0xff]
      %v3382 = vld [vmem:[#allocation2 + $0x88] sm:$0xff]
      %v3383 = vld [vmem:[#allocation2 + $0x90] sm:$0xff]
      %v3384 = vld [vmem:[#allocation2 + $0xa8] sm:$0xff]
      %v3385 = vld [vmem:[#allocation2 + $0xb0] sm:$0xff]
      %v3386 = vld [vmem:[#allocation2 + $0xc8] sm:$0xff]
      %v3387 = vld [vmem:[#allocation2 + $0xd0] sm:$0xff]
      %v3388 = vld [vmem:[#allocation2 + $0xe8] sm:$0xff]
      %v3389 = vld [vmem:[#allocation2 + $0xf0] sm:$0xff]
      %v3390 = vld [vmem:[#allocation2 + $0x108] sm:$0xff]
      %v3391 = vld [vmem:[#allocation2 + $0x110] sm:$0xff]
      %v3392 = vld [vmem:[#allocation2 + $0x128] sm:$0xff]
      %v3393 = vld [vmem:[#allocation2 + $0x130] sm:$0xff]
      %v3394 = vld [vmem:[#allocation2 + $0x148] sm:$0xff]
      %v3395 = vld [vmem:[#allocation2 + $0x150] sm:$0xff]
      %v3396 = vld [vmem:[#allocation2 + $0x168] sm:$0xff]
      %v3397 = vld [vmem:[#allocation2 + $0x170] sm:$0xff]
      %v3398 = vld [vmem:[#allocation2 + $0x188] sm:$0xff]
      %v3399 = vld [vmem:[#allocation2 + $0x190] sm:$0xff]
      %v3400 = vld [vmem:[#allocation2 + $0x1a8] sm:$0xff]
      %v3401 = vld [vmem:[#allocation2 + $0x1b0] sm:$0xff]
      %v3402 = vld [vmem:[#allocation2 + $0x1c8] sm:$0xff]
      %v3403 = vld [vmem:[#allocation2 + $0x1d0] sm:$0xff]
      %v3404 = vld [vmem:[#allocation2 + $0x1e8] sm:$0xff]
      %v3405 = vld [vmem:[#allocation2 + $0x1f0] sm:$0xff]
      %v3406 = vld [vmem:[#allocation2 + $0x208] sm:$0xff]
      %v3407 = vld [vmem:[#allocation2 + $0x210] sm:$0xff]
      %v3408 = vld [vmem:[#allocation2 + $0x228] sm:$0xff]
      %v3409 = vld [vmem:[#allocation2 + $0x230] sm:$0xff]
      %v3410 = vld [vmem:[#allocation2 + $0x248] sm:$0xff]
      %v3411 = vld [vmem:[#allocation2 + $0x250] sm:$0xff]
      %v3412 = vld [vmem:[#allocation2 + $0x268] sm:$0xff]
      %v3413 = vld [vmem:[#allocation2 + $0x270] sm:$0xff]
      %v3414 = vperm.slane %v567, 2
      %v3415 = vmul.f32 %v3374, %v3414
      %v3416 = vmul.f32 %v3375, %v3414
      %v3417 = vmul.f32 %v3376, %v3414
      %v3418 = vmul.f32 %v3377, %v3414
      %v3419 = vmul.f32 %v3378, %v3414
      %v3420 = vmul.f32 %v3379, %v3414
      %v3421 = vmul.f32 %v3380, %v3414
      %v3422 = vmul.f32 %v3381, %v3414
      %v3423 = vmul.f32 %v3382, %v3414
      %v3424 = vmul.f32 %v3383, %v3414
      %v3425 = vmul.f32 %v3384, %v3414
      %v3426 = vmul.f32 %v3385, %v3414
      %v3427 = vmul.f32 %v3386, %v3414
      %v3428 = vmul.f32 %v3387, %v3414
      %v3429 = vmul.f32 %v3388, %v3414
      %v3430 = vmul.f32 %v3389, %v3414
      %v3431 = vmul.f32 %v3390, %v3414
      %v3432 = vmul.f32 %v3391, %v3414
      %v3433 = vmul.f32 %v3392, %v3414
      %v3434 = vmul.f32 %v3393, %v3414
      %v3435 = vmul.f32 %v3394, %v3414
      %v3436 = vmul.f32 %v3395, %v3414
      %v3437 = vmul.f32 %v3396, %v3414
      %v3438 = vmul.f32 %v3397, %v3414
      %v3439 = vmul.f32 %v3398, %v3414
      %v3440 = vmul.f32 %v3399, %v3414
      %v3441 = vmul.f32 %v3400, %v3414
      %v3442 = vmul.f32 %v3401, %v3414
      %v3443 = vmul.f32 %v3402, %v3414
      %v3444 = vmul.f32 %v3403, %v3414
      %v3445 = vmul.f32 %v3404, %v3414
      %v3446 = vmul.f32 %v3405, %v3414
      %v3447 = vadd.f32 %v3342, %v3415
      %v3448 = vadd.f32 %v3343, %v3416
      %v3449 = vadd.f32 %v3344, %v3417
      %v3450 = vadd.f32 %v3345, %v3418
      %v3451 = vadd.f32 %v3346, %v3419
      %v3452 = vadd.f32 %v3347, %v3420
      %v3453 = vadd.f32 %v3348, %v3421
      %v3454 = vadd.f32 %v3349, %v3422
      %v3455 = vadd.f32 %v3350, %v3423
      %v3456 = vadd.f32 %v3351, %v3424
      %v3457 = vadd.f32 %v3352, %v3425
      %v3458 = vadd.f32 %v3353, %v3426
      %v3459 = vadd.f32 %v3354, %v3427
      %v3460 = vadd.f32 %v3355, %v3428
      %v3461 = vadd.f32 %v3356, %v3429
      %v3462 = vadd.f32 %v3357, %v3430
      %v3463 = vadd.f32 %v3358, %v3431
      %v3464 = vadd.f32 %v3359, %v3432
      %v3465 = vadd.f32 %v3360, %v3433
      %v3466 = vadd.f32 %v3361, %v3434
      %v3467 = vadd.f32 %v3362, %v3435
      %v3468 = vadd.f32 %v3363, %v3436
      %v3469 = vadd.f32 %v3364, %v3437
      %v3470 = vadd.f32 %v3365, %v3438
      %v3471 = vadd.f32 %v3366, %v3439
      %v3472 = vadd.f32 %v3367, %v3440
      %v3473 = vadd.f32 %v3368, %v3441
      %v3474 = vadd.f32 %v3369, %v3442
      %v3475 = vadd.f32 %v3370, %v3443
      %v3476 = vadd.f32 %v3371, %v3444
      %v3477 = vadd.f32 %v3372, %v3445
      %v3478 = vadd.f32 %v3373, %v3446
      %v3479 = vperm.slane %v568, 2
      %v3480 = vmul.f32 %v3376, %v3479
      %v3481 = vmul.f32 %v3377, %v3479
      %v3482 = vmul.f32 %v3378, %v3479
      %v3483 = vmul.f32 %v3379, %v3479
      %v3484 = vmul.f32 %v3380, %v3479
      %v3485 = vmul.f32 %v3381, %v3479
      %v3486 = vmul.f32 %v3382, %v3479
      %v3487 = vmul.f32 %v3383, %v3479
      %v3488 = vmul.f32 %v3384, %v3479
      %v3489 = vmul.f32 %v3385, %v3479
      %v3490 = vmul.f32 %v3386, %v3479
      %v3491 = vmul.f32 %v3387, %v3479
      %v3492 = vmul.f32 %v3388, %v3479
      %v3493 = vmul.f32 %v3389, %v3479
      %v3494 = vmul.f32 %v3390, %v3479
      %v3495 = vmul.f32 %v3391, %v3479
      %v3496 = vmul.f32 %v3392, %v3479
      %v3497 = vmul.f32 %v3393, %v3479
      %v3498 = vmul.f32 %v3394, %v3479
      %v3499 = vmul.f32 %v3395, %v3479
      %v3500 = vmul.f32 %v3396, %v3479
      %v3501 = vmul.f32 %v3397, %v3479
      %v3502 = vmul.f32 %v3398, %v3479
      %v3503 = vmul.f32 %v3399, %v3479
      %v3504 = vmul.f32 %v3400, %v3479
      %v3505 = vmul.f32 %v3401, %v3479
      %v3506 = vmul.f32 %v3402, %v3479
      %v3507 = vmul.f32 %v3403, %v3479
      %v3508 = vmul.f32 %v3404, %v3479
      %v3509 = vmul.f32 %v3405, %v3479
      %v3510 = vmul.f32 %v3406, %v3479
      %v3511 = vmul.f32 %v3407, %v3479
      %v3512 = vadd.f32 %v3447, %v3480
      %v3513 = vadd.f32 %v3448, %v3481
      %v3514 = vadd.f32 %v3449, %v3482
      %v3515 = vadd.f32 %v3450, %v3483
      %v3516 = vadd.f32 %v3451, %v3484
      %v3517 = vadd.f32 %v3452, %v3485
      %v3518 = vadd.f32 %v3453, %v3486
      %v3519 = vadd.f32 %v3454, %v3487
      %v3520 = vadd.f32 %v3455, %v3488
      %v3521 = vadd.f32 %v3456, %v3489
      %v3522 = vadd.f32 %v3457, %v3490
      %v3523 = vadd.f32 %v3458, %v3491
      %v3524 = vadd.f32 %v3459, %v3492
      %v3525 = vadd.f32 %v3460, %v3493
      %v3526 = vadd.f32 %v3461, %v3494
      %v3527 = vadd.f32 %v3462, %v3495
      %v3528 = vadd.f32 %v3463, %v3496
      %v3529 = vadd.f32 %v3464, %v3497
      %v3530 = vadd.f32 %v3465, %v3498
      %v3531 = vadd.f32 %v3466, %v3499
      %v3532 = vadd.f32 %v3467, %v3500
      %v3533 = vadd.f32 %v3468, %v3501
      %v3534 = vadd.f32 %v3469, %v3502
      %v3535 = vadd.f32 %v3470, %v3503
      %v3536 = vadd.f32 %v3471, %v3504
      %v3537 = vadd.f32 %v3472, %v3505
      %v3538 = vadd.f32 %v3473, %v3506
      %v3539 = vadd.f32 %v3474, %v3507
      %v3540 = vadd.f32 %v3475, %v3508
      %v3541 = vadd.f32 %v3476, %v3509
      %v3542 = vadd.f32 %v3477, %v3510
      %v3543 = vadd.f32 %v3478, %v3511
      %v3544 = vperm.slane %v569, 2
      %v3545 = vmul.f32 %v3378, %v3544
      %v3546 = vmul.f32 %v3379, %v3544
      %v3547 = vmul.f32 %v3380, %v3544
      %v3548 = vmul.f32 %v3381, %v3544
      %v3549 = vmul.f32 %v3382, %v3544
      %v3550 = vmul.f32 %v3383, %v3544
      %v3551 = vmul.f32 %v3384, %v3544
      %v3552 = vmul.f32 %v3385, %v3544
      %v3553 = vmul.f32 %v3386, %v3544
      %v3554 = vmul.f32 %v3387, %v3544
      %v3555 = vmul.f32 %v3388, %v3544
      %v3556 = vmul.f32 %v3389, %v3544
      %v3557 = vmul.f32 %v3390, %v3544
      %v3558 = vmul.f32 %v3391, %v3544
      %v3559 = vmul.f32 %v3392, %v3544
      %v3560 = vmul.f32 %v3393, %v3544
      %v3561 = vmul.f32 %v3394, %v3544
      %v3562 = vmul.f32 %v3395, %v3544
      %v3563 = vmul.f32 %v3396, %v3544
      %v3564 = vmul.f32 %v3397, %v3544
      %v3565 = vmul.f32 %v3398, %v3544
      %v3566 = vmul.f32 %v3399, %v3544
      %v3567 = vmul.f32 %v3400, %v3544
      %v3568 = vmul.f32 %v3401, %v3544
      %v3569 = vmul.f32 %v3402, %v3544
      %v3570 = vmul.f32 %v3403, %v3544
      %v3571 = vmul.f32 %v3404, %v3544
      %v3572 = vmul.f32 %v3405, %v3544
      %v3573 = vmul.f32 %v3406, %v3544
      %v3574 = vmul.f32 %v3407, %v3544
      %v3575 = vmul.f32 %v3408, %v3544
      %v3576 = vmul.f32 %v3409, %v3544
      %v3577 = vadd.f32 %v3512, %v3545
      %v3578 = vadd.f32 %v3513, %v3546
      %v3579 = vadd.f32 %v3514, %v3547
      %v3580 = vadd.f32 %v3515, %v3548
      %v3581 = vadd.f32 %v3516, %v3549
      %v3582 = vadd.f32 %v3517, %v3550
      %v3583 = vadd.f32 %v3518, %v3551
      %v3584 = vadd.f32 %v3519, %v3552
      %v3585 = vadd.f32 %v3520, %v3553
      %v3586 = vadd.f32 %v3521, %v3554
      %v3587 = vadd.f32 %v3522, %v3555
      %v3588 = vadd.f32 %v3523, %v3556
      %v3589 = vadd.f32 %v3524, %v3557
      %v3590 = vadd.f32 %v3525, %v3558
      %v3591 = vadd.f32 %v3526, %v3559
      %v3592 = vadd.f32 %v3527, %v3560
      %v3593 = vadd.f32 %v3528, %v3561
      %v3594 = vadd.f32 %v3529, %v3562
      %v3595 = vadd.f32 %v3530, %v3563
      %v3596 = vadd.f32 %v3531, %v3564
      %v3597 = vadd.f32 %v3532, %v3565
      %v3598 = vadd.f32 %v3533, %v3566
      %v3599 = vadd.f32 %v3534, %v3567
      %v3600 = vadd.f32 %v3535, %v3568
      %v3601 = vadd.f32 %v3536, %v3569
      %v3602 = vadd.f32 %v3537, %v3570
      %v3603 = vadd.f32 %v3538, %v3571
      %v3604 = vadd.f32 %v3539, %v3572
      %v3605 = vadd.f32 %v3540, %v3573
      %v3606 = vadd.f32 %v3541, %v3574
      %v3607 = vadd.f32 %v3542, %v3575
      %v3608 = vadd.f32 %v3543, %v3576
      %v3609 = vperm.slane %v570, 2
      %v3610 = vmul.f32 %v3380, %v3609
      %v3611 = vmul.f32 %v3381, %v3609
      %v3612 = vmul.f32 %v3382, %v3609
      %v3613 = vmul.f32 %v3383, %v3609
      %v3614 = vmul.f32 %v3384, %v3609
      %v3615 = vmul.f32 %v3385, %v3609
      %v3616 = vmul.f32 %v3386, %v3609
      %v3617 = vmul.f32 %v3387, %v3609
      %v3618 = vmul.f32 %v3388, %v3609
      %v3619 = vmul.f32 %v3389, %v3609
      %v3620 = vmul.f32 %v3390, %v3609
      %v3621 = vmul.f32 %v3391, %v3609
      %v3622 = vmul.f32 %v3392, %v3609
      %v3623 = vmul.f32 %v3393, %v3609
      %v3624 = vmul.f32 %v3394, %v3609
      %v3625 = vmul.f32 %v3395, %v3609
      %v3626 = vmul.f32 %v3396, %v3609
      %v3627 = vmul.f32 %v3397, %v3609
      %v3628 = vmul.f32 %v3398, %v3609
      %v3629 = vmul.f32 %v3399, %v3609
      %v3630 = vmul.f32 %v3400, %v3609
      %v3631 = vmul.f32 %v3401, %v3609
      %v3632 = vmul.f32 %v3402, %v3609
      %v3633 = vmul.f32 %v3403, %v3609
      %v3634 = vmul.f32 %v3404, %v3609
      %v3635 = vmul.f32 %v3405, %v3609
      %v3636 = vmul.f32 %v3406, %v3609
      %v3637 = vmul.f32 %v3407, %v3609
      %v3638 = vmul.f32 %v3408, %v3609
      %v3639 = vmul.f32 %v3409, %v3609
      %v3640 = vmul.f32 %v3410, %v3609
      %v3641 = vmul.f32 %v3411, %v3609
      %v3642 = vadd.f32 %v3577, %v3610
      %v3643 = vadd.f32 %v3578, %v3611
      %v3644 = vadd.f32 %v3579, %v3612
      %v3645 = vadd.f32 %v3580, %v3613
      %v3646 = vadd.f32 %v3581, %v3614
      %v3647 = vadd.f32 %v3582, %v3615
      %v3648 = vadd.f32 %v3583, %v3616
      %v3649 = vadd.f32 %v3584, %v3617
      %v3650 = vadd.f32 %v3585, %v3618
      %v3651 = vadd.f32 %v3586, %v3619
      %v3652 = vadd.f32 %v3587, %v3620
      %v3653 = vadd.f32 %v3588, %v3621
      %v3654 = vadd.f32 %v3589, %v3622
      %v3655 = vadd.f32 %v3590, %v3623
      %v3656 = vadd.f32 %v3591, %v3624
      %v3657 = vadd.f32 %v3592, %v3625
      %v3658 = vadd.f32 %v3593, %v3626
      %v3659 = vadd.f32 %v3594, %v3627
      %v3660 = vadd.f32 %v3595, %v3628
      %v3661 = vadd.f32 %v3596, %v3629
      %v3662 = vadd.f32 %v3597, %v3630
      %v3663 = vadd.f32 %v3598, %v3631
      %v3664 = vadd.f32 %v3599, %v3632
      %v3665 = vadd.f32 %v3600, %v3633
      %v3666 = vadd.f32 %v3601, %v3634
      %v3667 = vadd.f32 %v3602, %v3635
      %v3668 = vadd.f32 %v3603, %v3636
      %v3669 = vadd.f32 %v3604, %v3637
      %v3670 = vadd.f32 %v3605, %v3638
      %v3671 = vadd.f32 %v3606, %v3639
      %v3672 = vadd.f32 %v3607, %v3640
      %v3673 = vadd.f32 %v3608, %v3641
      %v3674 = vperm.slane %v571, 2
      %v3675 = vmul.f32 %v3382, %v3674
      %v3676 = vmul.f32 %v3383, %v3674
      %v3677 = vmul.f32 %v3384, %v3674
      %v3678 = vmul.f32 %v3385, %v3674
      %v3679 = vmul.f32 %v3386, %v3674
      %v3680 = vmul.f32 %v3387, %v3674
      %v3681 = vmul.f32 %v3388, %v3674
      %v3682 = vmul.f32 %v3389, %v3674
      %v3683 = vmul.f32 %v3390, %v3674
      %v3684 = vmul.f32 %v3391, %v3674
      %v3685 = vmul.f32 %v3392, %v3674
      %v3686 = vmul.f32 %v3393, %v3674
      %v3687 = vmul.f32 %v3394, %v3674
      %v3688 = vmul.f32 %v3395, %v3674
      %v3689 = vmul.f32 %v3396, %v3674
      %v3690 = vmul.f32 %v3397, %v3674
      %v3691 = vmul.f32 %v3398, %v3674
      %v3692 = vmul.f32 %v3399, %v3674
      %v3693 = vmul.f32 %v3400, %v3674
      %v3694 = vmul.f32 %v3401, %v3674
      %v3695 = vmul.f32 %v3402, %v3674
      %v3696 = vmul.f32 %v3403, %v3674
      %v3697 = vmul.f32 %v3404, %v3674
      %v3698 = vmul.f32 %v3405, %v3674
      %v3699 = vmul.f32 %v3406, %v3674
      %v3700 = vmul.f32 %v3407, %v3674
      %v3701 = vmul.f32 %v3408, %v3674
      %v3702 = vmul.f32 %v3409, %v3674
      %v3703 = vmul.f32 %v3410, %v3674
      %v3704 = vmul.f32 %v3411, %v3674
      %v3705 = vmul.f32 %v3412, %v3674
      %v3706 = vmul.f32 %v3413, %v3674
      %v3707 = vadd.f32 %v3642, %v3675
      %v3708 = vadd.f32 %v3643, %v3676
      %v3709 = vadd.f32 %v3644, %v3677
      %v3710 = vadd.f32 %v3645, %v3678
      %v3711 = vadd.f32 %v3646, %v3679
      %v3712 = vadd.f32 %v3647, %v3680
      %v3713 = vadd.f32 %v3648, %v3681
      %v3714 = vadd.f32 %v3649, %v3682
      %v3715 = vadd.f32 %v3650, %v3683
      %v3716 = vadd.f32 %v3651, %v3684
      %v3717 = vadd.f32 %v3652, %v3685
      %v3718 = vadd.f32 %v3653, %v3686
      %v3719 = vadd.f32 %v3654, %v3687
      %v3720 = vadd.f32 %v3655, %v3688
      %v3721 = vadd.f32 %v3656, %v3689
      %v3722 = vadd.f32 %v3657, %v3690
      %v3723 = vadd.f32 %v3658, %v3691
      %v3724 = vadd.f32 %v3659, %v3692
      %v3725 = vadd.f32 %v3660, %v3693
      %v3726 = vadd.f32 %v3661, %v3694
      %v3727 = vadd.f32 %v3662, %v3695
      %v3728 = vadd.f32 %v3663, %v3696
      %v3729 = vadd.f32 %v3664, %v3697
      %v3730 = vadd.f32 %v3665, %v3698
      %v3731 = vadd.f32 %v3666, %v3699
      %v3732 = vadd.f32 %v3667, %v3700
      %v3733 = vadd.f32 %v3668, %v3701
      %v3734 = vadd.f32 %v3669, %v3702
      %v3735 = vadd.f32 %v3670, %v3703
      %v3736 = vadd.f32 %v3671, %v3704
      %v3737 = vadd.f32 %v3672, %v3705
      %v3738 = vadd.f32 %v3673, %v3706
      %v3739 = vld [vmem:[#allocation2 + $0x9] sm:$0xff]
      %v3740 = vld [vmem:[#allocation2 + $0x11] sm:$0xff]
      %v3741 = vld [vmem:[#allocation2 + $0x29] sm:$0xff]
      %v3742 = vld [vmem:[#allocation2 + $0x31] sm:$0xff]
      %v3743 = vld [vmem:[#allocation2 + $0x49] sm:$0xff]
      %v3744 = vld [vmem:[#allocation2 + $0x51] sm:$0xff]
      %v3745 = vld [vmem:[#allocation2 + $0x69] sm:$0xff]
      %v3746 = vld [vmem:[#allocation2 + $0x71] sm:$0xff]
      %v3747 = vld [vmem:[#allocation2 + $0x89] sm:$0xff]
      %v3748 = vld [vmem:[#allocation2 + $0x91] sm:$0xff]
      %v3749 = vld [vmem:[#allocation2 + $0xa9] sm:$0xff]
      %v3750 = vld [vmem:[#allocation2 + $0xb1] sm:$0xff]
      %v3751 = vld [vmem:[#allocation2 + $0xc9] sm:$0xff]
      %v3752 = vld [vmem:[#allocation2 + $0xd1] sm:$0xff]
      %v3753 = vld [vmem:[#allocation2 + $0xe9] sm:$0xff]
      %v3754 = vld [vmem:[#allocation2 + $0xf1] sm:$0xff]
      %v3755 = vld [vmem:[#allocation2 + $0x109] sm:$0xff]
      %v3756 = vld [vmem:[#allocation2 + $0x111] sm:$0xff]
      %v3757 = vld [vmem:[#allocation2 + $0x129] sm:$0xff]
      %v3758 = vld [vmem:[#allocation2 + $0x131] sm:$0xff]
      %v3759 = vld [vmem:[#allocation2 + $0x149] sm:$0xff]
      %v3760 = vld [vmem:[#allocation2 + $0x151] sm:$0xff]
      %v3761 = vld [vmem:[#allocation2 + $0x169] sm:$0xff]
      %v3762 = vld [vmem:[#allocation2 + $0x171] sm:$0xff]
      %v3763 = vld [vmem:[#allocation2 + $0x189] sm:$0xff]
      %v3764 = vld [vmem:[#allocation2 + $0x191] sm:$0xff]
      %v3765 = vld [vmem:[#allocation2 + $0x1a9] sm:$0xff]
      %v3766 = vld [vmem:[#allocation2 + $0x1b1] sm:$0xff]
      %v3767 = vld [vmem:[#allocation2 + $0x1c9] sm:$0xff]
      %v3768 = vld [vmem:[#allocation2 + $0x1d1] sm:$0xff]
      %v3769 = vld [vmem:[#allocation2 + $0x1e9] sm:$0xff]
      %v3770 = vld [vmem:[#allocation2 + $0x1f1] sm:$0xff]
      %v3771 = vld [vmem:[#allocation2 + $0x209] sm:$0xff]
      %v3772 = vld [vmem:[#allocation2 + $0x211] sm:$0xff]
      %v3773 = vld [vmem:[#allocation2 + $0x229] sm:$0xff]
      %v3774 = vld [vmem:[#allocation2 + $0x231] sm:$0xff]
      %v3775 = vld [vmem:[#allocation2 + $0x249] sm:$0xff]
      %v3776 = vld [vmem:[#allocation2 + $0x251] sm:$0xff]
      %v3777 = vld [vmem:[#allocation2 + $0x269] sm:$0xff]
      %v3778 = vld [vmem:[#allocation2 + $0x271] sm:$0xff]
      %v3779 = vperm.slane %v567, 3
      %v3780 = vmul.f32 %v3739, %v3779
      %v3781 = vmul.f32 %v3740, %v3779
      %v3782 = vmul.f32 %v3741, %v3779
      %v3783 = vmul.f32 %v3742, %v3779
      %v3784 = vmul.f32 %v3743, %v3779
      %v3785 = vmul.f32 %v3744, %v3779
      %v3786 = vmul.f32 %v3745, %v3779
      %v3787 = vmul.f32 %v3746, %v3779
      %v3788 = vmul.f32 %v3747, %v3779
      %v3789 = vmul.f32 %v3748, %v3779
      %v3790 = vmul.f32 %v3749, %v3779
      %v3791 = vmul.f32 %v3750, %v3779
      %v3792 = vmul.f32 %v3751, %v3779
      %v3793 = vmul.f32 %v3752, %v3779
      %v3794 = vmul.f32 %v3753, %v3779
      %v3795 = vmul.f32 %v3754, %v3779
      %v3796 = vmul.f32 %v3755, %v3779
      %v3797 = vmul.f32 %v3756, %v3779
      %v3798 = vmul.f32 %v3757, %v3779
      %v3799 = vmul.f32 %v3758, %v3779
      %v3800 = vmul.f32 %v3759, %v3779
      %v3801 = vmul.f32 %v3760, %v3779
      %v3802 = vmul.f32 %v3761, %v3779
      %v3803 = vmul.f32 %v3762, %v3779
      %v3804 = vmul.f32 %v3763, %v3779
      %v3805 = vmul.f32 %v3764, %v3779
      %v3806 = vmul.f32 %v3765, %v3779
      %v3807 = vmul.f32 %v3766, %v3779
      %v3808 = vmul.f32 %v3767, %v3779
      %v3809 = vmul.f32 %v3768, %v3779
      %v3810 = vmul.f32 %v3769, %v3779
      %v3811 = vmul.f32 %v3770, %v3779
      %v3812 = vadd.f32 %v3707, %v3780
      %v3813 = vadd.f32 %v3708, %v3781
      %v3814 = vadd.f32 %v3709, %v3782
      %v3815 = vadd.f32 %v3710, %v3783
      %v3816 = vadd.f32 %v3711, %v3784
      %v3817 = vadd.f32 %v3712, %v3785
      %v3818 = vadd.f32 %v3713, %v3786
      %v3819 = vadd.f32 %v3714, %v3787
      %v3820 = vadd.f32 %v3715, %v3788
      %v3821 = vadd.f32 %v3716, %v3789
      %v3822 = vadd.f32 %v3717, %v3790
      %v3823 = vadd.f32 %v3718, %v3791
      %v3824 = vadd.f32 %v3719, %v3792
      %v3825 = vadd.f32 %v3720, %v3793
      %v3826 = vadd.f32 %v3721, %v3794
      %v3827 = vadd.f32 %v3722, %v3795
      %v3828 = vadd.f32 %v3723, %v3796
      %v3829 = vadd.f32 %v3724, %v3797
      %v3830 = vadd.f32 %v3725, %v3798
      %v3831 = vadd.f32 %v3726, %v3799
      %v3832 = vadd.f32 %v3727, %v3800
      %v3833 = vadd.f32 %v3728, %v3801
      %v3834 = vadd.f32 %v3729, %v3802
      %v3835 = vadd.f32 %v3730, %v3803
      %v3836 = vadd.f32 %v3731, %v3804
      %v3837 = vadd.f32 %v3732, %v3805
      %v3838 = vadd.f32 %v3733, %v3806
      %v3839 = vadd.f32 %v3734, %v3807
      %v3840 = vadd.f32 %v3735, %v3808
      %v3841 = vadd.f32 %v3736, %v3809
      %v3842 = vadd.f32 %v3737, %v3810
      %v3843 = vadd.f32 %v3738, %v3811
      %v3844 = vperm.slane %v568, 3
      %v3845 = vmul.f32 %v3741, %v3844
      %v3846 = vmul.f32 %v3742, %v3844
      %v3847 = vmul.f32 %v3743, %v3844
      %v3848 = vmul.f32 %v3744, %v3844
      %v3849 = vmul.f32 %v3745, %v3844
      %v3850 = vmul.f32 %v3746, %v3844
      %v3851 = vmul.f32 %v3747, %v3844
      %v3852 = vmul.f32 %v3748, %v3844
      %v3853 = vmul.f32 %v3749, %v3844
      %v3854 = vmul.f32 %v3750, %v3844
      %v3855 = vmul.f32 %v3751, %v3844
      %v3856 = vmul.f32 %v3752, %v3844
      %v3857 = vmul.f32 %v3753, %v3844
      %v3858 = vmul.f32 %v3754, %v3844
      %v3859 = vmul.f32 %v3755, %v3844
      %v3860 = vmul.f32 %v3756, %v3844
      %v3861 = vmul.f32 %v3757, %v3844
      %v3862 = vmul.f32 %v3758, %v3844
      %v3863 = vmul.f32 %v3759, %v3844
      %v3864 = vmul.f32 %v3760, %v3844
      %v3865 = vmul.f32 %v3761, %v3844
      %v3866 = vmul.f32 %v3762, %v3844
      %v3867 = vmul.f32 %v3763, %v3844
      %v3868 = vmul.f32 %v3764, %v3844
      %v3869 = vmul.f32 %v3765, %v3844
      %v3870 = vmul.f32 %v3766, %v3844
      %v3871 = vmul.f32 %v3767, %v3844
      %v3872 = vmul.f32 %v3768, %v3844
      %v3873 = vmul.f32 %v3769, %v3844
      %v3874 = vmul.f32 %v3770, %v3844
      %v3875 = vmul.f32 %v3771, %v3844
      %v3876 = vmul.f32 %v3772, %v3844
      %v3877 = vadd.f32 %v3812, %v3845
      %v3878 = vadd.f32 %v3813, %v3846
      %v3879 = vadd.f32 %v3814, %v3847
      %v3880 = vadd.f32 %v3815, %v3848
      %v3881 = vadd.f32 %v3816, %v3849
      %v3882 = vadd.f32 %v3817, %v3850
      %v3883 = vadd.f32 %v3818, %v3851
      %v3884 = vadd.f32 %v3819, %v3852
      %v3885 = vadd.f32 %v3820, %v3853
      %v3886 = vadd.f32 %v3821, %v3854
      %v3887 = vadd.f32 %v3822, %v3855
      %v3888 = vadd.f32 %v3823, %v3856
      %v3889 = vadd.f32 %v3824, %v3857
      %v3890 = vadd.f32 %v3825, %v3858
      %v3891 = vadd.f32 %v3826, %v3859
      %v3892 = vadd.f32 %v3827, %v3860
      %v3893 = vadd.f32 %v3828, %v3861
      %v3894 = vadd.f32 %v3829, %v3862
      %v3895 = vadd.f32 %v3830, %v3863
      %v3896 = vadd.f32 %v3831, %v3864
      %v3897 = vadd.f32 %v3832, %v3865
      %v3898 = vadd.f32 %v3833, %v3866
      %v3899 = vadd.f32 %v3834, %v3867
      %v3900 = vadd.f32 %v3835, %v3868
      %v3901 = vadd.f32 %v3836, %v3869
      %v3902 = vadd.f32 %v3837, %v3870
      %v3903 = vadd.f32 %v3838, %v3871
      %v3904 = vadd.f32 %v3839, %v3872
      %v3905 = vadd.f32 %v3840, %v3873
      %v3906 = vadd.f32 %v3841, %v3874
      %v3907 = vadd.f32 %v3842, %v3875
      %v3908 = vadd.f32 %v3843, %v3876
      %v3909 = vperm.slane %v569, 3
      %v3910 = vmul.f32 %v3743, %v3909
      %v3911 = vmul.f32 %v3744, %v3909
      %v3912 = vmul.f32 %v3745, %v3909
      %v3913 = vmul.f32 %v3746, %v3909
      %v3914 = vmul.f32 %v3747, %v3909
      %v3915 = vmul.f32 %v3748, %v3909
      %v3916 = vmul.f32 %v3749, %v3909
      %v3917 = vmul.f32 %v3750, %v3909
      %v3918 = vmul.f32 %v3751, %v3909
      %v3919 = vmul.f32 %v3752, %v3909
      %v3920 = vmul.f32 %v3753, %v3909
      %v3921 = vmul.f32 %v3754, %v3909
      %v3922 = vmul.f32 %v3755, %v3909
      %v3923 = vmul.f32 %v3756, %v3909
      %v3924 = vmul.f32 %v3757, %v3909
      %v3925 = vmul.f32 %v3758, %v3909
      %v3926 = vmul.f32 %v3759, %v3909
      %v3927 = vmul.f32 %v3760, %v3909
      %v3928 = vmul.f32 %v3761, %v3909
      %v3929 = vmul.f32 %v3762, %v3909
      %v3930 = vmul.f32 %v3763, %v3909
      %v3931 = vmul.f32 %v3764, %v3909
      %v3932 = vmul.f32 %v3765, %v3909
      %v3933 = vmul.f32 %v3766, %v3909
      %v3934 = vmul.f32 %v3767, %v3909
      %v3935 = vmul.f32 %v3768, %v3909
      %v3936 = vmul.f32 %v3769, %v3909
      %v3937 = vmul.f32 %v3770, %v3909
      %v3938 = vmul.f32 %v3771, %v3909
      %v3939 = vmul.f32 %v3772, %v3909
      %v3940 = vmul.f32 %v3773, %v3909
      %v3941 = vmul.f32 %v3774, %v3909
      %v3942 = vadd.f32 %v3877, %v3910
      %v3943 = vadd.f32 %v3878, %v3911
      %v3944 = vadd.f32 %v3879, %v3912
      %v3945 = vadd.f32 %v3880, %v3913
      %v3946 = vadd.f32 %v3881, %v3914
      %v3947 = vadd.f32 %v3882, %v3915
      %v3948 = vadd.f32 %v3883, %v3916
      %v3949 = vadd.f32 %v3884, %v3917
      %v3950 = vadd.f32 %v3885, %v3918
      %v3951 = vadd.f32 %v3886, %v3919
      %v3952 = vadd.f32 %v3887, %v3920
      %v3953 = vadd.f32 %v3888, %v3921
      %v3954 = vadd.f32 %v3889, %v3922
      %v3955 = vadd.f32 %v3890, %v3923
      %v3956 = vadd.f32 %v3891, %v3924
      %v3957 = vadd.f32 %v3892, %v3925
      %v3958 = vadd.f32 %v3893, %v3926
      %v3959 = vadd.f32 %v3894, %v3927
      %v3960 = vadd.f32 %v3895, %v3928
      %v3961 = vadd.f32 %v3896, %v3929
      %v3962 = vadd.f32 %v3897, %v3930
      %v3963 = vadd.f32 %v3898, %v3931
      %v3964 = vadd.f32 %v3899, %v3932
      %v3965 = vadd.f32 %v3900, %v3933
      %v3966 = vadd.f32 %v3901, %v3934
      %v3967 = vadd.f32 %v3902, %v3935
      %v3968 = vadd.f32 %v3903, %v3936
      %v3969 = vadd.f32 %v3904, %v3937
      %v3970 = vadd.f32 %v3905, %v3938
      %v3971 = vadd.f32 %v3906, %v3939
      %v3972 = vadd.f32 %v3907, %v3940
      %v3973 = vadd.f32 %v3908, %v3941
      %v3974 = vperm.slane %v570, 3
      %v3975 = vmul.f32 %v3745, %v3974
      %v3976 = vmul.f32 %v3746, %v3974
      %v3977 = vmul.f32 %v3747, %v3974
      %v3978 = vmul.f32 %v3748, %v3974
      %v3979 = vmul.f32 %v3749, %v3974
      %v3980 = vmul.f32 %v3750, %v3974
      %v3981 = vmul.f32 %v3751, %v3974
      %v3982 = vmul.f32 %v3752, %v3974
      %v3983 = vmul.f32 %v3753, %v3974
      %v3984 = vmul.f32 %v3754, %v3974
      %v3985 = vmul.f32 %v3755, %v3974
      %v3986 = vmul.f32 %v3756, %v3974
      %v3987 = vmul.f32 %v3757, %v3974
      %v3988 = vmul.f32 %v3758, %v3974
      %v3989 = vmul.f32 %v3759, %v3974
      %v3990 = vmul.f32 %v3760, %v3974
      %v3991 = vmul.f32 %v3761, %v3974
      %v3992 = vmul.f32 %v3762, %v3974
      %v3993 = vmul.f32 %v3763, %v3974
      %v3994 = vmul.f32 %v3764, %v3974
      %v3995 = vmul.f32 %v3765, %v3974
      %v3996 = vmul.f32 %v3766, %v3974
      %v3997 = vmul.f32 %v3767, %v3974
      %v3998 = vmul.f32 %v3768, %v3974
      %v3999 = vmul.f32 %v3769, %v3974
      %v4000 = vmul.f32 %v3770, %v3974
      %v4001 = vmul.f32 %v3771, %v3974
      %v4002 = vmul.f32 %v3772, %v3974
      %v4003 = vmul.f32 %v3773, %v3974
      %v4004 = vmul.f32 %v3774, %v3974
      %v4005 = vmul.f32 %v3775, %v3974
      %v4006 = vmul.f32 %v3776, %v3974
      %v4007 = vadd.f32 %v3942, %v3975
      %v4008 = vadd.f32 %v3943, %v3976
      %v4009 = vadd.f32 %v3944, %v3977
      %v4010 = vadd.f32 %v3945, %v3978
      %v4011 = vadd.f32 %v3946, %v3979
      %v4012 = vadd.f32 %v3947, %v3980
      %v4013 = vadd.f32 %v3948, %v3981
      %v4014 = vadd.f32 %v3949, %v3982
      %v4015 = vadd.f32 %v3950, %v3983
      %v4016 = vadd.f32 %v3951, %v3984
      %v4017 = vadd.f32 %v3952, %v3985
      %v4018 = vadd.f32 %v3953, %v3986
      %v4019 = vadd.f32 %v3954, %v3987
      %v4020 = vadd.f32 %v3955, %v3988
      %v4021 = vadd.f32 %v3956, %v3989
      %v4022 = vadd.f32 %v3957, %v3990
      %v4023 = vadd.f32 %v3958, %v3991
      %v4024 = vadd.f32 %v3959, %v3992
      %v4025 = vadd.f32 %v3960, %v3993
      %v4026 = vadd.f32 %v3961, %v3994
      %v4027 = vadd.f32 %v3962, %v3995
      %v4028 = vadd.f32 %v3963, %v3996
      %v4029 = vadd.f32 %v3964, %v3997
      %v4030 = vadd.f32 %v3965, %v3998
      %v4031 = vadd.f32 %v3966, %v3999
      %v4032 = vadd.f32 %v3967, %v4000
      %v4033 = vadd.f32 %v3968, %v4001
      %v4034 = vadd.f32 %v3969, %v4002
      %v4035 = vadd.f32 %v3970, %v4003
      %v4036 = vadd.f32 %v3971, %v4004
      %v4037 = vadd.f32 %v3972, %v4005
      %v4038 = vadd.f32 %v3973, %v4006
      %v4039 = vperm.slane %v571, 3
      %v4040 = vmul.f32 %v3747, %v4039
      %v4041 = vmul.f32 %v3748, %v4039
      %v4042 = vmul.f32 %v3749, %v4039
      %v4043 = vmul.f32 %v3750, %v4039
      %v4044 = vmul.f32 %v3751, %v4039
      %v4045 = vmul.f32 %v3752, %v4039
      %v4046 = vmul.f32 %v3753, %v4039
      %v4047 = vmul.f32 %v3754, %v4039
      %v4048 = vmul.f32 %v3755, %v4039
      %v4049 = vmul.f32 %v3756, %v4039
      %v4050 = vmul.f32 %v3757, %v4039
      %v4051 = vmul.f32 %v3758, %v4039
      %v4052 = vmul.f32 %v3759, %v4039
      %v4053 = vmul.f32 %v3760, %v4039
      %v4054 = vmul.f32 %v3761, %v4039
      %v4055 = vmul.f32 %v3762, %v4039
      %v4056 = vmul.f32 %v3763, %v4039
      %v4057 = vmul.f32 %v3764, %v4039
      %v4058 = vmul.f32 %v3765, %v4039
      %v4059 = vmul.f32 %v3766, %v4039
      %v4060 = vmul.f32 %v3767, %v4039
      %v4061 = vmul.f32 %v3768, %v4039
      %v4062 = vmul.f32 %v3769, %v4039
      %v4063 = vmul.f32 %v3770, %v4039
      %v4064 = vmul.f32 %v3771, %v4039
      %v4065 = vmul.f32 %v3772, %v4039
      %v4066 = vmul.f32 %v3773, %v4039
      %v4067 = vmul.f32 %v3774, %v4039
      %v4068 = vmul.f32 %v3775, %v4039
      %v4069 = vmul.f32 %v3776, %v4039
      %v4070 = vmul.f32 %v3777, %v4039
      %v4071 = vmul.f32 %v3778, %v4039
      %v4072 = vadd.f32 %v4007, %v4040
      %v4073 = vadd.f32 %v4008, %v4041
      %v4074 = vadd.f32 %v4009, %v4042
      %v4075 = vadd.f32 %v4010, %v4043
      %v4076 = vadd.f32 %v4011, %v4044
      %v4077 = vadd.f32 %v4012, %v4045
      %v4078 = vadd.f32 %v4013, %v4046
      %v4079 = vadd.f32 %v4014, %v4047
      %v4080 = vadd.f32 %v4015, %v4048
      %v4081 = vadd.f32 %v4016, %v4049
      %v4082 = vadd.f32 %v4017, %v4050
      %v4083 = vadd.f32 %v4018, %v4051
      %v4084 = vadd.f32 %v4019, %v4052
      %v4085 = vadd.f32 %v4020, %v4053
      %v4086 = vadd.f32 %v4021, %v4054
      %v4087 = vadd.f32 %v4022, %v4055
      %v4088 = vadd.f32 %v4023, %v4056
      %v4089 = vadd.f32 %v4024, %v4057
      %v4090 = vadd.f32 %v4025, %v4058
      %v4091 = vadd.f32 %v4026, %v4059
      %v4092 = vadd.f32 %v4027, %v4060
      %v4093 = vadd.f32 %v4028, %v4061
      %v4094 = vadd.f32 %v4029, %v4062
      %v4095 = vadd.f32 %v4030, %v4063
      %v4096 = vadd.f32 %v4031, %v4064
      %v4097 = vadd.f32 %v4032, %v4065
      %v4098 = vadd.f32 %v4033, %v4066
      %v4099 = vadd.f32 %v4034, %v4067
      %v4100 = vadd.f32 %v4035, %v4068
      %v4101 = vadd.f32 %v4036, %v4069
      %v4102 = vadd.f32 %v4037, %v4070
      %v4103 = vadd.f32 %v4038, %v4071
      %v4104 = vld [vmem:[#allocation2 + $0xa] sm:$0xff]
      %v4105 = vld [vmem:[#allocation2 + $0x12] sm:$0xff]
      %v4106 = vld [vmem:[#allocation2 + $0x2a] sm:$0xff]
      %v4107 = vld [vmem:[#allocation2 + $0x32] sm:$0xff]
      %v4108 = vld [vmem:[#allocation2 + $0x4a] sm:$0xff]
      %v4109 = vld [vmem:[#allocation2 + $0x52] sm:$0xff]
      %v4110 = vld [vmem:[#allocation2 + $0x6a] sm:$0xff]
      %v4111 = vld [vmem:[#allocation2 + $0x72] sm:$0xff]
      %v4112 = vld [vmem:[#allocation2 + $0x8a] sm:$0xff]
      %v4113 = vld [vmem:[#allocation2 + $0x92] sm:$0xff]
      %v4114 = vld [vmem:[#allocation2 + $0xaa] sm:$0xff]
      %v4115 = vld [vmem:[#allocation2 + $0xb2] sm:$0xff]
      %v4116 = vld [vmem:[#allocation2 + $0xca] sm:$0xff]
      %v4117 = vld [vmem:[#allocation2 + $0xd2] sm:$0xff]
      %v4118 = vld [vmem:[#allocation2 + $0xea] sm:$0xff]
      %v4119 = vld [vmem:[#allocation2 + $0xf2] sm:$0xff]
      %v4120 = vld [vmem:[#allocation2 + $0x10a] sm:$0xff]
      %v4121 = vld [vmem:[#allocation2 + $0x112] sm:$0xff]
      %v4122 = vld [vmem:[#allocation2 + $0x12a] sm:$0xff]
      %v4123 = vld [vmem:[#allocation2 + $0x132] sm:$0xff]
      %v4124 = vld [vmem:[#allocation2 + $0x14a] sm:$0xff]
      %v4125 = vld [vmem:[#allocation2 + $0x152] sm:$0xff]
      %v4126 = vld [vmem:[#allocation2 + $0x16a] sm:$0xff]
      %v4127 = vld [vmem:[#allocation2 + $0x172] sm:$0xff]
      %v4128 = vld [vmem:[#allocation2 + $0x18a] sm:$0xff]
      %v4129 = vld [vmem:[#allocation2 + $0x192] sm:$0xff]
      %v4130 = vld [vmem:[#allocation2 + $0x1aa] sm:$0xff]
      %v4131 = vld [vmem:[#allocation2 + $0x1b2] sm:$0xff]
      %v4132 = vld [vmem:[#allocation2 + $0x1ca] sm:$0xff]
      %v4133 = vld [vmem:[#allocation2 + $0x1d2] sm:$0xff]
      %v4134 = vld [vmem:[#allocation2 + $0x1ea] sm:$0xff]
      %v4135 = vld [vmem:[#allocation2 + $0x1f2] sm:$0xff]
      %v4136 = vld [vmem:[#allocation2 + $0x20a] sm:$0xff]
      %v4137 = vld [vmem:[#allocation2 + $0x212] sm:$0xff]
      %v4138 = vld [vmem:[#allocation2 + $0x22a] sm:$0xff]
      %v4139 = vld [vmem:[#allocation2 + $0x232] sm:$0xff]
      %v4140 = vld [vmem:[#allocation2 + $0x24a] sm:$0xff]
      %v4141 = vld [vmem:[#allocation2 + $0x252] sm:$0xff]
      %v4142 = vld [vmem:[#allocation2 + $0x26a] sm:$0xff]
      %v4143 = vld [vmem:[#allocation2 + $0x272] sm:$0xff]
      %v4144 = vperm.slane %v567, 4
      %v4145 = vmul.f32 %v4104, %v4144
      %v4146 = vmul.f32 %v4105, %v4144
      %v4147 = vmul.f32 %v4106, %v4144
      %v4148 = vmul.f32 %v4107, %v4144
      %v4149 = vmul.f32 %v4108, %v4144
      %v4150 = vmul.f32 %v4109, %v4144
      %v4151 = vmul.f32 %v4110, %v4144
      %v4152 = vmul.f32 %v4111, %v4144
      %v4153 = vmul.f32 %v4112, %v4144
      %v4154 = vmul.f32 %v4113, %v4144
      %v4155 = vmul.f32 %v4114, %v4144
      %v4156 = vmul.f32 %v4115, %v4144
      %v4157 = vmul.f32 %v4116, %v4144
      %v4158 = vmul.f32 %v4117, %v4144
      %v4159 = vmul.f32 %v4118, %v4144
      %v4160 = vmul.f32 %v4119, %v4144
      %v4161 = vmul.f32 %v4120, %v4144
      %v4162 = vmul.f32 %v4121, %v4144
      %v4163 = vmul.f32 %v4122, %v4144
      %v4164 = vmul.f32 %v4123, %v4144
      %v4165 = vmul.f32 %v4124, %v4144
      %v4166 = vmul.f32 %v4125, %v4144
      %v4167 = vmul.f32 %v4126, %v4144
      %v4168 = vmul.f32 %v4127, %v4144
      %v4169 = vmul.f32 %v4128, %v4144
      %v4170 = vmul.f32 %v4129, %v4144
      %v4171 = vmul.f32 %v4130, %v4144
      %v4172 = vmul.f32 %v4131, %v4144
      %v4173 = vmul.f32 %v4132, %v4144
      %v4174 = vmul.f32 %v4133, %v4144
      %v4175 = vmul.f32 %v4134, %v4144
      %v4176 = vmul.f32 %v4135, %v4144
      %v4177 = vadd.f32 %v4072, %v4145
      %v4178 = vadd.f32 %v4073, %v4146
      %v4179 = vadd.f32 %v4074, %v4147
      %v4180 = vadd.f32 %v4075, %v4148
      %v4181 = vadd.f32 %v4076, %v4149
      %v4182 = vadd.f32 %v4077, %v4150
      %v4183 = vadd.f32 %v4078, %v4151
      %v4184 = vadd.f32 %v4079, %v4152
      %v4185 = vadd.f32 %v4080, %v4153
      %v4186 = vadd.f32 %v4081, %v4154
      %v4187 = vadd.f32 %v4082, %v4155
      %v4188 = vadd.f32 %v4083, %v4156
      %v4189 = vadd.f32 %v4084, %v4157
      %v4190 = vadd.f32 %v4085, %v4158
      %v4191 = vadd.f32 %v4086, %v4159
      %v4192 = vadd.f32 %v4087, %v4160
      %v4193 = vadd.f32 %v4088, %v4161
      %v4194 = vadd.f32 %v4089, %v4162
      %v4195 = vadd.f32 %v4090, %v4163
      %v4196 = vadd.f32 %v4091, %v4164
      %v4197 = vadd.f32 %v4092, %v4165
      %v4198 = vadd.f32 %v4093, %v4166
      %v4199 = vadd.f32 %v4094, %v4167
      %v4200 = vadd.f32 %v4095, %v4168
      %v4201 = vadd.f32 %v4096, %v4169
      %v4202 = vadd.f32 %v4097, %v4170
      %v4203 = vadd.f32 %v4098, %v4171
      %v4204 = vadd.f32 %v4099, %v4172
      %v4205 = vadd.f32 %v4100, %v4173
      %v4206 = vadd.f32 %v4101, %v4174
      %v4207 = vadd.f32 %v4102, %v4175
      %v4208 = vadd.f32 %v4103, %v4176
      %v4209 = vperm.slane %v568, 4
      %v4210 = vmul.f32 %v4106, %v4209
      %v4211 = vmul.f32 %v4107, %v4209
      %v4212 = vmul.f32 %v4108, %v4209
      %v4213 = vmul.f32 %v4109, %v4209
      %v4214 = vmul.f32 %v4110, %v4209
      %v4215 = vmul.f32 %v4111, %v4209
      %v4216 = vmul.f32 %v4112, %v4209
      %v4217 = vmul.f32 %v4113, %v4209
      %v4218 = vmul.f32 %v4114, %v4209
      %v4219 = vmul.f32 %v4115, %v4209
      %v4220 = vmul.f32 %v4116, %v4209
      %v4221 = vmul.f32 %v4117, %v4209
      %v4222 = vmul.f32 %v4118, %v4209
      %v4223 = vmul.f32 %v4119, %v4209
      %v4224 = vmul.f32 %v4120, %v4209
      %v4225 = vmul.f32 %v4121, %v4209
      %v4226 = vmul.f32 %v4122, %v4209
      %v4227 = vmul.f32 %v4123, %v4209
      %v4228 = vmul.f32 %v4124, %v4209
      %v4229 = vmul.f32 %v4125, %v4209
      %v4230 = vmul.f32 %v4126, %v4209
      %v4231 = vmul.f32 %v4127, %v4209
      %v4232 = vmul.f32 %v4128, %v4209
      %v4233 = vmul.f32 %v4129, %v4209
      %v4234 = vmul.f32 %v4130, %v4209
      %v4235 = vmul.f32 %v4131, %v4209
      %v4236 = vmul.f32 %v4132, %v4209
      %v4237 = vmul.f32 %v4133, %v4209
      %v4238 = vmul.f32 %v4134, %v4209
      %v4239 = vmul.f32 %v4135, %v4209
      %v4240 = vmul.f32 %v4136, %v4209
      %v4241 = vmul.f32 %v4137, %v4209
      %v4242 = vadd.f32 %v4177, %v4210
      %v4243 = vadd.f32 %v4178, %v4211
      %v4244 = vadd.f32 %v4179, %v4212
      %v4245 = vadd.f32 %v4180, %v4213
      %v4246 = vadd.f32 %v4181, %v4214
      %v4247 = vadd.f32 %v4182, %v4215
      %v4248 = vadd.f32 %v4183, %v4216
      %v4249 = vadd.f32 %v4184, %v4217
      %v4250 = vadd.f32 %v4185, %v4218
      %v4251 = vadd.f32 %v4186, %v4219
      %v4252 = vadd.f32 %v4187, %v4220
      %v4253 = vadd.f32 %v4188, %v4221
      %v4254 = vadd.f32 %v4189, %v4222
      %v4255 = vadd.f32 %v4190, %v4223
      %v4256 = vadd.f32 %v4191, %v4224
      %v4257 = vadd.f32 %v4192, %v4225
      %v4258 = vadd.f32 %v4193, %v4226
      %v4259 = vadd.f32 %v4194, %v4227
      %v4260 = vadd.f32 %v4195, %v4228
      %v4261 = vadd.f32 %v4196, %v4229
      %v4262 = vadd.f32 %v4197, %v4230
      %v4263 = vadd.f32 %v4198, %v4231
      %v4264 = vadd.f32 %v4199, %v4232
      %v4265 = vadd.f32 %v4200, %v4233
      %v4266 = vadd.f32 %v4201, %v4234
      %v4267 = vadd.f32 %v4202, %v4235
      %v4268 = vadd.f32 %v4203, %v4236
      %v4269 = vadd.f32 %v4204, %v4237
      %v4270 = vadd.f32 %v4205, %v4238
      %v4271 = vadd.f32 %v4206, %v4239
      %v4272 = vadd.f32 %v4207, %v4240
      %v4273 = vadd.f32 %v4208, %v4241
      %v4274 = vperm.slane %v569, 4
      %v4275 = vmul.f32 %v4108, %v4274
      %v4276 = vmul.f32 %v4109, %v4274
      %v4277 = vmul.f32 %v4110, %v4274
      %v4278 = vmul.f32 %v4111, %v4274
      %v4279 = vmul.f32 %v4112, %v4274
      %v4280 = vmul.f32 %v4113, %v4274
      %v4281 = vmul.f32 %v4114, %v4274
      %v4282 = vmul.f32 %v4115, %v4274
      %v4283 = vmul.f32 %v4116, %v4274
      %v4284 = vmul.f32 %v4117, %v4274
      %v4285 = vmul.f32 %v4118, %v4274
      %v4286 = vmul.f32 %v4119, %v4274
      %v4287 = vmul.f32 %v4120, %v4274
      %v4288 = vmul.f32 %v4121, %v4274
      %v4289 = vmul.f32 %v4122, %v4274
      %v4290 = vmul.f32 %v4123, %v4274
      %v4291 = vmul.f32 %v4124, %v4274
      %v4292 = vmul.f32 %v4125, %v4274
      %v4293 = vmul.f32 %v4126, %v4274
      %v4294 = vmul.f32 %v4127, %v4274
      %v4295 = vmul.f32 %v4128, %v4274
      %v4296 = vmul.f32 %v4129, %v4274
      %v4297 = vmul.f32 %v4130, %v4274
      %v4298 = vmul.f32 %v4131, %v4274
      %v4299 = vmul.f32 %v4132, %v4274
      %v4300 = vmul.f32 %v4133, %v4274
      %v4301 = vmul.f32 %v4134, %v4274
      %v4302 = vmul.f32 %v4135, %v4274
      %v4303 = vmul.f32 %v4136, %v4274
      %v4304 = vmul.f32 %v4137, %v4274
      %v4305 = vmul.f32 %v4138, %v4274
      %v4306 = vmul.f32 %v4139, %v4274
      %v4307 = vadd.f32 %v4242, %v4275
      %v4308 = vadd.f32 %v4243, %v4276
      %v4309 = vadd.f32 %v4244, %v4277
      %v4310 = vadd.f32 %v4245, %v4278
      %v4311 = vadd.f32 %v4246, %v4279
      %v4312 = vadd.f32 %v4247, %v4280
      %v4313 = vadd.f32 %v4248, %v4281
      %v4314 = vadd.f32 %v4249, %v4282
      %v4315 = vadd.f32 %v4250, %v4283
      %v4316 = vadd.f32 %v4251, %v4284
      %v4317 = vadd.f32 %v4252, %v4285
      %v4318 = vadd.f32 %v4253, %v4286
      %v4319 = vadd.f32 %v4254, %v4287
      %v4320 = vadd.f32 %v4255, %v4288
      %v4321 = vadd.f32 %v4256, %v4289
      %v4322 = vadd.f32 %v4257, %v4290
      %v4323 = vadd.f32 %v4258, %v4291
      %v4324 = vadd.f32 %v4259, %v4292
      %v4325 = vadd.f32 %v4260, %v4293
      %v4326 = vadd.f32 %v4261, %v4294
      %v4327 = vadd.f32 %v4262, %v4295
      %v4328 = vadd.f32 %v4263, %v4296
      %v4329 = vadd.f32 %v4264, %v4297
      %v4330 = vadd.f32 %v4265, %v4298
      %v4331 = vadd.f32 %v4266, %v4299
      %v4332 = vadd.f32 %v4267, %v4300
      %v4333 = vadd.f32 %v4268, %v4301
      %v4334 = vadd.f32 %v4269, %v4302
      %v4335 = vadd.f32 %v4270, %v4303
      %v4336 = vadd.f32 %v4271, %v4304
      %v4337 = vadd.f32 %v4272, %v4305
      %v4338 = vadd.f32 %v4273, %v4306
      %v4339 = vperm.slane %v570, 4
      %v4340 = vmul.f32 %v4110, %v4339
      %v4341 = vmul.f32 %v4111, %v4339
      %v4342 = vmul.f32 %v4112, %v4339
      %v4343 = vmul.f32 %v4113, %v4339
      %v4344 = vmul.f32 %v4114, %v4339
      %v4345 = vmul.f32 %v4115, %v4339
      %v4346 = vmul.f32 %v4116, %v4339
      %v4347 = vmul.f32 %v4117, %v4339
      %v4348 = vmul.f32 %v4118, %v4339
      %v4349 = vmul.f32 %v4119, %v4339
      %v4350 = vmul.f32 %v4120, %v4339
      %v4351 = vmul.f32 %v4121, %v4339
      %v4352 = vmul.f32 %v4122, %v4339
      %v4353 = vmul.f32 %v4123, %v4339
      %v4354 = vmul.f32 %v4124, %v4339
      %v4355 = vmul.f32 %v4125, %v4339
      %v4356 = vmul.f32 %v4126, %v4339
      %v4357 = vmul.f32 %v4127, %v4339
      %v4358 = vmul.f32 %v4128, %v4339
      %v4359 = vmul.f32 %v4129, %v4339
      %v4360 = vmul.f32 %v4130, %v4339
      %v4361 = vmul.f32 %v4131, %v4339
      %v4362 = vmul.f32 %v4132, %v4339
      %v4363 = vmul.f32 %v4133, %v4339
      %v4364 = vmul.f32 %v4134, %v4339
      %v4365 = vmul.f32 %v4135, %v4339
      %v4366 = vmul.f32 %v4136, %v4339
      %v4367 = vmul.f32 %v4137, %v4339
      %v4368 = vmul.f32 %v4138, %v4339
      %v4369 = vmul.f32 %v4139, %v4339
      %v4370 = vmul.f32 %v4140, %v4339
      %v4371 = vmul.f32 %v4141, %v4339
      %v4372 = vadd.f32 %v4307, %v4340
      %v4373 = vadd.f32 %v4308, %v4341
      %v4374 = vadd.f32 %v4309, %v4342
      %v4375 = vadd.f32 %v4310, %v4343
      %v4376 = vadd.f32 %v4311, %v4344
      %v4377 = vadd.f32 %v4312, %v4345
      %v4378 = vadd.f32 %v4313, %v4346
      %v4379 = vadd.f32 %v4314, %v4347
      %v4380 = vadd.f32 %v4315, %v4348
      %v4381 = vadd.f32 %v4316, %v4349
      %v4382 = vadd.f32 %v4317, %v4350
      %v4383 = vadd.f32 %v4318, %v4351
      %v4384 = vadd.f32 %v4319, %v4352
      %v4385 = vadd.f32 %v4320, %v4353
      %v4386 = vadd.f32 %v4321, %v4354
      %v4387 = vadd.f32 %v4322, %v4355
      %v4388 = vadd.f32 %v4323, %v4356
      %v4389 = vadd.f32 %v4324, %v4357
      %v4390 = vadd.f32 %v4325, %v4358
      %v4391 = vadd.f32 %v4326, %v4359
      %v4392 = vadd.f32 %v4327, %v4360
      %v4393 = vadd.f32 %v4328, %v4361
      %v4394 = vadd.f32 %v4329, %v4362
      %v4395 = vadd.f32 %v4330, %v4363
      %v4396 = vadd.f32 %v4331, %v4364
      %v4397 = vadd.f32 %v4332, %v4365
      %v4398 = vadd.f32 %v4333, %v4366
      %v4399 = vadd.f32 %v4334, %v4367
      %v4400 = vadd.f32 %v4335, %v4368
      %v4401 = vadd.f32 %v4336, %v4369
      %v4402 = vadd.f32 %v4337, %v4370
      %v4403 = vadd.f32 %v4338, %v4371
      %v4404 = vperm.slane %v571, 4
      %v4405 = vmul.f32 %v4112, %v4404
      %v4406 = vmul.f32 %v4113, %v4404
      %v4407 = vmul.f32 %v4114, %v4404
      %v4408 = vmul.f32 %v4115, %v4404
      %v4409 = vmul.f32 %v4116, %v4404
      %v4410 = vmul.f32 %v4117, %v4404
      %v4411 = vmul.f32 %v4118, %v4404
      %v4412 = vmul.f32 %v4119, %v4404
      %v4413 = vmul.f32 %v4120, %v4404
      %v4414 = vmul.f32 %v4121, %v4404
      %v4415 = vmul.f32 %v4122, %v4404
      %v4416 = vmul.f32 %v4123, %v4404
      %v4417 = vmul.f32 %v4124, %v4404
      %v4418 = vmul.f32 %v4125, %v4404
      %v4419 = vmul.f32 %v4126, %v4404
      %v4420 = vmul.f32 %v4127, %v4404
      %v4421 = vmul.f32 %v4128, %v4404
      %v4422 = vmul.f32 %v4129, %v4404
      %v4423 = vmul.f32 %v4130, %v4404
      %v4424 = vmul.f32 %v4131, %v4404
      %v4425 = vmul.f32 %v4132, %v4404
      %v4426 = vmul.f32 %v4133, %v4404
      %v4427 = vmul.f32 %v4134, %v4404
      %v4428 = vmul.f32 %v4135, %v4404
      %v4429 = vmul.f32 %v4136, %v4404
      %v4430 = vmul.f32 %v4137, %v4404
      %v4431 = vmul.f32 %v4138, %v4404
      %v4432 = vmul.f32 %v4139, %v4404
      %v4433 = vmul.f32 %v4140, %v4404
      %v4434 = vmul.f32 %v4141, %v4404
      %v4435 = vmul.f32 %v4142, %v4404
      %v4436 = vmul.f32 %v4143, %v4404
      %v4437 = vadd.f32 %v4372, %v4405
      %v4438 = vadd.f32 %v4373, %v4406
      %v4439 = vadd.f32 %v4374, %v4407
      %v4440 = vadd.f32 %v4375, %v4408
      %v4441 = vadd.f32 %v4376, %v4409
      %v4442 = vadd.f32 %v4377, %v4410
      %v4443 = vadd.f32 %v4378, %v4411
      %v4444 = vadd.f32 %v4379, %v4412
      %v4445 = vadd.f32 %v4380, %v4413
      %v4446 = vadd.f32 %v4381, %v4414
      %v4447 = vadd.f32 %v4382, %v4415
      %v4448 = vadd.f32 %v4383, %v4416
      %v4449 = vadd.f32 %v4384, %v4417
      %v4450 = vadd.f32 %v4385, %v4418
      %v4451 = vadd.f32 %v4386, %v4419
      %v4452 = vadd.f32 %v4387, %v4420
      %v4453 = vadd.f32 %v4388, %v4421
      %v4454 = vadd.f32 %v4389, %v4422
      %v4455 = vadd.f32 %v4390, %v4423
      %v4456 = vadd.f32 %v4391, %v4424
      %v4457 = vadd.f32 %v4392, %v4425
      %v4458 = vadd.f32 %v4393, %v4426
      %v4459 = vadd.f32 %v4394, %v4427
      %v4460 = vadd.f32 %v4395, %v4428
      %v4461 = vadd.f32 %v4396, %v4429
      %v4462 = vadd.f32 %v4397, %v4430
      %v4463 = vadd.f32 %v4398, %v4431
      %v4464 = vadd.f32 %v4399, %v4432
      %v4465 = vadd.f32 %v4400, %v4433
      %v4466 = vadd.f32 %v4401, %v4434
      %v4467 = vadd.f32 %v4402, %v4435
      %v4468 = vadd.f32 %v4403, %v4436
      %v4470 = vperm.slane %v572, 0
      %v4472 = vmul.f32 %v4437, %v4470
      %v4473 = vmul.f32 %v4438, %v4470
      %v4474 = vmul.f32 %v4439, %v4470
      %v4475 = vmul.f32 %v4440, %v4470
      %v4476 = vmul.f32 %v4441, %v4470
      %v4477 = vmul.f32 %v4442, %v4470
      %v4478 = vmul.f32 %v4443, %v4470
      %v4479 = vmul.f32 %v4444, %v4470
      %v4480 = vmul.f32 %v4445, %v4470
      %v4481 = vmul.f32 %v4446, %v4470
      %v4482 = vmul.f32 %v4447, %v4470
      %v4483 = vmul.f32 %v4448, %v4470
      %v4484 = vmul.f32 %v4449, %v4470
      %v4485 = vmul.f32 %v4450, %v4470
      %v4486 = vmul.f32 %v4451, %v4470
      %v4487 = vmul.f32 %v4452, %v4470
      %v4488 = vmul.f32 %v4453, %v4470
      %v4489 = vmul.f32 %v4454, %v4470
      %v4490 = vmul.f32 %v4455, %v4470
      %v4491 = vmul.f32 %v4456, %v4470
      %v4492 = vmul.f32 %v4457, %v4470
      %v4493 = vmul.f32 %v4458, %v4470
      %v4494 = vmul.f32 %v4459, %v4470
      %v4495 = vmul.f32 %v4460, %v4470
      %v4496 = vmul.f32 %v4461, %v4470
      %v4497 = vmul.f32 %v4462, %v4470
      %v4498 = vmul.f32 %v4463, %v4470
      %v4499 = vmul.f32 %v4464, %v4470
      %v4500 = vmul.f32 %v4465, %v4470
      %v4501 = vmul.f32 %v4466, %v4470
      %v4502 = vmul.f32 %v4467, %v4470
      %v4503 = vmul.f32 %v4468, %v4470
      %v4505 = vperm.slane %v573, 0
      %v4507 = vadd.f32 %v4472, %v4505
      %v4508 = vadd.f32 %v4473, %v4505
      %v4509 = vadd.f32 %v4474, %v4505
      %v4510 = vadd.f32 %v4475, %v4505
      %v4511 = vadd.f32 %v4476, %v4505
      %v4512 = vadd.f32 %v4477, %v4505
      %v4513 = vadd.f32 %v4478, %v4505
      %v4514 = vadd.f32 %v4479, %v4505
      %v4515 = vadd.f32 %v4480, %v4505
      %v4516 = vadd.f32 %v4481, %v4505
      %v4517 = vadd.f32 %v4482, %v4505
      %v4518 = vadd.f32 %v4483, %v4505
      %v4519 = vadd.f32 %v4484, %v4505
      %v4520 = vadd.f32 %v4485, %v4505
      %v4521 = vadd.f32 %v4486, %v4505
      %v4522 = vadd.f32 %v4487, %v4505
      %v4523 = vadd.f32 %v4488, %v4505
      %v4524 = vadd.f32 %v4489, %v4505
      %v4525 = vadd.f32 %v4490, %v4505
      %v4526 = vadd.f32 %v4491, %v4505
      %v4527 = vadd.f32 %v4492, %v4505
      %v4528 = vadd.f32 %v4493, %v4505
      %v4529 = vadd.f32 %v4494, %v4505
      %v4530 = vadd.f32 %v4495, %v4505
      %v4531 = vadd.f32 %v4496, %v4505
      %v4532 = vadd.f32 %v4497, %v4505
      %v4533 = vadd.f32 %v4498, %v4505
      %v4534 = vadd.f32 %v4499, %v4505
      %v4535 = vadd.f32 %v4500, %v4505
      %v4536 = vadd.f32 %v4501, %v4505
      %v4537 = vadd.f32 %v4502, %v4505
      %v4538 = vadd.f32 %v4503, %v4505
      %v4539 = vxor.u32 %v4507, 2147483648
      %v4540 = vxor.u32 %v4508, 2147483648
      %v4541 = vxor.u32 %v4509, 2147483648
      %v4542 = vxor.u32 %v4510, 2147483648
      %v4543 = vxor.u32 %v4511, 2147483648
      %v4544 = vxor.u32 %v4512, 2147483648
      %v4545 = vxor.u32 %v4513, 2147483648
      %v4546 = vxor.u32 %v4514, 2147483648
      %v4547 = vxor.u32 %v4515, 2147483648
      %v4548 = vxor.u32 %v4516, 2147483648
      %v4549 = vxor.u32 %v4517, 2147483648
      %v4550 = vxor.u32 %v4518, 2147483648
      %v4551 = vxor.u32 %v4519, 2147483648
      %v4552 = vxor.u32 %v4520, 2147483648
      %v4553 = vxor.u32 %v4521, 2147483648
      %v4554 = vxor.u32 %v4522, 2147483648
      %v4555 = vxor.u32 %v4523, 2147483648
      %v4556 = vxor.u32 %v4524, 2147483648
      %v4557 = vxor.u32 %v4525, 2147483648
      %v4558 = vxor.u32 %v4526, 2147483648
      %v4559 = vxor.u32 %v4527, 2147483648
      %v4560 = vxor.u32 %v4528, 2147483648
      %v4561 = vxor.u32 %v4529, 2147483648
      %v4562 = vxor.u32 %v4530, 2147483648
      %v4563 = vxor.u32 %v4531, 2147483648
      %v4564 = vxor.u32 %v4532, 2147483648
      %v4565 = vxor.u32 %v4533, 2147483648
      %v4566 = vxor.u32 %v4534, 2147483648
      %v4567 = vxor.u32 %v4535, 2147483648
      %v4568 = vxor.u32 %v4536, 2147483648
      %v4569 = vxor.u32 %v4537, 2147483648
      %v4570 = vxor.u32 %v4538, 2147483648
      %v4571 = vmul.f32 %v4539, 1.442695
      %v4572 = vpow.pop %v4571
      %v4573 = vmul.f32 %v4540, 1.442695
      %v4574 = vpow.pop %v4573
      %v4575 = vmul.f32 %v4541, 1.442695
      %v4576 = vpow.pop %v4575
      %v4577 = vmul.f32 %v4542, 1.442695
      %v4578 = vpow.pop %v4577
      %v4579 = vmul.f32 %v4543, 1.442695
      %v4580 = vpow.pop %v4579
      %v4581 = vmul.f32 %v4544, 1.442695
      %v4582 = vpow.pop %v4581
      %v4583 = vmul.f32 %v4545, 1.442695
      %v4584 = vpow.pop %v4583
      %v4585 = vmul.f32 %v4546, 1.442695
      %v4586 = vpow.pop %v4585
      %v4587 = vmul.f32 %v4547, 1.442695
      %v4588 = vpow.pop %v4587
      %v4589 = vmul.f32 %v4548, 1.442695
      %v4590 = vpow.pop %v4589
      %v4591 = vmul.f32 %v4549, 1.442695
      %v4592 = vpow.pop %v4591
      %v4593 = vmul.f32 %v4550, 1.442695
      %v4594 = vpow.pop %v4593
      %v4595 = vmul.f32 %v4551, 1.442695
      %v4596 = vpow.pop %v4595
      %v4597 = vmul.f32 %v4552, 1.442695
      %v4598 = vpow.pop %v4597
      %v4599 = vmul.f32 %v4553, 1.442695
      %v4600 = vpow.pop %v4599
      %v4601 = vmul.f32 %v4554, 1.442695
      %v4602 = vpow.pop %v4601
      %v4603 = vmul.f32 %v4555, 1.442695
      %v4604 = vpow.pop %v4603
      %v4605 = vmul.f32 %v4556, 1.442695
      %v4606 = vpow.pop %v4605
      %v4607 = vmul.f32 %v4557, 1.442695
      %v4608 = vpow.pop %v4607
      %v4609 = vmul.f32 %v4558, 1.442695
      %v4610 = vpow.pop %v4609
      %v4611 = vmul.f32 %v4559, 1.442695
      %v4612 = vpow.pop %v4611
      %v4613 = vmul.f32 %v4560, 1.442695
      %v4614 = vpow.pop %v4613
      %v4615 = vmul.f32 %v4561, 1.442695
      %v4616 = vpow.pop %v4615
      %v4617 = vmul.f32 %v4562, 1.442695
      %v4618 = vpow.pop %v4617
      %v4619 = vmul.f32 %v4563, 1.442695
      %v4620 = vpow.pop %v4619
      %v4621 = vmul.f32 %v4564, 1.442695
      %v4622 = vpow.pop %v4621
      %v4623 = vmul.f32 %v4565, 1.442695
      %v4624 = vpow.pop %v4623
      %v4625 = vmul.f32 %v4566, 1.442695
      %v4626 = vpow.pop %v4625
      %v4627 = vmul.f32 %v4567, 1.442695
      %v4628 = vpow.pop %v4627
      %v4629 = vmul.f32 %v4568, 1.442695
      %v4630 = vpow.pop %v4629
      %v4631 = vmul.f32 %v4569, 1.442695
      %v4632 = vpow.pop %v4631
      %v4633 = vmul.f32 %v4570, 1.442695
      %v4634 = vpow.pop %v4633
      %v4635 = vadd.f32 %v4572, 1.0
      %v4636 = vadd.f32 %v4574, 1.0
      %v4637 = vadd.f32 %v4576, 1.0
      %v4638 = vadd.f32 %v4578, 1.0
      %v4639 = vadd.f32 %v4580, 1.0
      %v4640 = vadd.f32 %v4582, 1.0
      %v4641 = vadd.f32 %v4584, 1.0
      %v4642 = vadd.f32 %v4586, 1.0
      %v4643 = vadd.f32 %v4588, 1.0
      %v4644 = vadd.f32 %v4590, 1.0
      %v4645 = vadd.f32 %v4592, 1.0
      %v4646 = vadd.f32 %v4594, 1.0
      %v4647 = vadd.f32 %v4596, 1.0
      %v4648 = vadd.f32 %v4598, 1.0
      %v4649 = vadd.f32 %v4600, 1.0
      %v4650 = vadd.f32 %v4602, 1.0
      %v4651 = vadd.f32 %v4604, 1.0
      %v4652 = vadd.f32 %v4606, 1.0
      %v4653 = vadd.f32 %v4608, 1.0
      %v4654 = vadd.f32 %v4610, 1.0
      %v4655 = vadd.f32 %v4612, 1.0
      %v4656 = vadd.f32 %v4614, 1.0
      %v4657 = vadd.f32 %v4616, 1.0
      %v4658 = vadd.f32 %v4618, 1.0
      %v4659 = vadd.f32 %v4620, 1.0
      %v4660 = vadd.f32 %v4622, 1.0
      %v4661 = vadd.f32 %v4624, 1.0
      %v4662 = vadd.f32 %v4626, 1.0
      %v4663 = vadd.f32 %v4628, 1.0
      %v4664 = vadd.f32 %v4630, 1.0
      %v4665 = vadd.f32 %v4632, 1.0
      %v4666 = vadd.f32 %v4634, 1.0
      %v4667 = vrcp.pop %v4635
      %v4668 = vmul.f32 %v4635, %v4667
      %v4669 = vsub.f32 1.0, %v4668
      %v4670 = vmul.f32 %v4667, %v4669
      %v4671 = vadd.f32 %v4667, %v4670
      %vm4672 = vweird.f32 %v4635
      %vm4673 = vweird.f32 %v4667
      %vm4674 = vmor %vm4672, %vm4673
      %v4675 = vsel %vm4674, %v4667, %v4671
      %v4676 = vand.u32 2147483647, %v4635
      %vm4677 = vcmp.eq.f32.partialorder %v4676, 8.507059e+37
      %v4678 = vand.u32 %v4635, 2147483648
      %v4679 = vor.u32 1.1754944e-38, %v4678
      %v4680 = vsel %vm4677, %v4679, %v4675
      %v4681 = vmul.f32 1.0, %v4680
      %v4682 = vrcp.pop %v4636
      %v4683 = vmul.f32 %v4636, %v4682
      %v4684 = vsub.f32 1.0, %v4683
      %v4685 = vmul.f32 %v4682, %v4684
      %v4686 = vadd.f32 %v4682, %v4685
      %vm4687 = vweird.f32 %v4636
      %vm4688 = vweird.f32 %v4682
      %vm4689 = vmor %vm4687, %vm4688
      %v4690 = vsel %vm4689, %v4682, %v4686
      %v4691 = vand.u32 2147483647, %v4636
      %vm4692 = vcmp.eq.f32.partialorder %v4691, 8.507059e+37
      %v4693 = vand.u32 %v4636, 2147483648
      %v4694 = vor.u32 1.1754944e-38, %v4693
      %v4695 = vsel %vm4692, %v4694, %v4690
      %v4696 = vmul.f32 1.0, %v4695
      %v4697 = vrcp.pop %v4637
      %v4698 = vmul.f32 %v4637, %v4697
      %v4699 = vsub.f32 1.0, %v4698
      %v4700 = vmul.f32 %v4697, %v4699
      %v4701 = vadd.f32 %v4697, %v4700
      %vm4702 = vweird.f32 %v4637
      %vm4703 = vweird.f32 %v4697
      %vm4704 = vmor %vm4702, %vm4703
      %v4705 = vsel %vm4704, %v4697, %v4701
      %v4706 = vand.u32 2147483647, %v4637
      %vm4707 = vcmp.eq.f32.partialorder %v4706, 8.507059e+37
      %v4708 = vand.u32 %v4637, 2147483648
      %v4709 = vor.u32 1.1754944e-38, %v4708
      %v4710 = vsel %vm4707, %v4709, %v4705
      %v4711 = vmul.f32 1.0, %v4710
      %v4712 = vrcp.pop %v4638
      %v4713 = vmul.f32 %v4638, %v4712
      %v4714 = vsub.f32 1.0, %v4713
      %v4715 = vmul.f32 %v4712, %v4714
      %v4716 = vadd.f32 %v4712, %v4715
      %vm4717 = vweird.f32 %v4638
      %vm4718 = vweird.f32 %v4712
      %vm4719 = vmor %vm4717, %vm4718
      %v4720 = vsel %vm4719, %v4712, %v4716
      %v4721 = vand.u32 2147483647, %v4638
      %vm4722 = vcmp.eq.f32.partialorder %v4721, 8.507059e+37
      %v4723 = vand.u32 %v4638, 2147483648
      %v4724 = vor.u32 1.1754944e-38, %v4723
      %v4725 = vsel %vm4722, %v4724, %v4720
      %v4726 = vmul.f32 1.0, %v4725
      %v4727 = vrcp.pop %v4639
      %v4728 = vmul.f32 %v4639, %v4727
      %v4729 = vsub.f32 1.0, %v4728
      %v4730 = vmul.f32 %v4727, %v4729
      %v4731 = vadd.f32 %v4727, %v4730
      %vm4732 = vweird.f32 %v4639
      %vm4733 = vweird.f32 %v4727
      %vm4734 = vmor %vm4732, %vm4733
      %v4735 = vsel %vm4734, %v4727, %v4731
      %v4736 = vand.u32 2147483647, %v4639
      %vm4737 = vcmp.eq.f32.partialorder %v4736, 8.507059e+37
      %v4738 = vand.u32 %v4639, 2147483648
      %v4739 = vor.u32 1.1754944e-38, %v4738
      %v4740 = vsel %vm4737, %v4739, %v4735
      %v4741 = vmul.f32 1.0, %v4740
      %v4742 = vrcp.pop %v4640
      %v4743 = vmul.f32 %v4640, %v4742
      %v4744 = vsub.f32 1.0, %v4743
      %v4745 = vmul.f32 %v4742, %v4744
      %v4746 = vadd.f32 %v4742, %v4745
      %vm4747 = vweird.f32 %v4640
      %vm4748 = vweird.f32 %v4742
      %vm4749 = vmor %vm4747, %vm4748
      %v4750 = vsel %vm4749, %v4742, %v4746
      %v4751 = vand.u32 2147483647, %v4640
      %vm4752 = vcmp.eq.f32.partialorder %v4751, 8.507059e+37
      %v4753 = vand.u32 %v4640, 2147483648
      %v4754 = vor.u32 1.1754944e-38, %v4753
      %v4755 = vsel %vm4752, %v4754, %v4750
      %v4756 = vmul.f32 1.0, %v4755
      %v4757 = vrcp.pop %v4641
      %v4758 = vmul.f32 %v4641, %v4757
      %v4759 = vsub.f32 1.0, %v4758
      %v4760 = vmul.f32 %v4757, %v4759
      %v4761 = vadd.f32 %v4757, %v4760
      %vm4762 = vweird.f32 %v4641
      %vm4763 = vweird.f32 %v4757
      %vm4764 = vmor %vm4762, %vm4763
      %v4765 = vsel %vm4764, %v4757, %v4761
      %v4766 = vand.u32 2147483647, %v4641
      %vm4767 = vcmp.eq.f32.partialorder %v4766, 8.507059e+37
      %v4768 = vand.u32 %v4641, 2147483648
      %v4769 = vor.u32 1.1754944e-38, %v4768
      %v4770 = vsel %vm4767, %v4769, %v4765
      %v4771 = vmul.f32 1.0, %v4770
      %v4772 = vrcp.pop %v4642
      %v4773 = vmul.f32 %v4642, %v4772
      %v4774 = vsub.f32 1.0, %v4773
      %v4775 = vmul.f32 %v4772, %v4774
      %v4776 = vadd.f32 %v4772, %v4775
      %vm4777 = vweird.f32 %v4642
      %vm4778 = vweird.f32 %v4772
      %vm4779 = vmor %vm4777, %vm4778
      %v4780 = vsel %vm4779, %v4772, %v4776
      %v4781 = vand.u32 2147483647, %v4642
      %vm4782 = vcmp.eq.f32.partialorder %v4781, 8.507059e+37
      %v4783 = vand.u32 %v4642, 2147483648
      %v4784 = vor.u32 1.1754944e-38, %v4783
      %v4785 = vsel %vm4782, %v4784, %v4780
      %v4786 = vmul.f32 1.0, %v4785
      %v4787 = vrcp.pop %v4643
      %v4788 = vmul.f32 %v4643, %v4787
      %v4789 = vsub.f32 1.0, %v4788
      %v4790 = vmul.f32 %v4787, %v4789
      %v4791 = vadd.f32 %v4787, %v4790
      %vm4792 = vweird.f32 %v4643
      %vm4793 = vweird.f32 %v4787
      %vm4794 = vmor %vm4792, %vm4793
      %v4795 = vsel %vm4794, %v4787, %v4791
      %v4796 = vand.u32 2147483647, %v4643
      %vm4797 = vcmp.eq.f32.partialorder %v4796, 8.507059e+37
      %v4798 = vand.u32 %v4643, 2147483648
      %v4799 = vor.u32 1.1754944e-38, %v4798
      %v4800 = vsel %vm4797, %v4799, %v4795
      %v4801 = vmul.f32 1.0, %v4800
      %v4802 = vrcp.pop %v4644
      %v4803 = vmul.f32 %v4644, %v4802
      %v4804 = vsub.f32 1.0, %v4803
      %v4805 = vmul.f32 %v4802, %v4804
      %v4806 = vadd.f32 %v4802, %v4805
      %vm4807 = vweird.f32 %v4644
      %vm4808 = vweird.f32 %v4802
      %vm4809 = vmor %vm4807, %vm4808
      %v4810 = vsel %vm4809, %v4802, %v4806
      %v4811 = vand.u32 2147483647, %v4644
      %vm4812 = vcmp.eq.f32.partialorder %v4811, 8.507059e+37
      %v4813 = vand.u32 %v4644, 2147483648
      %v4814 = vor.u32 1.1754944e-38, %v4813
      %v4815 = vsel %vm4812, %v4814, %v4810
      %v4816 = vmul.f32 1.0, %v4815
      %v4817 = vrcp.pop %v4645
      %v4818 = vmul.f32 %v4645, %v4817
      %v4819 = vsub.f32 1.0, %v4818
      %v4820 = vmul.f32 %v4817, %v4819
      %v4821 = vadd.f32 %v4817, %v4820
      %vm4822 = vweird.f32 %v4645
      %vm4823 = vweird.f32 %v4817
      %vm4824 = vmor %vm4822, %vm4823
      %v4825 = vsel %vm4824, %v4817, %v4821
      %v4826 = vand.u32 2147483647, %v4645
      %vm4827 = vcmp.eq.f32.partialorder %v4826, 8.507059e+37
      %v4828 = vand.u32 %v4645, 2147483648
      %v4829 = vor.u32 1.1754944e-38, %v4828
      %v4830 = vsel %vm4827, %v4829, %v4825
      %v4831 = vmul.f32 1.0, %v4830
      %v4832 = vrcp.pop %v4646
      %v4833 = vmul.f32 %v4646, %v4832
      %v4834 = vsub.f32 1.0, %v4833
      %v4835 = vmul.f32 %v4832, %v4834
      %v4836 = vadd.f32 %v4832, %v4835
      %vm4837 = vweird.f32 %v4646
      %vm4838 = vweird.f32 %v4832
      %vm4839 = vmor %vm4837, %vm4838
      %v4840 = vsel %vm4839, %v4832, %v4836
      %v4841 = vand.u32 2147483647, %v4646
      %vm4842 = vcmp.eq.f32.partialorder %v4841, 8.507059e+37
      %v4843 = vand.u32 %v4646, 2147483648
      %v4844 = vor.u32 1.1754944e-38, %v4843
      %v4845 = vsel %vm4842, %v4844, %v4840
      %v4846 = vmul.f32 1.0, %v4845
      %v4847 = vrcp.pop %v4647
      %v4848 = vmul.f32 %v4647, %v4847
      %v4849 = vsub.f32 1.0, %v4848
      %v4850 = vmul.f32 %v4847, %v4849
      %v4851 = vadd.f32 %v4847, %v4850
      %vm4852 = vweird.f32 %v4647
      %vm4853 = vweird.f32 %v4847
      %vm4854 = vmor %vm4852, %vm4853
      %v4855 = vsel %vm4854, %v4847, %v4851
      %v4856 = vand.u32 2147483647, %v4647
      %vm4857 = vcmp.eq.f32.partialorder %v4856, 8.507059e+37
      %v4858 = vand.u32 %v4647, 2147483648
      %v4859 = vor.u32 1.1754944e-38, %v4858
      %v4860 = vsel %vm4857, %v4859, %v4855
      %v4861 = vmul.f32 1.0, %v4860
      %v4862 = vrcp.pop %v4648
      %v4863 = vmul.f32 %v4648, %v4862
      %v4864 = vsub.f32 1.0, %v4863
      %v4865 = vmul.f32 %v4862, %v4864
      %v4866 = vadd.f32 %v4862, %v4865
      %vm4867 = vweird.f32 %v4648
      %vm4868 = vweird.f32 %v4862
      %vm4869 = vmor %vm4867, %vm4868
      %v4870 = vsel %vm4869, %v4862, %v4866
      %v4871 = vand.u32 2147483647, %v4648
      %vm4872 = vcmp.eq.f32.partialorder %v4871, 8.507059e+37
      %v4873 = vand.u32 %v4648, 2147483648
      %v4874 = vor.u32 1.1754944e-38, %v4873
      %v4875 = vsel %vm4872, %v4874, %v4870
      %v4876 = vmul.f32 1.0, %v4875
      %v4877 = vrcp.pop %v4649
      %v4878 = vmul.f32 %v4649, %v4877
      %v4879 = vsub.f32 1.0, %v4878
      %v4880 = vmul.f32 %v4877, %v4879
      %v4881 = vadd.f32 %v4877, %v4880
      %vm4882 = vweird.f32 %v4649
      %vm4883 = vweird.f32 %v4877
      %vm4884 = vmor %vm4882, %vm4883
      %v4885 = vsel %vm4884, %v4877, %v4881
      %v4886 = vand.u32 2147483647, %v4649
      %vm4887 = vcmp.eq.f32.partialorder %v4886, 8.507059e+37
      %v4888 = vand.u32 %v4649, 2147483648
      %v4889 = vor.u32 1.1754944e-38, %v4888
      %v4890 = vsel %vm4887, %v4889, %v4885
      %v4891 = vmul.f32 1.0, %v4890
      %v4892 = vrcp.pop %v4650
      %v4893 = vmul.f32 %v4650, %v4892
      %v4894 = vsub.f32 1.0, %v4893
      %v4895 = vmul.f32 %v4892, %v4894
      %v4896 = vadd.f32 %v4892, %v4895
      %vm4897 = vweird.f32 %v4650
      %vm4898 = vweird.f32 %v4892
      %vm4899 = vmor %vm4897, %vm4898
      %v4900 = vsel %vm4899, %v4892, %v4896
      %v4901 = vand.u32 2147483647, %v4650
      %vm4902 = vcmp.eq.f32.partialorder %v4901, 8.507059e+37
      %v4903 = vand.u32 %v4650, 2147483648
      %v4904 = vor.u32 1.1754944e-38, %v4903
      %v4905 = vsel %vm4902, %v4904, %v4900
      %v4906 = vmul.f32 1.0, %v4905
      %v4907 = vrcp.pop %v4651
      %v4908 = vmul.f32 %v4651, %v4907
      %v4909 = vsub.f32 1.0, %v4908
      %v4910 = vmul.f32 %v4907, %v4909
      %v4911 = vadd.f32 %v4907, %v4910
      %vm4912 = vweird.f32 %v4651
      %vm4913 = vweird.f32 %v4907
      %vm4914 = vmor %vm4912, %vm4913
      %v4915 = vsel %vm4914, %v4907, %v4911
      %v4916 = vand.u32 2147483647, %v4651
      %vm4917 = vcmp.eq.f32.partialorder %v4916, 8.507059e+37
      %v4918 = vand.u32 %v4651, 2147483648
      %v4919 = vor.u32 1.1754944e-38, %v4918
      %v4920 = vsel %vm4917, %v4919, %v4915
      %v4921 = vmul.f32 1.0, %v4920
      %v4922 = vrcp.pop %v4652
      %v4923 = vmul.f32 %v4652, %v4922
      %v4924 = vsub.f32 1.0, %v4923
      %v4925 = vmul.f32 %v4922, %v4924
      %v4926 = vadd.f32 %v4922, %v4925
      %vm4927 = vweird.f32 %v4652
      %vm4928 = vweird.f32 %v4922
      %vm4929 = vmor %vm4927, %vm4928
      %v4930 = vsel %vm4929, %v4922, %v4926
      %v4931 = vand.u32 2147483647, %v4652
      %vm4932 = vcmp.eq.f32.partialorder %v4931, 8.507059e+37
      %v4933 = vand.u32 %v4652, 2147483648
      %v4934 = vor.u32 1.1754944e-38, %v4933
      %v4935 = vsel %vm4932, %v4934, %v4930
      %v4936 = vmul.f32 1.0, %v4935
      %v4937 = vrcp.pop %v4653
      %v4938 = vmul.f32 %v4653, %v4937
      %v4939 = vsub.f32 1.0, %v4938
      %v4940 = vmul.f32 %v4937, %v4939
      %v4941 = vadd.f32 %v4937, %v4940
      %vm4942 = vweird.f32 %v4653
      %vm4943 = vweird.f32 %v4937
      %vm4944 = vmor %vm4942, %vm4943
      %v4945 = vsel %vm4944, %v4937, %v4941
      %v4946 = vand.u32 2147483647, %v4653
      %vm4947 = vcmp.eq.f32.partialorder %v4946, 8.507059e+37
      %v4948 = vand.u32 %v4653, 2147483648
      %v4949 = vor.u32 1.1754944e-38, %v4948
      %v4950 = vsel %vm4947, %v4949, %v4945
      %v4951 = vmul.f32 1.0, %v4950
      %v4952 = vrcp.pop %v4654
      %v4953 = vmul.f32 %v4654, %v4952
      %v4954 = vsub.f32 1.0, %v4953
      %v4955 = vmul.f32 %v4952, %v4954
      %v4956 = vadd.f32 %v4952, %v4955
      %vm4957 = vweird.f32 %v4654
      %vm4958 = vweird.f32 %v4952
      %vm4959 = vmor %vm4957, %vm4958
      %v4960 = vsel %vm4959, %v4952, %v4956
      %v4961 = vand.u32 2147483647, %v4654
      %vm4962 = vcmp.eq.f32.partialorder %v4961, 8.507059e+37
      %v4963 = vand.u32 %v4654, 2147483648
      %v4964 = vor.u32 1.1754944e-38, %v4963
      %v4965 = vsel %vm4962, %v4964, %v4960
      %v4966 = vmul.f32 1.0, %v4965
      %v4967 = vrcp.pop %v4655
      %v4968 = vmul.f32 %v4655, %v4967
      %v4969 = vsub.f32 1.0, %v4968
      %v4970 = vmul.f32 %v4967, %v4969
      %v4971 = vadd.f32 %v4967, %v4970
      %vm4972 = vweird.f32 %v4655
      %vm4973 = vweird.f32 %v4967
      %vm4974 = vmor %vm4972, %vm4973
      %v4975 = vsel %vm4974, %v4967, %v4971
      %v4976 = vand.u32 2147483647, %v4655
      %vm4977 = vcmp.eq.f32.partialorder %v4976, 8.507059e+37
      %v4978 = vand.u32 %v4655, 2147483648
      %v4979 = vor.u32 1.1754944e-38, %v4978
      %v4980 = vsel %vm4977, %v4979, %v4975
      %v4981 = vmul.f32 1.0, %v4980
      %v4982 = vrcp.pop %v4656
      %v4983 = vmul.f32 %v4656, %v4982
      %v4984 = vsub.f32 1.0, %v4983
      %v4985 = vmul.f32 %v4982, %v4984
      %v4986 = vadd.f32 %v4982, %v4985
      %vm4987 = vweird.f32 %v4656
      %vm4988 = vweird.f32 %v4982
      %vm4989 = vmor %vm4987, %vm4988
      %v4990 = vsel %vm4989, %v4982, %v4986
      %v4991 = vand.u32 2147483647, %v4656
      %vm4992 = vcmp.eq.f32.partialorder %v4991, 8.507059e+37
      %v4993 = vand.u32 %v4656, 2147483648
      %v4994 = vor.u32 1.1754944e-38, %v4993
      %v4995 = vsel %vm4992, %v4994, %v4990
      %v4996 = vmul.f32 1.0, %v4995
      %v4997 = vrcp.pop %v4657
      %v4998 = vmul.f32 %v4657, %v4997
      %v4999 = vsub.f32 1.0, %v4998
      %v5000 = vmul.f32 %v4997, %v4999
      %v5001 = vadd.f32 %v4997, %v5000
      %vm5002 = vweird.f32 %v4657
      %vm5003 = vweird.f32 %v4997
      %vm5004 = vmor %vm5002, %vm5003
      %v5005 = vsel %vm5004, %v4997, %v5001
      %v5006 = vand.u32 2147483647, %v4657
      %vm5007 = vcmp.eq.f32.partialorder %v5006, 8.507059e+37
      %v5008 = vand.u32 %v4657, 2147483648
      %v5009 = vor.u32 1.1754944e-38, %v5008
      %v5010 = vsel %vm5007, %v5009, %v5005
      %v5011 = vmul.f32 1.0, %v5010
      %v5012 = vrcp.pop %v4658
      %v5013 = vmul.f32 %v4658, %v5012
      %v5014 = vsub.f32 1.0, %v5013
      %v5015 = vmul.f32 %v5012, %v5014
      %v5016 = vadd.f32 %v5012, %v5015
      %vm5017 = vweird.f32 %v4658
      %vm5018 = vweird.f32 %v5012
      %vm5019 = vmor %vm5017, %vm5018
      %v5020 = vsel %vm5019, %v5012, %v5016
      %v5021 = vand.u32 2147483647, %v4658
      %vm5022 = vcmp.eq.f32.partialorder %v5021, 8.507059e+37
      %v5023 = vand.u32 %v4658, 2147483648
      %v5024 = vor.u32 1.1754944e-38, %v5023
      %v5025 = vsel %vm5022, %v5024, %v5020
      %v5026 = vmul.f32 1.0, %v5025
      %v5027 = vrcp.pop %v4659
      %v5028 = vmul.f32 %v4659, %v5027
      %v5029 = vsub.f32 1.0, %v5028
      %v5030 = vmul.f32 %v5027, %v5029
      %v5031 = vadd.f32 %v5027, %v5030
      %vm5032 = vweird.f32 %v4659
      %vm5033 = vweird.f32 %v5027
      %vm5034 = vmor %vm5032, %vm5033
      %v5035 = vsel %vm5034, %v5027, %v5031
      %v5036 = vand.u32 2147483647, %v4659
      %vm5037 = vcmp.eq.f32.partialorder %v5036, 8.507059e+37
      %v5038 = vand.u32 %v4659, 2147483648
      %v5039 = vor.u32 1.1754944e-38, %v5038
      %v5040 = vsel %vm5037, %v5039, %v5035
      %v5041 = vmul.f32 1.0, %v5040
      %v5042 = vrcp.pop %v4660
      %v5043 = vmul.f32 %v4660, %v5042
      %v5044 = vsub.f32 1.0, %v5043
      %v5045 = vmul.f32 %v5042, %v5044
      %v5046 = vadd.f32 %v5042, %v5045
      %vm5047 = vweird.f32 %v4660
      %vm5048 = vweird.f32 %v5042
      %vm5049 = vmor %vm5047, %vm5048
      %v5050 = vsel %vm5049, %v5042, %v5046
      %v5051 = vand.u32 2147483647, %v4660
      %vm5052 = vcmp.eq.f32.partialorder %v5051, 8.507059e+37
      %v5053 = vand.u32 %v4660, 2147483648
      %v5054 = vor.u32 1.1754944e-38, %v5053
      %v5055 = vsel %vm5052, %v5054, %v5050
      %v5056 = vmul.f32 1.0, %v5055
      %v5057 = vrcp.pop %v4661
      %v5058 = vmul.f32 %v4661, %v5057
      %v5059 = vsub.f32 1.0, %v5058
      %v5060 = vmul.f32 %v5057, %v5059
      %v5061 = vadd.f32 %v5057, %v5060
      %vm5062 = vweird.f32 %v4661
      %vm5063 = vweird.f32 %v5057
      %vm5064 = vmor %vm5062, %vm5063
      %v5065 = vsel %vm5064, %v5057, %v5061
      %v5066 = vand.u32 2147483647, %v4661
      %vm5067 = vcmp.eq.f32.partialorder %v5066, 8.507059e+37
      %v5068 = vand.u32 %v4661, 2147483648
      %v5069 = vor.u32 1.1754944e-38, %v5068
      %v5070 = vsel %vm5067, %v5069, %v5065
      %v5071 = vmul.f32 1.0, %v5070
      %v5072 = vrcp.pop %v4662
      %v5073 = vmul.f32 %v4662, %v5072
      %v5074 = vsub.f32 1.0, %v5073
      %v5075 = vmul.f32 %v5072, %v5074
      %v5076 = vadd.f32 %v5072, %v5075
      %vm5077 = vweird.f32 %v4662
      %vm5078 = vweird.f32 %v5072
      %vm5079 = vmor %vm5077, %vm5078
      %v5080 = vsel %vm5079, %v5072, %v5076
      %v5081 = vand.u32 2147483647, %v4662
      %vm5082 = vcmp.eq.f32.partialorder %v5081, 8.507059e+37
      %v5083 = vand.u32 %v4662, 2147483648
      %v5084 = vor.u32 1.1754944e-38, %v5083
      %v5085 = vsel %vm5082, %v5084, %v5080
      %v5086 = vmul.f32 1.0, %v5085
      %v5087 = vrcp.pop %v4663
      %v5088 = vmul.f32 %v4663, %v5087
      %v5089 = vsub.f32 1.0, %v5088
      %v5090 = vmul.f32 %v5087, %v5089
      %v5091 = vadd.f32 %v5087, %v5090
      %vm5092 = vweird.f32 %v4663
      %vm5093 = vweird.f32 %v5087
      %vm5094 = vmor %vm5092, %vm5093
      %v5095 = vsel %vm5094, %v5087, %v5091
      %v5096 = vand.u32 2147483647, %v4663
      %vm5097 = vcmp.eq.f32.partialorder %v5096, 8.507059e+37
      %v5098 = vand.u32 %v4663, 2147483648
      %v5099 = vor.u32 1.1754944e-38, %v5098
      %v5100 = vsel %vm5097, %v5099, %v5095
      %v5101 = vmul.f32 1.0, %v5100
      %v5102 = vrcp.pop %v4664
      %v5103 = vmul.f32 %v4664, %v5102
      %v5104 = vsub.f32 1.0, %v5103
      %v5105 = vmul.f32 %v5102, %v5104
      %v5106 = vadd.f32 %v5102, %v5105
      %vm5107 = vweird.f32 %v4664
      %vm5108 = vweird.f32 %v5102
      %vm5109 = vmor %vm5107, %vm5108
      %v5110 = vsel %vm5109, %v5102, %v5106
      %v5111 = vand.u32 2147483647, %v4664
      %vm5112 = vcmp.eq.f32.partialorder %v5111, 8.507059e+37
      %v5113 = vand.u32 %v4664, 2147483648
      %v5114 = vor.u32 1.1754944e-38, %v5113
      %v5115 = vsel %vm5112, %v5114, %v5110
      %v5116 = vmul.f32 1.0, %v5115
      %v5117 = vrcp.pop %v4665
      %v5118 = vmul.f32 %v4665, %v5117
      %v5119 = vsub.f32 1.0, %v5118
      %v5120 = vmul.f32 %v5117, %v5119
      %v5121 = vadd.f32 %v5117, %v5120
      %vm5122 = vweird.f32 %v4665
      %vm5123 = vweird.f32 %v5117
      %vm5124 = vmor %vm5122, %vm5123
      %v5125 = vsel %vm5124, %v5117, %v5121
      %v5126 = vand.u32 2147483647, %v4665
      %vm5127 = vcmp.eq.f32.partialorder %v5126, 8.507059e+37
      %v5128 = vand.u32 %v4665, 2147483648
      %v5129 = vor.u32 1.1754944e-38, %v5128
      %v5130 = vsel %vm5127, %v5129, %v5125
      %v5131 = vmul.f32 1.0, %v5130
      %v5132 = vrcp.pop %v4666
      %v5133 = vmul.f32 %v4666, %v5132
      %v5134 = vsub.f32 1.0, %v5133
      %v5135 = vmul.f32 %v5132, %v5134
      %v5136 = vadd.f32 %v5132, %v5135
      %vm5137 = vweird.f32 %v4666
      %vm5138 = vweird.f32 %v5132
      %vm5139 = vmor %vm5137, %vm5138
      %v5140 = vsel %vm5139, %v5132, %v5136
      %v5141 = vand.u32 2147483647, %v4666
      %vm5142 = vcmp.eq.f32.partialorder %v5141, 8.507059e+37
      %v5143 = vand.u32 %v4666, 2147483648
      %v5144 = vor.u32 1.1754944e-38, %v5143
      %v5145 = vsel %vm5142, %v5144, %v5140
      %v5146 = vmul.f32 1.0, %v5145
      %v5147 = vmul.f32 %v4507, %v4681
      %v5148 = vmul.f32 %v4508, %v4696
      %v5149 = vmul.f32 %v4509, %v4711
      %v5150 = vmul.f32 %v4510, %v4726
      %v5151 = vmul.f32 %v4511, %v4741
      %v5152 = vmul.f32 %v4512, %v4756
      %v5153 = vmul.f32 %v4513, %v4771
      %v5154 = vmul.f32 %v4514, %v4786
      %v5155 = vmul.f32 %v4515, %v4801
      %v5156 = vmul.f32 %v4516, %v4816
      %v5157 = vmul.f32 %v4517, %v4831
      %v5158 = vmul.f32 %v4518, %v4846
      %v5159 = vmul.f32 %v4519, %v4861
      %v5160 = vmul.f32 %v4520, %v4876
      %v5161 = vmul.f32 %v4521, %v4891
      %v5162 = vmul.f32 %v4522, %v4906
      %v5163 = vmul.f32 %v4523, %v4921
      %v5164 = vmul.f32 %v4524, %v4936
      %v5165 = vmul.f32 %v4525, %v4951
      %v5166 = vmul.f32 %v4526, %v4966
      %v5167 = vmul.f32 %v4527, %v4981
      %v5168 = vmul.f32 %v4528, %v4996
      %v5169 = vmul.f32 %v4529, %v5011
      %v5170 = vmul.f32 %v4530, %v5026
      %v5171 = vmul.f32 %v4531, %v5041
      %v5172 = vmul.f32 %v4532, %v5056
      %v5173 = vmul.f32 %v4533, %v5071
      %v5174 = vmul.f32 %v4534, %v5086
      %v5175 = vmul.f32 %v4535, %v5101
      %v5176 = vmul.f32 %v4536, %v5116
      %v5177 = vmul.f32 %v4537, %v5131
      %v5178 = vmul.f32 %v4538, %v5146
      %5179 = vst.msk [vmem:[%s562] sm:$0xff] %vm574, %v5147
      %5180 = vst.msk [vmem:[%s562 + $0x8] sm:$0xff] %vm574, %v5148
      %5181 = vst.msk [vmem:[%s562 + $0x10] sm:$0xff] %vm574, %v5149
      %5182 = vst.msk [vmem:[%s562 + $0x18] sm:$0xff] %vm574, %v5150
      %5183 = vst.msk [vmem:[%s562 + $0x20] sm:$0xff] %vm574, %v5151
      %5184 = vst.msk [vmem:[%s562 + $0x28] sm:$0xff] %vm574, %v5152
      %5185 = vst.msk [vmem:[%s562 + $0x30] sm:$0xff] %vm574, %v5153
      %5186 = vst.msk [vmem:[%s562 + $0x38] sm:$0xff] %vm574, %v5154
      %5187 = vst.msk [vmem:[%s562 + $0x40] sm:$0xff] %vm574, %v5155
      %5188 = vst.msk [vmem:[%s562 + $0x48] sm:$0xff] %vm574, %v5156
      %5189 = vst.msk [vmem:[%s562 + $0x50] sm:$0xff] %vm574, %v5157
      %5190 = vst.msk [vmem:[%s562 + $0x58] sm:$0xff] %vm574, %v5158
      %5191 = vst.msk [vmem:[%s562 + $0x60] sm:$0xff] %vm574, %v5159
      %5192 = vst.msk [vmem:[%s562 + $0x68] sm:$0xff] %vm574, %v5160
      %5193 = vst.msk [vmem:[%s562 + $0x70] sm:$0xff] %vm574, %v5161
      %5194 = vst.msk [vmem:[%s562 + $0x78] sm:$0xff] %vm574, %v5162
      %5195 = vst.msk [vmem:[%s562 + $0x80] sm:$0xff] %vm574, %v5163
      %5196 = vst.msk [vmem:[%s562 + $0x88] sm:$0xff] %vm574, %v5164
      %5197 = vst.msk [vmem:[%s562 + $0x90] sm:$0xff] %vm574, %v5165
      %5198 = vst.msk [vmem:[%s562 + $0x98] sm:$0xff] %vm574, %v5166
      %5199 = vst.msk [vmem:[%s562 + $0xa0] sm:$0xff] %vm574, %v5167
      %5200 = vst.msk [vmem:[%s562 + $0xa8] sm:$0xff] %vm574, %v5168
      %5201 = vst.msk [vmem:[%s562 + $0xb0] sm:$0xff] %vm574, %v5169
      %5202 = vst.msk [vmem:[%s562 + $0xb8] sm:$0xff] %vm574, %v5170
      %5203 = vst.msk [vmem:[%s562 + $0xc0] sm:$0xff] %vm574, %v5171
      %5204 = vst.msk [vmem:[%s562 + $0xc8] sm:$0xff] %vm574, %v5172
      %5205 = vst.msk [vmem:[%s562 + $0xd0] sm:$0xff] %vm574, %v5173
      %5206 = vst.msk [vmem:[%s562 + $0xd8] sm:$0xff] %vm574, %v5174
      %5207 = vst.msk [vmem:[%s562 + $0xe0] sm:$0xff] %vm574, %v5175
      %5208 = vst.msk [vmem:[%s562 + $0xe8] sm:$0xff] %vm574, %v5176
      %5209 = vst.msk [vmem:[%s562 + $0xf0] sm:$0xff] %vm574, %v5177
      %5210 = vst.msk [vmem:[%s562 + $0xf8] sm:$0xff] %vm574, %v5178
      %s5211 = smul.u32 16, %s27
      %p5212 = scmp.lt.s32.totalorder %s26, 1
      %s5213 = scalar_select %p5212, %s26, 1
      %p5214 = scmp.lt.s32.totalorder %s5211, 15
      %s5215 = scalar_select %p5214, %s5211, 15
      %s5216 = smul.addr %s5215, 2
      %s5217 = smul.addr %s5213, 32
      %s5218 = sadd.s32 %s5216, %s5217
      %s5219 = smul.addr %s5218, 8
      %s5220 = scalar_lea.vmem %s9, %s5219
      %s5221 = smul.u32 16, %s27
      %p5222 = scmp.lt.s32.totalorder %s26, 1
      %s5223 = scalar_select %p5222, %s26, 1
      %p5224 = scmp.lt.s32.totalorder %s5221, 15
      %s5225 = scalar_select %p5224, %s5221, 15
      %s5226 = smul.addr %s5225, 2
      %s5227 = smul.addr %s5223, 32
      %s5228 = sadd.s32 %s5226, %s5227
      %s5229 = smul.addr %s5228, 8
      %s5230 = scalar_lea.vmem %s10, %s5229
      // Predicated region
      $region73: #{tpu_custom_call.1} parent=55 // pred_check
        %p5231 = pneg %p280
      $region74: #{tpu_custom_call.1} parent=55 // pred_check_branch
        %5233 = sbr.rel (%p5231) target = $region76
      $region75: #{tpu_custom_call.1} parent=55 // pred_region
        %s5234 = smul.u32 16, %s27
      $region76: #{tpu_custom_call.1} parent=55 // pred_fallthru
        _
      // Predicated region
      $region77: #{tpu_custom_call.1} parent=55 // pred_check
        %p5235 = pneg %p308
      $region78: #{tpu_custom_call.1} parent=55 // pred_check_branch
        %5237 = sbr.rel (%p5235) target = $region80
      $region79: #{tpu_custom_call.1} parent=55 // pred_region
        %s5238 = smul.u32 16, %s27
      $region80: #{tpu_custom_call.1} parent=55 // pred_fallthru
        _
    $region56: #{tpu_custom_call.1} parent=5 // pred_fallthru
      _
    %p5239 = scmp.le.s32.totalorder 2, %s17
    // Predicated region
    $region81: #{tpu_custom_call.1} parent=5 // pred_check
      %p5240 = pneg %p5239
    $region82: #{tpu_custom_call.1} parent=5 // pred_check_branch
      %5242 = sbr.rel (%p5240) target = $region84
    $region83: #{tpu_custom_call.1} parent=5 // pred_region
      %s5243 = ssub.s32 %s17, 2
      // Predicated region
      $region85: #{tpu_custom_call.1} parent=83 // pred_check
        %p5244 = pneg %p286
      $region86: #{tpu_custom_call.1} parent=83 // pred_check_branch
        %5246 = sbr.rel (%p5244) target = $region88
      $region87: #{tpu_custom_call.1} parent=83 // pred_region
        %s5247 = smul.u32 16, %s29
        %p5248 = scmp.lt.s32.totalorder %s28, 1
        %s5249 = scalar_select %p5248, %s28, 1
        %p5250 = scmp.lt.s32.totalorder %s5247, 15
        %s5251 = scalar_select %p5250, %s5247, 15
        %s5252 = smul.addr %s5251, 2
        %s5253 = smul.addr %s5249, 32
        %s5254 = sadd.s32 %s5252, %s5253
        %s5255 = smul.addr %s5254, 8
        %s5256 = scalar_lea.vmem %s9, %s5255
      $region88: #{tpu_custom_call.1} parent=83 // pred_fallthru
        _
      // Predicated region
      $region89: #{tpu_custom_call.1} parent=83 // pred_check
        %p5257 = pneg %p314
      $region90: #{tpu_custom_call.1} parent=83 // pred_check_branch
        %5259 = sbr.rel (%p5257) target = $region92
      $region91: #{tpu_custom_call.1} parent=83 // pred_region
        %s5260 = smul.u32 16, %s29
        %p5261 = scmp.lt.s32.totalorder %s28, 1
        %s5262 = scalar_select %p5261, %s28, 1
        %p5263 = scmp.lt.s32.totalorder %s5260, 15
        %s5264 = scalar_select %p5263, %s5260, 15
        %s5265 = smul.addr %s5264, 2
        %s5266 = smul.addr %s5262, 32
        %s5267 = sadd.s32 %s5265, %s5266
        %s5268 = smul.addr %s5267, 8
        %s5269 = scalar_lea.vmem %s10, %s5268
      $region92: #{tpu_custom_call.1} parent=83 // pred_fallthru
        _
    $region84: #{tpu_custom_call.1} parent=5 // pred_fallthru
      _
  $region6: #{tpu_custom_call.1} parent=0 // loop_footer
    %s21 = sadd.s32 1, %s17
  $region7: #{tpu_custom_call.1} parent=0 // loop_footer_branch
    %16 = sbr.rel target = $region3
  $region8: #{tpu_custom_call.1} parent=0 // loop_exit
    _

</llo_original>
